<compile_context>
chip_gen: v7x
topology: tpu7x:2x2x1
jax: 0.10.0
libtpu: 0.0.40
codegen_flags: <defaults>
</compile_context>

<pallas_src>
import jax
import jax.numpy as jnp
import numpy as np
from jax import lax
from jax.experimental import pallas as pl
from jax.experimental.pallas import tpu as pltpu


def point_transformer_last(x, w1, w2, bn1, bn2, qk_w, v_w, v_b, t_w, t_b,
                           *, out_dtype=jnp.bfloat16, eps=1e-5, tq=None):
    """Forward pass of Point_Transformer_Last.

    Args:
      x:     (B, C, N) float32, PyTorch NCW layout.
      w1,w2: (C, C) conv1/conv2 weights (kernel_size=1, bias=False), torch layout.
      bn1,bn2: tuples (gamma, beta, running_mean, running_var), each (C,).
      qk_w:  (4, C//4, C) shared q/k conv weight per SA layer (bias=False).
      v_w:   (4, C, C), v_b: (4, C)   v_conv weight / bias per SA layer.
      t_w:   (4, C, C), t_b: (4, C)   trans_conv weight / bias per SA layer.
    Returns:
      (B, 4*C, N) out_dtype  -- concat(sa1, sa2, sa3, sa4) along channels.
    """
    B, C, N = x.shape
    C4 = qk_w.shape[1]
    f32, bf16 = jnp.float32, jnp.bfloat16

    # ---- host-side weight prep ------------------------------------------------
    def fold_bn(w, bn):
        gamma, beta, mean, var = bn
        s = gamma / jnp.sqrt(var + eps)
        return (w * s[:, None]).astype(bf16), (beta - mean * s).reshape(C, 1).astype(f32)

    w1f, b1 = fold_bn(w1, bn1)                       # conv1 + BN1 folded
    w2f, b2 = fold_bn(w2, bn2)                       # conv2 + BN2 folded
    qk_b = qk_w.astype(bf16)                         # un-folded q/k projection
    vw_b, tw_b = v_w.astype(bf16), t_w.astype(bf16)
    vb = v_b.reshape(4, C, 1).astype(f32)
    tb = t_b.reshape(4, C, 1).astype(f32)
    x = x.astype(f32)

    # ---- query tile size (attention intermediates are (tq, N)) ----------------
    if tq is None:
        if N <= 512:
            tq = N
        else:
            tq = next((t for t in (512, 256, 128, 64) if N % t == 0), N)
    assert N % tq == 0, (N, tq)
    n_qt = N // tq

    # ---- kernel ---------------------------------------------------------------
    def kernel(x_ref, w1_ref, b1_ref, w2_ref, b2_ref,
               qk_ref, vw_ref, vb_ref, tw_ref, tb_ref, out_ref):
        Ck = w1_ref.shape[0]
        Np = x_ref.shape[2]

        x_bf = x_ref[0].astype(bf16)                                   # (C, N)
        # conv1 (BN folded) + ReLU ; conv2 (BN folded) + ReLU
        h = jnp.dot(w1_ref[...], x_bf, preferred_element_type=f32) + b1_ref[...]
        h = jnp.maximum(h, 0.0)
        h = jnp.dot(w2_ref[...], h.astype(bf16), preferred_element_type=f32) + b2_ref[...]
        h = jnp.maximum(h, 0.0)

        ones_row = jnp.ones((1, tq), dtype=bf16)                       # for column sums

        for l in range(4):                                             # 4 SA layers
            h_bf = h.astype(bf16)
            # shared q = k projection, (C/4, N)  (un-folded: contraction depth C/4
            # on the N^2 energy matmul below)
            q_bf = jnp.dot(qk_ref[l], h_bf, preferred_element_type=f32).astype(bf16)
            v = jnp.dot(vw_ref[l], h_bf, preferred_element_type=f32) + vb_ref[l]

            x_r = jnp.zeros((Ck, Np), dtype=f32)
            colsum = jnp.zeros((1, Np), dtype=f32)
            for t in range(n_qt):                                      # query tiles
                sl = slice(t * tq, (t + 1) * tq)
                # energy tile = q_t^T q : contract dim 0 of both (no transpose)
                e_t = lax.dot_general(q_bf[:, sl], q_bf,
                                      dimension_numbers=(((0,), (0,)), ((), ())),
                                      preferred_element_type=f32)      # (tq, N)
                m_t = jnp.max(e_t, axis=-1, keepdims=True)
                p_t = jnp.exp(e_t - m_t)
                r_t = pl.reciprocal(jnp.sum(p_t, axis=-1, keepdims=True), approx=True)
                pn_t = (p_t * r_t).astype(bf16)                        # row softmax, bf16 for MXU
                # accumulate bmm(x_v, attention) and the dim=1 column sums
                x_r = x_r + jnp.dot(v[:, sl].astype(bf16), pn_t,
                                    preferred_element_type=f32)        # (C, N)
                colsum = colsum + jnp.dot(ones_row, pn_t,
                                          preferred_element_type=f32)  # (1, N)
            # second normalization applied as a per-column scale of x_r
            x_r = x_r * pl.reciprocal(1e-9 + colsum, approx=True)
            # trans_conv(x - x_r) + ReLU, then residual (after_norm unused in forward)
            x_r = jnp.dot(tw_ref[l], (h - x_r).astype(bf16),
                          preferred_element_type=f32) + tb_ref[l]
            h = h + jnp.maximum(x_r, 0.0)
            # stream this layer straight into its concat slot (lane-dense store)
            out_ref[0, l * Ck:(l + 1) * Ck, :] = h.astype(out_ref.dtype)

    # ---- advisory cost estimate ------------------------------------------------
    flops_proj = 2 * (2 * C * C * N)
    flops_layer = (2 * C4 * C * N + 2 * C * C * N + 2 * C * C * N   # q, v, trans
                   + 2 * C4 * N * N + 2 * C * N * N + 2 * N * N)    # energy, x_r, colsum
    flops = int(B * (flops_proj + 4 * flops_layer))
    transcendentals = int(B * 4 * (N * N + 2 * N))
    bytes_accessed = int(
        x.size * 4 + w1f.size * 2 + w2f.size * 2 + b1.size * 4 + b2.size * 4
        + qk_b.size * 2 + vw_b.size * 2 + tw_b.size * 2 + vb.size * 4 + tb.size * 4
        + B * 4 * C * N * jnp.dtype(out_dtype).itemsize)

    return pl.pallas_call(
        kernel,
        out_shape=jax.ShapeDtypeStruct((B, 4 * C, N), out_dtype),
        grid=(B,),
        in_specs=[
            pl.BlockSpec((1, C, N), lambda b: (b, 0, 0)),      # x (channels-first)
            pl.BlockSpec((C, C), lambda b: (0, 0)),            # conv1 W (BN folded)
            pl.BlockSpec((C, 1), lambda b: (0, 0)),            # conv1 bias (BN shift)
            pl.BlockSpec((C, C), lambda b: (0, 0)),            # conv2 W (BN folded)
            pl.BlockSpec((C, 1), lambda b: (0, 0)),            # conv2 bias (BN shift)
            pl.BlockSpec((4, C4, C), lambda b: (0, 0, 0)),     # shared q/k W
            pl.BlockSpec((4, C, C), lambda b: (0, 0, 0)),      # v_conv W
            pl.BlockSpec((4, C, 1), lambda b: (0, 0, 0)),      # v_conv bias
            pl.BlockSpec((4, C, C), lambda b: (0, 0, 0)),      # trans_conv W
            pl.BlockSpec((4, C, 1), lambda b: (0, 0, 0)),      # trans_conv bias
        ],
        out_specs=pl.BlockSpec((1, 4 * C, N), lambda b: (b, 0, 0)),
        compiler_params=pltpu.CompilerParams(
            dimension_semantics=("parallel",),
            vmem_limit_bytes=64 * 1024 * 1024),
        cost_estimate=pl.CostEstimate(flops=flops,
                                      transcendentals=transcendentals,
                                      bytes_accessed=bytes_accessed),
    )(x, w1f, b1, w2f, b2, qk_b, vw_b, vb, tw_b, tb)


def reference_forward(x, w1, w2, bn1, bn2, qk_w, v_w, v_b, t_w, t_b, eps=1e-5):
    """Pure-f32 JAX reference with torch-equivalent structure (eval-mode BN)."""
    hi = "highest"

    def conv(w, h, b=None):
        y = jnp.einsum('oc,bcn->bon', w, h, precision=hi)
        return y if b is None else y + b[None, :, None]

    def bn(h, p):
        g, be, m, v = p
        return (h - m[None, :, None]) / jnp.sqrt(v[None, :, None] + eps) \
            * g[None, :, None] + be[None, :, None]

    h = jax.nn.relu(bn(conv(w1, x), bn1))
    h = jax.nn.relu(bn(conv(w2, h), bn2))

    outs = []
    for l in range(4):
        q = conv(qk_w[l], h)                                           # (B, C//4, N)
        energy = jnp.einsum('bci,bcj->bij', q, q, precision=hi)        # (B, N, N)
        att = jax.nn.softmax(energy, axis=-1)
        att = att / (1e-9 + jnp.sum(att, axis=1, keepdims=True))
        v = conv(v_w[l], h, v_b[l])
        x_r = jnp.einsum('bcn,bnm->bcm', v, att, precision=hi)
        x_r = jax.nn.relu(conv(t_w[l], h - x_r, t_b[l]))
        h = h + x_r
        outs.append(h)
    return jnp.concatenate(outs, axis=1)                               # (B, 4C, N)


if __name__ == "__main__":
    B, C, N = 2, 32, 128        # small test config; C divisible by 4 and 8

    key = jax.random.PRNGKey(0)
    ks = iter(jax.random.split(key, 24))

    def rnd(shape, scale=0.1):
        return (scale * jax.random.normal(next(ks), shape)).astype(jnp.float32)

    x = rnd((B, C, N), scale=1.0)

    w1 = rnd((C, C))
    w2 = rnd((C, C))
    bn1 = (1.0 + rnd((C,)), rnd((C,)), rnd((C,)), 1.0 + jnp.abs(rnd((C,))))
    bn2 = (1.0 + rnd((C,)), rnd((C,)), rnd((C,)), 1.0 + jnp.abs(rnd((C,))))

    qk_w = rnd((4, C // 4, C), scale=0.5)   # larger scale -> non-trivial attention
    v_w = rnd((4, C, C))
    v_b = rnd((4, C))
    t_w = rnd((4, C, C))
    t_b = rnd((4, C))

    out = point_transformer_last(x, w1, w2, bn1, bn2, qk_w, v_w, v_b, t_w, t_b)
    out = jax.block_until_ready(out)

    ref = reference_forward(x, w1, w2, bn1, bn2, qk_w, v_w, v_b, t_w, t_b)
    ref = jax.block_until_ready(ref)

    assert out.shape == (B, 4 * C, N), out.shape
    out_f = np.asarray(jax.device_get(out.astype(jnp.float32)))
    ref_f = np.asarray(jax.device_get(ref.astype(jnp.float32)))
    # Tolerance covers bf16 MXU operands / bf16 output, approx EUP reciprocals,
    # and MXU vs XLA accumulation order.
    np.testing.assert_allclose(out_f, ref_f, rtol=2e-2, atol=2e-2)
    print("KERNEL_OK")
</pallas_src>

<mosaic_0001>
module attributes {stable_mosaic.version = 11 : i64} {
  func.func @kernel(%arg0: i32, %arg1: memref<1x32x128xf32, #tpu.memory_space<vmem>>, %arg2: memref<32x32xbf16, #tpu.memory_space<vmem>>, %arg3: memref<32x1xf32, #tpu.memory_space<vmem>>, %arg4: memref<32x32xbf16, #tpu.memory_space<vmem>>, %arg5: memref<32x1xf32, #tpu.memory_space<vmem>>, %arg6: memref<4x8x32xbf16, #tpu.memory_space<vmem>>, %arg7: memref<4x32x32xbf16, #tpu.memory_space<vmem>>, %arg8: memref<4x32x1xf32, #tpu.memory_space<vmem>>, %arg9: memref<4x32x32xbf16, #tpu.memory_space<vmem>>, %arg10: memref<4x32x1xf32, #tpu.memory_space<vmem>>, %arg11: memref<1x128x128xbf16, #tpu.memory_space<vmem>>) attributes {dimension_semantics = [#tpu.dimension_semantics<parallel>], iteration_bounds = array<i64: 2>, scalar_prefetch = 0 : i64, scratch_operands = 0 : i64, tpu.core_type = #tpu.core_type<tc>, window_params = [{transform_indices = @transform_0, window_bounds = array<i64: 1, 32, 128>}, {pipeline_mode = #tpu.pipeline_mode<synchronous>, transform_indices = @transform_1, window_bounds = array<i64: 32, 32>}, {pipeline_mode = #tpu.pipeline_mode<synchronous>, transform_indices = @transform_2, window_bounds = array<i64: 32, 1>}, {pipeline_mode = #tpu.pipeline_mode<synchronous>, transform_indices = @transform_3, window_bounds = array<i64: 32, 32>}, {pipeline_mode = #tpu.pipeline_mode<synchronous>, transform_indices = @transform_4, window_bounds = array<i64: 32, 1>}, {pipeline_mode = #tpu.pipeline_mode<synchronous>, transform_indices = @transform_5, window_bounds = array<i64: 4, 8, 32>}, {pipeline_mode = #tpu.pipeline_mode<synchronous>, transform_indices = @transform_6, window_bounds = array<i64: 4, 32, 32>}, {pipeline_mode = #tpu.pipeline_mode<synchronous>, transform_indices = @transform_7, window_bounds = array<i64: 4, 32, 1>}, {pipeline_mode = #tpu.pipeline_mode<synchronous>, transform_indices = @transform_8, window_bounds = array<i64: 4, 32, 32>}, {pipeline_mode = #tpu.pipeline_mode<synchronous>, transform_indices = @transform_9, window_bounds = array<i64: 4, 32, 1>}, {transform_indices = @transform_10, window_bounds = array<i64: 1, 128, 128>}]} {
    %c0 = arith.constant 0 : index
    %c0_0 = arith.constant 0 : index
    %c0_1 = arith.constant 0 : index
    %0 = vector.load %arg1[%c0, %c0_0, %c0_1] : memref<1x32x128xf32, #tpu.memory_space<vmem>>, vector<1x32x128xf32>
    %1 = vector.shape_cast %0 : vector<1x32x128xf32> to vector<32x128xf32>
    %2 = arith.truncf %1 : vector<32x128xf32> to vector<32x128xbf16>
    %c0_2 = arith.constant 0 : index
    %c0_3 = arith.constant 0 : index
    %3 = vector.load %arg2[%c0_2, %c0_3] : memref<32x32xbf16, #tpu.memory_space<vmem>>, vector<32x32xbf16>
    %cst = arith.constant dense<0.000000e+00> : vector<32x128xf32>
    %4 = tpu.matmul %3, %2, %cst {dimension_numbers = #tpu.dot_dimension_numbers<[1], [0], [0], [1], [0, 0, 1, 1], [], []>} : vector<32x32xbf16>, vector<32x128xbf16>, vector<32x128xf32> -> vector<32x128xf32>
    %c0_4 = arith.constant 0 : index
    %c0_5 = arith.constant 0 : index
    %5 = vector.load %arg3[%c0_4, %c0_5] : memref<32x1xf32, #tpu.memory_space<vmem>>, vector<32x1xf32>
    %6 = vector.broadcast %5 : vector<32x1xf32> to vector<32x128xf32>
    %7 = arith.addf %4, %6 : vector<32x128xf32>
    %cst_6 = arith.constant 0.000000e+00 : f32
    %8 = vector.broadcast %cst_6 : f32 to vector<32x128xf32>
    %9 = arith.maximumf %7, %8 : vector<32x128xf32>
    %c0_7 = arith.constant 0 : index
    %c0_8 = arith.constant 0 : index
    %10 = vector.load %arg4[%c0_7, %c0_8] : memref<32x32xbf16, #tpu.memory_space<vmem>>, vector<32x32xbf16>
    %11 = arith.truncf %9 : vector<32x128xf32> to vector<32x128xbf16>
    %cst_9 = arith.constant dense<0.000000e+00> : vector<32x128xf32>
    %12 = tpu.matmul %10, %11, %cst_9 {dimension_numbers = #tpu.dot_dimension_numbers<[1], [0], [0], [1], [0, 0, 1, 1], [], []>} : vector<32x32xbf16>, vector<32x128xbf16>, vector<32x128xf32> -> vector<32x128xf32>
    %c0_10 = arith.constant 0 : index
    %c0_11 = arith.constant 0 : index
    %13 = vector.load %arg5[%c0_10, %c0_11] : memref<32x1xf32, #tpu.memory_space<vmem>>, vector<32x1xf32>
    %14 = vector.broadcast %13 : vector<32x1xf32> to vector<32x128xf32>
    %15 = arith.addf %12, %14 : vector<32x128xf32>
    %cst_12 = arith.constant 0.000000e+00 : f32
    %16 = vector.broadcast %cst_12 : f32 to vector<32x128xf32>
    %17 = arith.maximumf %15, %16 : vector<32x128xf32>
    %cst_13 = arith.constant 1.000000e+00 : bf16
    %18 = vector.broadcast %cst_13 : bf16 to vector<1x128xbf16>
    %19 = arith.truncf %17 : vector<32x128xf32> to vector<32x128xbf16>
    %c0_14 = arith.constant 0 : index
    %c0_15 = arith.constant 0 : index
    %c0_16 = arith.constant 0 : index
    %20 = vector.load %arg6[%c0_14, %c0_15, %c0_16] : memref<4x8x32xbf16, #tpu.memory_space<vmem>>, vector<1x8x32xbf16>
    %21 = vector.shape_cast %20 : vector<1x8x32xbf16> to vector<8x32xbf16>
    %cst_17 = arith.constant dense<0.000000e+00> : vector<8x128xf32>
    %22 = tpu.matmul %21, %19, %cst_17 {dimension_numbers = #tpu.dot_dimension_numbers<[1], [0], [0], [1], [0, 0, 1, 1], [], []>} : vector<8x32xbf16>, vector<32x128xbf16>, vector<8x128xf32> -> vector<8x128xf32>
    %23 = arith.truncf %22 : vector<8x128xf32> to vector<8x128xbf16>
    %c0_18 = arith.constant 0 : index
    %c0_19 = arith.constant 0 : index
    %c0_20 = arith.constant 0 : index
    %24 = vector.load %arg7[%c0_18, %c0_19, %c0_20] : memref<4x32x32xbf16, #tpu.memory_space<vmem>>, vector<1x32x32xbf16>
    %25 = vector.shape_cast %24 : vector<1x32x32xbf16> to vector<32x32xbf16>
    %cst_21 = arith.constant dense<0.000000e+00> : vector<32x128xf32>
    %26 = tpu.matmul %25, %19, %cst_21 {dimension_numbers = #tpu.dot_dimension_numbers<[1], [0], [0], [1], [0, 0, 1, 1], [], []>} : vector<32x32xbf16>, vector<32x128xbf16>, vector<32x128xf32> -> vector<32x128xf32>
    %c0_22 = arith.constant 0 : index
    %c0_23 = arith.constant 0 : index
    %c0_24 = arith.constant 0 : index
    %27 = vector.load %arg8[%c0_22, %c0_23, %c0_24] : memref<4x32x1xf32, #tpu.memory_space<vmem>>, vector<1x32x1xf32>
    %28 = vector.shape_cast %27 : vector<1x32x1xf32> to vector<32x1xf32>
    %29 = vector.broadcast %28 : vector<32x1xf32> to vector<32x128xf32>
    %30 = arith.addf %26, %29 : vector<32x128xf32>
    %cst_25 = arith.constant 0.000000e+00 : f32
    %31 = vector.broadcast %cst_25 : f32 to vector<32x128xf32>
    %cst_26 = arith.constant 0.000000e+00 : f32
    %32 = vector.broadcast %cst_26 : f32 to vector<1x128xf32>
    %cst_27 = arith.constant dense<0.000000e+00> : vector<128x128xf32>
    %33 = tpu.matmul %23, %23, %cst_27 {dimension_numbers = #tpu.dot_dimension_numbers<[0], [0], [1], [1], [0, 1, 1, 1], [], []>} : vector<8x128xbf16>, vector<8x128xbf16>, vector<128x128xf32> -> vector<128x128xf32>
    %cst_28 = arith.constant dense<0xFF800000> : vector<128xf32>
    %34 = vector.multi_reduction <maximumf>, %33, %cst_28 [1] : vector<128x128xf32> to vector<128xf32>
    %35 = vector.shape_cast %34 : vector<128xf32> to vector<128x1xf32>
    %36 = vector.broadcast %35 : vector<128x1xf32> to vector<128x128xf32>
    %37 = arith.subf %33, %36 : vector<128x128xf32>
    %38 = math.exp %37 : vector<128x128xf32>
    %cst_29 = arith.constant dense<0.000000e+00> : vector<128xf32>
    %39 = vector.multi_reduction <add>, %38, %cst_29 [1] : vector<128x128xf32> to vector<128xf32>
    %40 = vector.shape_cast %39 : vector<128xf32> to vector<128x1xf32>
    %41 = tpu.reciprocal %40 {approx = true} : vector<128x1xf32> -> vector<128x1xf32>
    %42 = vector.broadcast %41 : vector<128x1xf32> to vector<128x128xf32>
    %43 = arith.mulf %38, %42 : vector<128x128xf32>
    %44 = arith.truncf %43 : vector<128x128xf32> to vector<128x128xbf16>
    %45 = arith.truncf %30 : vector<32x128xf32> to vector<32x128xbf16>
    %cst_30 = arith.constant dense<0.000000e+00> : vector<32x128xf32>
    %46 = tpu.matmul %45, %44, %cst_30 {dimension_numbers = #tpu.dot_dimension_numbers<[1], [0], [0], [1], [0, 0, 1, 1], [], []>} : vector<32x128xbf16>, vector<128x128xbf16>, vector<32x128xf32> -> vector<32x128xf32>
    %47 = arith.addf %31, %46 : vector<32x128xf32>
    %cst_31 = arith.constant dense<0.000000e+00> : vector<1x128xf32>
    %48 = tpu.matmul %18, %44, %cst_31 {dimension_numbers = #tpu.dot_dimension_numbers<[1], [0], [0], [1], [0, 0, 1, 1], [], []>} : vector<1x128xbf16>, vector<128x128xbf16>, vector<1x128xf32> -> vector<1x128xf32>
    %49 = arith.addf %32, %48 : vector<1x128xf32>
    %cst_32 = arith.constant 9.99999971E-10 : f32
    %50 = vector.broadcast %cst_32 : f32 to vector<1x128xf32>
    %51 = arith.addf %50, %49 : vector<1x128xf32>
    %52 = tpu.reciprocal %51 {approx = true} : vector<1x128xf32> -> vector<1x128xf32>
    %53 = vector.broadcast %52 : vector<1x128xf32> to vector<32x128xf32>
    %54 = arith.mulf %47, %53 : vector<32x128xf32>
    %c0_33 = arith.constant 0 : index
    %c0_34 = arith.constant 0 : index
    %c0_35 = arith.constant 0 : index
    %55 = vector.load %arg9[%c0_33, %c0_34, %c0_35] : memref<4x32x32xbf16, #tpu.memory_space<vmem>>, vector<1x32x32xbf16>
    %56 = vector.shape_cast %55 : vector<1x32x32xbf16> to vector<32x32xbf16>
    %57 = arith.subf %17, %54 : vector<32x128xf32>
    %58 = arith.truncf %57 : vector<32x128xf32> to vector<32x128xbf16>
    %cst_36 = arith.constant dense<0.000000e+00> : vector<32x128xf32>
    %59 = tpu.matmul %56, %58, %cst_36 {dimension_numbers = #tpu.dot_dimension_numbers<[1], [0], [0], [1], [0, 0, 1, 1], [], []>} : vector<32x32xbf16>, vector<32x128xbf16>, vector<32x128xf32> -> vector<32x128xf32>
    %c0_37 = arith.constant 0 : index
    %c0_38 = arith.constant 0 : index
    %c0_39 = arith.constant 0 : index
    %60 = vector.load %arg10[%c0_37, %c0_38, %c0_39] : memref<4x32x1xf32, #tpu.memory_space<vmem>>, vector<1x32x1xf32>
    %61 = vector.shape_cast %60 : vector<1x32x1xf32> to vector<32x1xf32>
    %62 = vector.broadcast %61 : vector<32x1xf32> to vector<32x128xf32>
    %63 = arith.addf %59, %62 : vector<32x128xf32>
    %cst_40 = arith.constant 0.000000e+00 : f32
    %64 = vector.broadcast %cst_40 : f32 to vector<32x128xf32>
    %65 = arith.maximumf %63, %64 : vector<32x128xf32>
    %66 = arith.addf %17, %65 : vector<32x128xf32>
    %67 = arith.truncf %66 : vector<32x128xf32> to vector<32x128xbf16>
    %c0_41 = arith.constant 0 : index
    %c0_42 = arith.constant 0 : index
    %c0_43 = arith.constant 0 : index
    %68 = vector.load %arg11[%c0_41, %c0_42, %c0_43] : memref<1x128x128xbf16, #tpu.memory_space<vmem>>, vector<1x32x128xbf16>
    %69 = vector.shape_cast %68 : vector<1x32x128xbf16> to vector<32x128xbf16>
    %70 = vector.shape_cast %67 : vector<32x128xbf16> to vector<1x32x128xbf16>
    tpu.vector_store %arg11[%c0_41, %c0_42, %c0_43], %70 {strides = array<i32>} : memref<1x128x128xbf16, #tpu.memory_space<vmem>>, vector<1x32x128xbf16>,
    %71 = arith.truncf %66 : vector<32x128xf32> to vector<32x128xbf16>
    %c1 = arith.constant 1 : index
    %c0_44 = arith.constant 0 : index
    %c0_45 = arith.constant 0 : index
    %72 = vector.load %arg6[%c1, %c0_44, %c0_45] : memref<4x8x32xbf16, #tpu.memory_space<vmem>>, vector<1x8x32xbf16>
    %73 = vector.shape_cast %72 : vector<1x8x32xbf16> to vector<8x32xbf16>
    %cst_46 = arith.constant dense<0.000000e+00> : vector<8x128xf32>
    %74 = tpu.matmul %73, %71, %cst_46 {dimension_numbers = #tpu.dot_dimension_numbers<[1], [0], [0], [1], [0, 0, 1, 1], [], []>} : vector<8x32xbf16>, vector<32x128xbf16>, vector<8x128xf32> -> vector<8x128xf32>
    %75 = arith.truncf %74 : vector<8x128xf32> to vector<8x128xbf16>
    %c1_47 = arith.constant 1 : index
    %c0_48 = arith.constant 0 : index
    %c0_49 = arith.constant 0 : index
    %76 = vector.load %arg7[%c1_47, %c0_48, %c0_49] : memref<4x32x32xbf16, #tpu.memory_space<vmem>>, vector<1x32x32xbf16>
    %77 = vector.shape_cast %76 : vector<1x32x32xbf16> to vector<32x32xbf16>
    %cst_50 = arith.constant dense<0.000000e+00> : vector<32x128xf32>
    %78 = tpu.matmul %77, %71, %cst_50 {dimension_numbers = #tpu.dot_dimension_numbers<[1], [0], [0], [1], [0, 0, 1, 1], [], []>} : vector<32x32xbf16>, vector<32x128xbf16>, vector<32x128xf32> -> vector<32x128xf32>
    %c1_51 = arith.constant 1 : index
    %c0_52 = arith.constant 0 : index
    %c0_53 = arith.constant 0 : index
    %79 = vector.load %arg8[%c1_51, %c0_52, %c0_53] : memref<4x32x1xf32, #tpu.memory_space<vmem>>, vector<1x32x1xf32>
    %80 = vector.shape_cast %79 : vector<1x32x1xf32> to vector<32x1xf32>
    %81 = vector.broadcast %80 : vector<32x1xf32> to vector<32x128xf32>
    %82 = arith.addf %78, %81 : vector<32x128xf32>
    %cst_54 = arith.constant 0.000000e+00 : f32
    %83 = vector.broadcast %cst_54 : f32 to vector<32x128xf32>
    %cst_55 = arith.constant 0.000000e+00 : f32
    %84 = vector.broadcast %cst_55 : f32 to vector<1x128xf32>
    %cst_56 = arith.constant dense<0.000000e+00> : vector<128x128xf32>
    %85 = tpu.matmul %75, %75, %cst_56 {dimension_numbers = #tpu.dot_dimension_numbers<[0], [0], [1], [1], [0, 1, 1, 1], [], []>} : vector<8x128xbf16>, vector<8x128xbf16>, vector<128x128xf32> -> vector<128x128xf32>
    %cst_57 = arith.constant dense<0xFF800000> : vector<128xf32>
    %86 = vector.multi_reduction <maximumf>, %85, %cst_57 [1] : vector<128x128xf32> to vector<128xf32>
    %87 = vector.shape_cast %86 : vector<128xf32> to vector<128x1xf32>
    %88 = vector.broadcast %87 : vector<128x1xf32> to vector<128x128xf32>
    %89 = arith.subf %85, %88 : vector<128x128xf32>
    %90 = math.exp %89 : vector<128x128xf32>
    %cst_58 = arith.constant dense<0.000000e+00> : vector<128xf32>
    %91 = vector.multi_reduction <add>, %90, %cst_58 [1] : vector<128x128xf32> to vector<128xf32>
    %92 = vector.shape_cast %91 : vector<128xf32> to vector<128x1xf32>
    %93 = tpu.reciprocal %92 {approx = true} : vector<128x1xf32> -> vector<128x1xf32>
    %94 = vector.broadcast %93 : vector<128x1xf32> to vector<128x128xf32>
    %95 = arith.mulf %90, %94 : vector<128x128xf32>
    %96 = arith.truncf %95 : vector<128x128xf32> to vector<128x128xbf16>
    %97 = arith.truncf %82 : vector<32x128xf32> to vector<32x128xbf16>
    %cst_59 = arith.constant dense<0.000000e+00> : vector<32x128xf32>
    %98 = tpu.matmul %97, %96, %cst_59 {dimension_numbers = #tpu.dot_dimension_numbers<[1], [0], [0], [1], [0, 0, 1, 1], [], []>} : vector<32x128xbf16>, vector<128x128xbf16>, vector<32x128xf32> -> vector<32x128xf32>
    %99 = arith.addf %83, %98 : vector<32x128xf32>
    %cst_60 = arith.constant dense<0.000000e+00> : vector<1x128xf32>
    %100 = tpu.matmul %18, %96, %cst_60 {dimension_numbers = #tpu.dot_dimension_numbers<[1], [0], [0], [1], [0, 0, 1, 1], [], []>} : vector<1x128xbf16>, vector<128x128xbf16>, vector<1x128xf32> -> vector<1x128xf32>
    %101 = arith.addf %84, %100 : vector<1x128xf32>
    %cst_61 = arith.constant 9.99999971E-10 : f32
    %102 = vector.broadcast %cst_61 : f32 to vector<1x128xf32>
    %103 = arith.addf %102, %101 : vector<1x128xf32>
    %104 = tpu.reciprocal %103 {approx = true} : vector<1x128xf32> -> vector<1x128xf32>
    %105 = vector.broadcast %104 : vector<1x128xf32> to vector<32x128xf32>
    %106 = arith.mulf %99, %105 : vector<32x128xf32>
    %c1_62 = arith.constant 1 : index
    %c0_63 = arith.constant 0 : index
    %c0_64 = arith.constant 0 : index
    %107 = vector.load %arg9[%c1_62, %c0_63, %c0_64] : memref<4x32x32xbf16, #tpu.memory_space<vmem>>, vector<1x32x32xbf16>
    %108 = vector.shape_cast %107 : vector<1x32x32xbf16> to vector<32x32xbf16>
    %109 = arith.subf %66, %106 : vector<32x128xf32>
    %110 = arith.truncf %109 : vector<32x128xf32> to vector<32x128xbf16>
    %cst_65 = arith.constant dense<0.000000e+00> : vector<32x128xf32>
    %111 = tpu.matmul %108, %110, %cst_65 {dimension_numbers = #tpu.dot_dimension_numbers<[1], [0], [0], [1], [0, 0, 1, 1], [], []>} : vector<32x32xbf16>, vector<32x128xbf16>, vector<32x128xf32> -> vector<32x128xf32>
    %c1_66 = arith.constant 1 : index
    %c0_67 = arith.constant 0 : index
    %c0_68 = arith.constant 0 : index
    %112 = vector.load %arg10[%c1_66, %c0_67, %c0_68] : memref<4x32x1xf32, #tpu.memory_space<vmem>>, vector<1x32x1xf32>
    %113 = vector.shape_cast %112 : vector<1x32x1xf32> to vector<32x1xf32>
    %114 = vector.broadcast %113 : vector<32x1xf32> to vector<32x128xf32>
    %115 = arith.addf %111, %114 : vector<32x128xf32>
    %cst_69 = arith.constant 0.000000e+00 : f32
    %116 = vector.broadcast %cst_69 : f32 to vector<32x128xf32>
    %117 = arith.maximumf %115, %116 : vector<32x128xf32>
    %118 = arith.addf %66, %117 : vector<32x128xf32>
    %119 = arith.truncf %118 : vector<32x128xf32> to vector<32x128xbf16>
    %c0_70 = arith.constant 0 : index
    %c32 = arith.constant 32 : index
    %c0_71 = arith.constant 0 : index
    %120 = vector.load %arg11[%c0_70, %c32, %c0_71] : memref<1x128x128xbf16, #tpu.memory_space<vmem>>, vector<1x32x128xbf16>
    %121 = vector.shape_cast %120 : vector<1x32x128xbf16> to vector<32x128xbf16>
    %122 = vector.shape_cast %119 : vector<32x128xbf16> to vector<1x32x128xbf16>
    tpu.vector_store %arg11[%c0_70, %c32, %c0_71], %122 {strides = array<i32>} : memref<1x128x128xbf16, #tpu.memory_space<vmem>>, vector<1x32x128xbf16>,
    %123 = arith.truncf %118 : vector<32x128xf32> to vector<32x128xbf16>
    %c2 = arith.constant 2 : index
    %c0_72 = arith.constant 0 : index
    %c0_73 = arith.constant 0 : index
    %124 = vector.load %arg6[%c2, %c0_72, %c0_73] : memref<4x8x32xbf16, #tpu.memory_space<vmem>>, vector<1x8x32xbf16>
    %125 = vector.shape_cast %124 : vector<1x8x32xbf16> to vector<8x32xbf16>
    %cst_74 = arith.constant dense<0.000000e+00> : vector<8x128xf32>
    %126 = tpu.matmul %125, %123, %cst_74 {dimension_numbers = #tpu.dot_dimension_numbers<[1], [0], [0], [1], [0, 0, 1, 1], [], []>} : vector<8x32xbf16>, vector<32x128xbf16>, vector<8x128xf32> -> vector<8x128xf32>
    %127 = arith.truncf %126 : vector<8x128xf32> to vector<8x128xbf16>
    %c2_75 = arith.constant 2 : index
    %c0_76 = arith.constant 0 : index
    %c0_77 = arith.constant 0 : index
    %128 = vector.load %arg7[%c2_75, %c0_76, %c0_77] : memref<4x32x32xbf16, #tpu.memory_space<vmem>>, vector<1x32x32xbf16>
    %129 = vector.shape_cast %128 : vector<1x32x32xbf16> to vector<32x32xbf16>
    %cst_78 = arith.constant dense<0.000000e+00> : vector<32x128xf32>
    %130 = tpu.matmul %129, %123, %cst_78 {dimension_numbers = #tpu.dot_dimension_numbers<[1], [0], [0], [1], [0, 0, 1, 1], [], []>} : vector<32x32xbf16>, vector<32x128xbf16>, vector<32x128xf32> -> vector<32x128xf32>
    %c2_79 = arith.constant 2 : index
    %c0_80 = arith.constant 0 : index
    %c0_81 = arith.constant 0 : index
    %131 = vector.load %arg8[%c2_79, %c0_80, %c0_81] : memref<4x32x1xf32, #tpu.memory_space<vmem>>, vector<1x32x1xf32>
    %132 = vector.shape_cast %131 : vector<1x32x1xf32> to vector<32x1xf32>
    %133 = vector.broadcast %132 : vector<32x1xf32> to vector<32x128xf32>
    %134 = arith.addf %130, %133 : vector<32x128xf32>
    %cst_82 = arith.constant 0.000000e+00 : f32
    %135 = vector.broadcast %cst_82 : f32 to vector<32x128xf32>
    %cst_83 = arith.constant 0.000000e+00 : f32
    %136 = vector.broadcast %cst_83 : f32 to vector<1x128xf32>
    %cst_84 = arith.constant dense<0.000000e+00> : vector<128x128xf32>
    %137 = tpu.matmul %127, %127, %cst_84 {dimension_numbers = #tpu.dot_dimension_numbers<[0], [0], [1], [1], [0, 1, 1, 1], [], []>} : vector<8x128xbf16>, vector<8x128xbf16>, vector<128x128xf32> -> vector<128x128xf32>
    %cst_85 = arith.constant dense<0xFF800000> : vector<128xf32>
    %138 = vector.multi_reduction <maximumf>, %137, %cst_85 [1] : vector<128x128xf32> to vector<128xf32>
    %139 = vector.shape_cast %138 : vector<128xf32> to vector<128x1xf32>
    %140 = vector.broadcast %139 : vector<128x1xf32> to vector<128x128xf32>
    %141 = arith.subf %137, %140 : vector<128x128xf32>
    %142 = math.exp %141 : vector<128x128xf32>
    %cst_86 = arith.constant dense<0.000000e+00> : vector<128xf32>
    %143 = vector.multi_reduction <add>, %142, %cst_86 [1] : vector<128x128xf32> to vector<128xf32>
    %144 = vector.shape_cast %143 : vector<128xf32> to vector<128x1xf32>
    %145 = tpu.reciprocal %144 {approx = true} : vector<128x1xf32> -> vector<128x1xf32>
    %146 = vector.broadcast %145 : vector<128x1xf32> to vector<128x128xf32>
    %147 = arith.mulf %142, %146 : vector<128x128xf32>
    %148 = arith.truncf %147 : vector<128x128xf32> to vector<128x128xbf16>
    %149 = arith.truncf %134 : vector<32x128xf32> to vector<32x128xbf16>
    %cst_87 = arith.constant dense<0.000000e+00> : vector<32x128xf32>
    %150 = tpu.matmul %149, %148, %cst_87 {dimension_numbers = #tpu.dot_dimension_numbers<[1], [0], [0], [1], [0, 0, 1, 1], [], []>} : vector<32x128xbf16>, vector<128x128xbf16>, vector<32x128xf32> -> vector<32x128xf32>
    %151 = arith.addf %135, %150 : vector<32x128xf32>
    %cst_88 = arith.constant dense<0.000000e+00> : vector<1x128xf32>
    %152 = tpu.matmul %18, %148, %cst_88 {dimension_numbers = #tpu.dot_dimension_numbers<[1], [0], [0], [1], [0, 0, 1, 1], [], []>} : vector<1x128xbf16>, vector<128x128xbf16>, vector<1x128xf32> -> vector<1x128xf32>
    %153 = arith.addf %136, %152 : vector<1x128xf32>
    %cst_89 = arith.constant 9.99999971E-10 : f32
    %154 = vector.broadcast %cst_89 : f32 to vector<1x128xf32>
    %155 = arith.addf %154, %153 : vector<1x128xf32>
    %156 = tpu.reciprocal %155 {approx = true} : vector<1x128xf32> -> vector<1x128xf32>
    %157 = vector.broadcast %156 : vector<1x128xf32> to vector<32x128xf32>
    %158 = arith.mulf %151, %157 : vector<32x128xf32>
    %c2_90 = arith.constant 2 : index
    %c0_91 = arith.constant 0 : index
    %c0_92 = arith.constant 0 : index
    %159 = vector.load %arg9[%c2_90, %c0_91, %c0_92] : memref<4x32x32xbf16, #tpu.memory_space<vmem>>, vector<1x32x32xbf16>
    %160 = vector.shape_cast %159 : vector<1x32x32xbf16> to vector<32x32xbf16>
    %161 = arith.subf %118, %158 : vector<32x128xf32>
    %162 = arith.truncf %161 : vector<32x128xf32> to vector<32x128xbf16>
    %cst_93 = arith.constant dense<0.000000e+00> : vector<32x128xf32>
    %163 = tpu.matmul %160, %162, %cst_93 {dimension_numbers = #tpu.dot_dimension_numbers<[1], [0], [0], [1], [0, 0, 1, 1], [], []>} : vector<32x32xbf16>, vector<32x128xbf16>, vector<32x128xf32> -> vector<32x128xf32>
    %c2_94 = arith.constant 2 : index
    %c0_95 = arith.constant 0 : index
    %c0_96 = arith.constant 0 : index
    %164 = vector.load %arg10[%c2_94, %c0_95, %c0_96] : memref<4x32x1xf32, #tpu.memory_space<vmem>>, vector<1x32x1xf32>
    %165 = vector.shape_cast %164 : vector<1x32x1xf32> to vector<32x1xf32>
    %166 = vector.broadcast %165 : vector<32x1xf32> to vector<32x128xf32>
    %167 = arith.addf %163, %166 : vector<32x128xf32>
    %cst_97 = arith.constant 0.000000e+00 : f32
    %168 = vector.broadcast %cst_97 : f32 to vector<32x128xf32>
    %169 = arith.maximumf %167, %168 : vector<32x128xf32>
    %170 = arith.addf %118, %169 : vector<32x128xf32>
    %171 = arith.truncf %170 : vector<32x128xf32> to vector<32x128xbf16>
    %c0_98 = arith.constant 0 : index
    %c64 = arith.constant 64 : index
    %c0_99 = arith.constant 0 : index
    %172 = vector.load %arg11[%c0_98, %c64, %c0_99] : memref<1x128x128xbf16, #tpu.memory_space<vmem>>, vector<1x32x128xbf16>
    %173 = vector.shape_cast %172 : vector<1x32x128xbf16> to vector<32x128xbf16>
    %174 = vector.shape_cast %171 : vector<32x128xbf16> to vector<1x32x128xbf16>
    tpu.vector_store %arg11[%c0_98, %c64, %c0_99], %174 {strides = array<i32>} : memref<1x128x128xbf16, #tpu.memory_space<vmem>>, vector<1x32x128xbf16>,
    %175 = arith.truncf %170 : vector<32x128xf32> to vector<32x128xbf16>
    %c3 = arith.constant 3 : index
    %c0_100 = arith.constant 0 : index
    %c0_101 = arith.constant 0 : index
    %176 = vector.load %arg6[%c3, %c0_100, %c0_101] : memref<4x8x32xbf16, #tpu.memory_space<vmem>>, vector<1x8x32xbf16>
    %177 = vector.shape_cast %176 : vector<1x8x32xbf16> to vector<8x32xbf16>
    %cst_102 = arith.constant dense<0.000000e+00> : vector<8x128xf32>
    %178 = tpu.matmul %177, %175, %cst_102 {dimension_numbers = #tpu.dot_dimension_numbers<[1], [0], [0], [1], [0, 0, 1, 1], [], []>} : vector<8x32xbf16>, vector<32x128xbf16>, vector<8x128xf32> -> vector<8x128xf32>
    %179 = arith.truncf %178 : vector<8x128xf32> to vector<8x128xbf16>
    %c3_103 = arith.constant 3 : index
    %c0_104 = arith.constant 0 : index
    %c0_105 = arith.constant 0 : index
    %180 = vector.load %arg7[%c3_103, %c0_104, %c0_105] : memref<4x32x32xbf16, #tpu.memory_space<vmem>>, vector<1x32x32xbf16>
    %181 = vector.shape_cast %180 : vector<1x32x32xbf16> to vector<32x32xbf16>
    %cst_106 = arith.constant dense<0.000000e+00> : vector<32x128xf32>
    %182 = tpu.matmul %181, %175, %cst_106 {dimension_numbers = #tpu.dot_dimension_numbers<[1], [0], [0], [1], [0, 0, 1, 1], [], []>} : vector<32x32xbf16>, vector<32x128xbf16>, vector<32x128xf32> -> vector<32x128xf32>
    %c3_107 = arith.constant 3 : index
    %c0_108 = arith.constant 0 : index
    %c0_109 = arith.constant 0 : index
    %183 = vector.load %arg8[%c3_107, %c0_108, %c0_109] : memref<4x32x1xf32, #tpu.memory_space<vmem>>, vector<1x32x1xf32>
    %184 = vector.shape_cast %183 : vector<1x32x1xf32> to vector<32x1xf32>
    %185 = vector.broadcast %184 : vector<32x1xf32> to vector<32x128xf32>
    %186 = arith.addf %182, %185 : vector<32x128xf32>
    %cst_110 = arith.constant 0.000000e+00 : f32
    %187 = vector.broadcast %cst_110 : f32 to vector<32x128xf32>
    %cst_111 = arith.constant 0.000000e+00 : f32
    %188 = vector.broadcast %cst_111 : f32 to vector<1x128xf32>
    %cst_112 = arith.constant dense<0.000000e+00> : vector<128x128xf32>
    %189 = tpu.matmul %179, %179, %cst_112 {dimension_numbers = #tpu.dot_dimension_numbers<[0], [0], [1], [1], [0, 1, 1, 1], [], []>} : vector<8x128xbf16>, vector<8x128xbf16>, vector<128x128xf32> -> vector<128x128xf32>
    %cst_113 = arith.constant dense<0xFF800000> : vector<128xf32>
    %190 = vector.multi_reduction <maximumf>, %189, %cst_113 [1] : vector<128x128xf32> to vector<128xf32>
    %191 = vector.shape_cast %190 : vector<128xf32> to vector<128x1xf32>
    %192 = vector.broadcast %191 : vector<128x1xf32> to vector<128x128xf32>
    %193 = arith.subf %189, %192 : vector<128x128xf32>
    %194 = math.exp %193 : vector<128x128xf32>
    %cst_114 = arith.constant dense<0.000000e+00> : vector<128xf32>
    %195 = vector.multi_reduction <add>, %194, %cst_114 [1] : vector<128x128xf32> to vector<128xf32>
    %196 = vector.shape_cast %195 : vector<128xf32> to vector<128x1xf32>
    %197 = tpu.reciprocal %196 {approx = true} : vector<128x1xf32> -> vector<128x1xf32>
    %198 = vector.broadcast %197 : vector<128x1xf32> to vector<128x128xf32>
    %199 = arith.mulf %194, %198 : vector<128x128xf32>
    %200 = arith.truncf %199 : vector<128x128xf32> to vector<128x128xbf16>
    %201 = arith.truncf %186 : vector<32x128xf32> to vector<32x128xbf16>
    %cst_115 = arith.constant dense<0.000000e+00> : vector<32x128xf32>
    %202 = tpu.matmul %201, %200, %cst_115 {dimension_numbers = #tpu.dot_dimension_numbers<[1], [0], [0], [1], [0, 0, 1, 1], [], []>} : vector<32x128xbf16>, vector<128x128xbf16>, vector<32x128xf32> -> vector<32x128xf32>
    %203 = arith.addf %187, %202 : vector<32x128xf32>
    %cst_116 = arith.constant dense<0.000000e+00> : vector<1x128xf32>
    %204 = tpu.matmul %18, %200, %cst_116 {dimension_numbers = #tpu.dot_dimension_numbers<[1], [0], [0], [1], [0, 0, 1, 1], [], []>} : vector<1x128xbf16>, vector<128x128xbf16>, vector<1x128xf32> -> vector<1x128xf32>
    %205 = arith.addf %188, %204 : vector<1x128xf32>
    %cst_117 = arith.constant 9.99999971E-10 : f32
    %206 = vector.broadcast %cst_117 : f32 to vector<1x128xf32>
    %207 = arith.addf %206, %205 : vector<1x128xf32>
    %208 = tpu.reciprocal %207 {approx = true} : vector<1x128xf32> -> vector<1x128xf32>
    %209 = vector.broadcast %208 : vector<1x128xf32> to vector<32x128xf32>
    %210 = arith.mulf %203, %209 : vector<32x128xf32>
    %c3_118 = arith.constant 3 : index
    %c0_119 = arith.constant 0 : index
    %c0_120 = arith.constant 0 : index
    %211 = vector.load %arg9[%c3_118, %c0_119, %c0_120] : memref<4x32x32xbf16, #tpu.memory_space<vmem>>, vector<1x32x32xbf16>
    %212 = vector.shape_cast %211 : vector<1x32x32xbf16> to vector<32x32xbf16>
    %213 = arith.subf %170, %210 : vector<32x128xf32>
    %214 = arith.truncf %213 : vector<32x128xf32> to vector<32x128xbf16>
    %cst_121 = arith.constant dense<0.000000e+00> : vector<32x128xf32>
    %215 = tpu.matmul %212, %214, %cst_121 {dimension_numbers = #tpu.dot_dimension_numbers<[1], [0], [0], [1], [0, 0, 1, 1], [], []>} : vector<32x32xbf16>, vector<32x128xbf16>, vector<32x128xf32> -> vector<32x128xf32>
    %c3_122 = arith.constant 3 : index
    %c0_123 = arith.constant 0 : index
    %c0_124 = arith.constant 0 : index
    %216 = vector.load %arg10[%c3_122, %c0_123, %c0_124] : memref<4x32x1xf32, #tpu.memory_space<vmem>>, vector<1x32x1xf32>
    %217 = vector.shape_cast %216 : vector<1x32x1xf32> to vector<32x1xf32>
    %218 = vector.broadcast %217 : vector<32x1xf32> to vector<32x128xf32>
    %219 = arith.addf %215, %218 : vector<32x128xf32>
    %cst_125 = arith.constant 0.000000e+00 : f32
    %220 = vector.broadcast %cst_125 : f32 to vector<32x128xf32>
    %221 = arith.maximumf %219, %220 : vector<32x128xf32>
    %222 = arith.addf %170, %221 : vector<32x128xf32>
    %223 = arith.truncf %222 : vector<32x128xf32> to vector<32x128xbf16>
    %c0_126 = arith.constant 0 : index
    %c96 = arith.constant 96 : index
    %c0_127 = arith.constant 0 : index
    %224 = vector.load %arg11[%c0_126, %c96, %c0_127] : memref<1x128x128xbf16, #tpu.memory_space<vmem>>, vector<1x32x128xbf16>
    %225 = vector.shape_cast %224 : vector<1x32x128xbf16> to vector<32x128xbf16>
    %226 = vector.shape_cast %223 : vector<32x128xbf16> to vector<1x32x128xbf16>
    tpu.vector_store %arg11[%c0_126, %c96, %c0_127], %226 {strides = array<i32>} : memref<1x128x128xbf16, #tpu.memory_space<vmem>>, vector<1x32x128xbf16>,
    return
  }
  func.func @transform_0(%arg0: i32) -> (i32, i32, i32) {
    %c0_i32 = arith.constant 0 : i32
    %c0_i32_0 = arith.constant 0 : i32
    %c0_i32_1 = arith.constant 0 : i32
    return %arg0, %c0_i32, %c0_i32_0 : i32, i32, i32
  }
  func.func @transform_1(%arg0: i32) -> (i32, i32) {
    %c0_i32 = arith.constant 0 : i32
    %c0_i32_0 = arith.constant 0 : i32
    %c0_i32_1 = arith.constant 0 : i32
    return %c0_i32, %c0_i32_0 : i32, i32
  }
  func.func @transform_2(%arg0: i32) -> (i32, i32) {
    %c0_i32 = arith.constant 0 : i32
    %c0_i32_0 = arith.constant 0 : i32
    %c0_i32_1 = arith.constant 0 : i32
    return %c0_i32, %c0_i32_0 : i32, i32
  }
  func.func @transform_3(%arg0: i32) -> (i32, i32) {
    %c0_i32 = arith.constant 0 : i32
    %c0_i32_0 = arith.constant 0 : i32
    %c0_i32_1 = arith.constant 0 : i32
    return %c0_i32, %c0_i32_0 : i32, i32
  }
  func.func @transform_4(%arg0: i32) -> (i32, i32) {
    %c0_i32 = arith.constant 0 : i32
    %c0_i32_0 = arith.constant 0 : i32
    %c0_i32_1 = arith.constant 0 : i32
    return %c0_i32, %c0_i32_0 : i32, i32
  }
  func.func @transform_5(%arg0: i32) -> (i32, i32, i32) {
    %c0_i32 = arith.constant 0 : i32
    %c0_i32_0 = arith.constant 0 : i32
    %c0_i32_1 = arith.constant 0 : i32
    %c0_i32_2 = arith.constant 0 : i32
    return %c0_i32, %c0_i32_0, %c0_i32_1 : i32, i32, i32
  }
  func.func @transform_6(%arg0: i32) -> (i32, i32, i32) {
    %c0_i32 = arith.constant 0 : i32
    %c0_i32_0 = arith.constant 0 : i32
    %c0_i32_1 = arith.constant 0 : i32
    %c0_i32_2 = arith.constant 0 : i32
    return %c0_i32, %c0_i32_0, %c0_i32_1 : i32, i32, i32
  }
  func.func @transform_7(%arg0: i32) -> (i32, i32, i32) {
    %c0_i32 = arith.constant 0 : i32
    %c0_i32_0 = arith.constant 0 : i32
    %c0_i32_1 = arith.constant 0 : i32
    %c0_i32_2 = arith.constant 0 : i32
    return %c0_i32, %c0_i32_0, %c0_i32_1 : i32, i32, i32
  }
  func.func @transform_8(%arg0: i32) -> (i32, i32, i32) {
    %c0_i32 = arith.constant 0 : i32
    %c0_i32_0 = arith.constant 0 : i32
    %c0_i32_1 = arith.constant 0 : i32
    %c0_i32_2 = arith.constant 0 : i32
    return %c0_i32, %c0_i32_0, %c0_i32_1 : i32, i32, i32
  }
  func.func @transform_9(%arg0: i32) -> (i32, i32, i32) {
    %c0_i32 = arith.constant 0 : i32
    %c0_i32_0 = arith.constant 0 : i32
    %c0_i32_1 = arith.constant 0 : i32
    %c0_i32_2 = arith.constant 0 : i32
    return %c0_i32, %c0_i32_0, %c0_i32_1 : i32, i32, i32
  }
  func.func @transform_10(%arg0: i32) -> (i32, i32, i32) {
    %c0_i32 = arith.constant 0 : i32
    %c0_i32_0 = arith.constant 0 : i32
    %c0_i32_1 = arith.constant 0 : i32
    return %arg0, %c0_i32, %c0_i32_0 : i32, i32, i32
  }
}

</mosaic_0001>

<llo_original>
// kernel: tpu_custom_call.1
$region0: #{tpu_custom_call.1}
  #allocation0 [shape = 'u32[]', space=smem, size = 0x4, offset = 0x4, fixed_abs, tag = 'smem constant byte address 0x4 - core index']
  #allocation1 [shape = 'u32[144,128]{1,0:T(1,128)}', space=vmem, size = 0x12000, scoped, tag = 'internal scratch']
  %s0 = inlined_call_operand.hbm [shape: f32[2,32,128], index: 0, kind: input, shape index: {}]
  %s1 = inlined_call_operand.hbm [shape: bf16[32,32], index: 1, kind: input, shape index: {}]
  %s2 = inlined_call_operand.hbm [shape: f32[32,1], index: 2, kind: input, shape index: {}]
  %s3 = inlined_call_operand.hbm [shape: bf16[32,32], index: 3, kind: input, shape index: {}]
  %s4 = inlined_call_operand.hbm [shape: f32[32,1], index: 4, kind: input, shape index: {}]
  %s5 = inlined_call_operand.hbm [shape: bf16[4,8,32], index: 5, kind: input, shape index: {}]
  %s6 = inlined_call_operand.hbm [shape: bf16[4,32,32], index: 6, kind: input, shape index: {}]
  %s7 = inlined_call_operand.hbm [shape: f32[4,32,1], index: 7, kind: input, shape index: {}]
  %s8 = inlined_call_operand.hbm [shape: bf16[4,32,32], index: 8, kind: input, shape index: {}]
  %s9 = inlined_call_operand.hbm [shape: f32[4,32,1], index: 9, kind: input, shape index: {}]
  %s10 = inlined_call_operand.hbm [shape: bf16[2,128,128], index: 10, kind: output, shape index: {}]
  %s11 = sld [smem:[#allocation0]]
  $region113: #{tpu_custom_call.1} parent=0
    _
  %s13 = ssub.s32 1, %s11
  %s14 = scalar_select 0, %s13, %s11
  $region1: #{tpu_custom_call.1} parent=0
    #allocation2 [shape = 'u8[32768]{0}', space=vmem, size = 0x8000, scoped, tag = 'input window, operand 0']
    #allocation3 [shape = 's32[2]{0}', space=sflag, size = 0x8, scoped, tag = 'scoped memory for tpu_custom_call.1']
    #allocation4 [shape = 's32[2]{0}', space=sflag, size = 0x8, scoped, tag = 'scoped memory for tpu_custom_call.1']
    #allocation5 [shape = 'u8[8192]{0}', space=vmem, size = 0x2000, scoped, tag = 'input window, operand 1, single buffered']
    #allocation6 [shape = 's32[1]{0}', space=sflag, size = 0x4, scoped, tag = 'scoped memory for tpu_custom_call.1']
    #allocation7 [shape = 'u8[16384]{0}', space=vmem, size = 0x4000, scoped, tag = 'input window, operand 2, single buffered']
    #allocation8 [shape = 'u8[8192]{0}', space=vmem, size = 0x2000, scoped, tag = 'input window, operand 3, single buffered']
    #allocation9 [shape = 's32[1]{0}', space=sflag, size = 0x4, scoped, tag = 'scoped memory for tpu_custom_call.1']
    #allocation10 [shape = 'u8[16384]{0}', space=vmem, size = 0x4000, scoped, tag = 'input window, operand 4, single buffered']
    #allocation11 [shape = 'u8[8192]{0}', space=vmem, size = 0x2000, scoped, tag = 'input window, operand 5, single buffered']
    #allocation12 [shape = 's32[1]{0}', space=sflag, size = 0x4, scoped, tag = 'scoped memory for tpu_custom_call.1']
    #allocation13 [shape = 'u8[32768]{0}', space=vmem, size = 0x8000, scoped, tag = 'input window, operand 6, single buffered']
    #allocation14 [shape = 'u8[65536]{0}', space=vmem, size = 0x10000, scoped, tag = 'input window, operand 7, single buffered']
    #allocation15 [shape = 's32[1]{0}', space=sflag, size = 0x4, scoped, tag = 'scoped memory for tpu_custom_call.1']
    #allocation16 [shape = 'u8[32768]{0}', space=vmem, size = 0x8000, scoped, tag = 'input window, operand 8, single buffered']
    #allocation17 [shape = 'u8[65536]{0}', space=vmem, size = 0x10000, scoped, tag = 'input window, operand 9, single buffered']
    #allocation18 [shape = 's32[1]{0}', space=sflag, size = 0x4, scoped, tag = 'scoped memory for tpu_custom_call.1']
    #allocation19 [shape = 'u8[65536]{0}', space=vmem, size = 0x10000, scoped, tag = 'output window, operand 0']
    %15 = vsyncpa [#allocation3], 0
    %s16 = scalar_lea.sflag [#allocation3], 1
    %17 = vsyncpa %s16, 0
    %18 = vsyncpa [#allocation6], 0
    %19 = vsyncpa [#allocation9], 0
    %20 = vsyncpa [#allocation12], 0
    %21 = vsyncpa [#allocation15], 0
    %22 = vsyncpa [#allocation18], 0
    %23 = vsyncpa [#allocation4], 0
    %s24 = scalar_lea.sflag [#allocation4], 1
    %25 = vsyncpa %s24, 0
    loop: start=0, step=1, limit=4
    $region2: #{tpu_custom_call.1} parent=1 // loop_pre_header
      _
    $region3: #{tpu_custom_call.1} parent=1 // loop_header
      %s27 = sphi 0, %s31
      %p28 = scmp.ge.s32.totalorder %s27, 4
      %s37 = sphi 0, %s39
      %s40 = sphi 0, %s37
      %s41 = sphi 0, %s40
      %s57 = sphi 0, %s41
      %s61 = sphi 0, %s61
      %s63 = sphi 0, %s61
      %s64 = sphi 0, %s63
      %s78 = sphi 0, %s64
      %s82 = sphi 0, %s82
      %s84 = sphi 0, %s82
      %s85 = sphi 0, %s84
      %s99 = sphi 0, %s85
      %s103 = sphi 0, %s103
      %s105 = sphi 0, %s103
      %s106 = sphi 0, %s105
      %s120 = sphi 0, %s106
      %s124 = sphi 0, %s124
      %s126 = sphi 0, %s124
      %s127 = sphi 0, %s126
      %s141 = sphi 0, %s127
      %s145 = sphi 0, %s145
      %s147 = sphi 0, %s145
      %s148 = sphi 0, %s147
      %s162 = sphi 0, %s148
      %s166 = sphi 0, %s166
      %s168 = sphi 0, %s166
      %s169 = sphi 0, %s168
      %s183 = sphi 0, %s169
      %s187 = sphi 0, %s187
      %s189 = sphi 0, %s187
      %s190 = sphi 0, %s189
      %s204 = sphi 0, %s190
      %s208 = sphi 0, %s208
      %s210 = sphi 0, %s208
      %s211 = sphi 0, %s210
      %s225 = sphi 0, %s211
      %s229 = sphi 0, %s229
      %s231 = sphi 0, %s229
      %s232 = sphi 0, %s231
      %s246 = sphi 0, %s232
      %s252 = sphi 0, %s254
      %s255 = sphi 0, %s252
      %s256 = sphi 0, %s255
      %s272 = sphi 0, %s256
    $region4: #{tpu_custom_call.1} parent=1 // loop_header_branch
      %30 = sbr.rel (%p28) target = $region8
    $region5: #{tpu_custom_call.1} parent=1 // loop_body
      %s32 = ssub.s32 %s27, 1
      %s33 = ssub.s32 %s27, 2
      %s34 = sadd.s32 %s27, 1
      %s35 = ssub.s32 %s27, %s34
      %p36 = scmp.eq.s32.totalorder %s35, 0
      %s38 = sadd.s32 %s37, 1
      %s39 = scalar_select %p36, %s37, %s38
      %p42 = pneg %p36
      %p43 = scmp.eq.s32.totalorder %s27, 1
      %p44 = por %p42, %p43
      %p45 = scmp.ne.s32.totalorder %s37, %s40
      %p46 = scmp.eq.s32.totalorder %s27, 0
      %p47 = por %p45, %p46
      %p48 = scmp.ne.s32.totalorder %s37, %s40
      %p49 = scmp.eq.s32.totalorder %s32, 1
      %p50 = por %p48, %p49
      %p51 = scmp.ne.s32.totalorder %s40, %s41
      %p52 = scmp.eq.s32.totalorder %s32, 0
      %p53 = por %p51, %p52
      %p54 = scmp.ne.s32.totalorder %s40, %s41
      %p55 = scmp.eq.s32.totalorder %s33, 1
      %p56 = por %p54, %p55
      %p58 = scmp.ne.s32.totalorder %s41, %s57
      %p59 = scmp.eq.s32.totalorder %s33, 0
      %p60 = por %p58, %p59
      %s62 = sadd.s32 %s61, 1
      %p65 = scmp.eq.s32.totalorder %s27, 1
      %p66 = scmp.ne.s32.totalorder %s61, %s63
      %p67 = scmp.eq.s32.totalorder %s27, 0
      %p68 = por %p66, %p67
      %p69 = scmp.ne.s32.totalorder %s61, %s63
      %p70 = scmp.eq.s32.totalorder %s32, 1
      %p71 = por %p69, %p70
      %p72 = scmp.ne.s32.totalorder %s63, %s64
      %p73 = scmp.eq.s32.totalorder %s32, 0
      %p74 = por %p72, %p73
      %p75 = scmp.ne.s32.totalorder %s63, %s64
      %p76 = scmp.eq.s32.totalorder %s33, 1
      %p77 = por %p75, %p76
      %p79 = scmp.ne.s32.totalorder %s64, %s78
      %p80 = scmp.eq.s32.totalorder %s33, 0
      %p81 = por %p79, %p80
      %s83 = sadd.s32 %s82, 1
      %p86 = scmp.eq.s32.totalorder %s27, 1
      %p87 = scmp.ne.s32.totalorder %s82, %s84
      %p88 = scmp.eq.s32.totalorder %s27, 0
      %p89 = por %p87, %p88
      %p90 = scmp.ne.s32.totalorder %s82, %s84
      %p91 = scmp.eq.s32.totalorder %s32, 1
      %p92 = por %p90, %p91
      %p93 = scmp.ne.s32.totalorder %s84, %s85
      %p94 = scmp.eq.s32.totalorder %s32, 0
      %p95 = por %p93, %p94
      %p96 = scmp.ne.s32.totalorder %s84, %s85
      %p97 = scmp.eq.s32.totalorder %s33, 1
      %p98 = por %p96, %p97
      %p100 = scmp.ne.s32.totalorder %s85, %s99
      %p101 = scmp.eq.s32.totalorder %s33, 0
      %p102 = por %p100, %p101
      %s104 = sadd.s32 %s103, 1
      %p107 = scmp.eq.s32.totalorder %s27, 1
      %p108 = scmp.ne.s32.totalorder %s103, %s105
      %p109 = scmp.eq.s32.totalorder %s27, 0
      %p110 = por %p108, %p109
      %p111 = scmp.ne.s32.totalorder %s103, %s105
      %p112 = scmp.eq.s32.totalorder %s32, 1
      %p113 = por %p111, %p112
      %p114 = scmp.ne.s32.totalorder %s105, %s106
      %p115 = scmp.eq.s32.totalorder %s32, 0
      %p116 = por %p114, %p115
      %p117 = scmp.ne.s32.totalorder %s105, %s106
      %p118 = scmp.eq.s32.totalorder %s33, 1
      %p119 = por %p117, %p118
      %p121 = scmp.ne.s32.totalorder %s106, %s120
      %p122 = scmp.eq.s32.totalorder %s33, 0
      %p123 = por %p121, %p122
      %s125 = sadd.s32 %s124, 1
      %p128 = scmp.eq.s32.totalorder %s27, 1
      %p129 = scmp.ne.s32.totalorder %s124, %s126
      %p130 = scmp.eq.s32.totalorder %s27, 0
      %p131 = por %p129, %p130
      %p132 = scmp.ne.s32.totalorder %s124, %s126
      %p133 = scmp.eq.s32.totalorder %s32, 1
      %p134 = por %p132, %p133
      %p135 = scmp.ne.s32.totalorder %s126, %s127
      %p136 = scmp.eq.s32.totalorder %s32, 0
      %p137 = por %p135, %p136
      %p138 = scmp.ne.s32.totalorder %s126, %s127
      %p139 = scmp.eq.s32.totalorder %s33, 1
      %p140 = por %p138, %p139
      %p142 = scmp.ne.s32.totalorder %s127, %s141
      %p143 = scmp.eq.s32.totalorder %s33, 0
      %p144 = por %p142, %p143
      %s146 = sadd.s32 %s145, 1
      %p149 = scmp.eq.s32.totalorder %s27, 1
      %p150 = scmp.ne.s32.totalorder %s145, %s147
      %p151 = scmp.eq.s32.totalorder %s27, 0
      %p152 = por %p150, %p151
      %p153 = scmp.ne.s32.totalorder %s145, %s147
      %p154 = scmp.eq.s32.totalorder %s32, 1
      %p155 = por %p153, %p154
      %p156 = scmp.ne.s32.totalorder %s147, %s148
      %p157 = scmp.eq.s32.totalorder %s32, 0
      %p158 = por %p156, %p157
      %p159 = scmp.ne.s32.totalorder %s147, %s148
      %p160 = scmp.eq.s32.totalorder %s33, 1
      %p161 = por %p159, %p160
      %p163 = scmp.ne.s32.totalorder %s148, %s162
      %p164 = scmp.eq.s32.totalorder %s33, 0
      %p165 = por %p163, %p164
      %s167 = sadd.s32 %s166, 1
      %p170 = scmp.eq.s32.totalorder %s27, 1
      %p171 = scmp.ne.s32.totalorder %s166, %s168
      %p172 = scmp.eq.s32.totalorder %s27, 0
      %p173 = por %p171, %p172
      %p174 = scmp.ne.s32.totalorder %s166, %s168
      %p175 = scmp.eq.s32.totalorder %s32, 1
      %p176 = por %p174, %p175
      %p177 = scmp.ne.s32.totalorder %s168, %s169
      %p178 = scmp.eq.s32.totalorder %s32, 0
      %p179 = por %p177, %p178
      %p180 = scmp.ne.s32.totalorder %s168, %s169
      %p181 = scmp.eq.s32.totalorder %s33, 1
      %p182 = por %p180, %p181
      %p184 = scmp.ne.s32.totalorder %s169, %s183
      %p185 = scmp.eq.s32.totalorder %s33, 0
      %p186 = por %p184, %p185
      %s188 = sadd.s32 %s187, 1
      %p191 = scmp.eq.s32.totalorder %s27, 1
      %p192 = scmp.ne.s32.totalorder %s187, %s189
      %p193 = scmp.eq.s32.totalorder %s27, 0
      %p194 = por %p192, %p193
      %p195 = scmp.ne.s32.totalorder %s187, %s189
      %p196 = scmp.eq.s32.totalorder %s32, 1
      %p197 = por %p195, %p196
      %p198 = scmp.ne.s32.totalorder %s189, %s190
      %p199 = scmp.eq.s32.totalorder %s32, 0
      %p200 = por %p198, %p199
      %p201 = scmp.ne.s32.totalorder %s189, %s190
      %p202 = scmp.eq.s32.totalorder %s33, 1
      %p203 = por %p201, %p202
      %p205 = scmp.ne.s32.totalorder %s190, %s204
      %p206 = scmp.eq.s32.totalorder %s33, 0
      %p207 = por %p205, %p206
      %s209 = sadd.s32 %s208, 1
      %p212 = scmp.eq.s32.totalorder %s27, 1
      %p213 = scmp.ne.s32.totalorder %s208, %s210
      %p214 = scmp.eq.s32.totalorder %s27, 0
      %p215 = por %p213, %p214
      %p216 = scmp.ne.s32.totalorder %s208, %s210
      %p217 = scmp.eq.s32.totalorder %s32, 1
      %p218 = por %p216, %p217
      %p219 = scmp.ne.s32.totalorder %s210, %s211
      %p220 = scmp.eq.s32.totalorder %s32, 0
      %p221 = por %p219, %p220
      %p222 = scmp.ne.s32.totalorder %s210, %s211
      %p223 = scmp.eq.s32.totalorder %s33, 1
      %p224 = por %p222, %p223
      %p226 = scmp.ne.s32.totalorder %s211, %s225
      %p227 = scmp.eq.s32.totalorder %s33, 0
      %p228 = por %p226, %p227
      %s230 = sadd.s32 %s229, 1
      %p233 = scmp.eq.s32.totalorder %s27, 1
      %p234 = scmp.ne.s32.totalorder %s229, %s231
      %p235 = scmp.eq.s32.totalorder %s27, 0
      %p236 = por %p234, %p235
      %p237 = scmp.ne.s32.totalorder %s229, %s231
      %p238 = scmp.eq.s32.totalorder %s32, 1
      %p239 = por %p237, %p238
      %p240 = scmp.ne.s32.totalorder %s231, %s232
      %p241 = scmp.eq.s32.totalorder %s32, 0
      %p242 = por %p240, %p241
      %p243 = scmp.ne.s32.totalorder %s231, %s232
      %p244 = scmp.eq.s32.totalorder %s33, 1
      %p245 = por %p243, %p244
      %p247 = scmp.ne.s32.totalorder %s232, %s246
      %p248 = scmp.eq.s32.totalorder %s33, 0
      %p249 = por %p247, %p248
      %s250 = ssub.s32 %s27, %s34
      %p251 = scmp.eq.s32.totalorder %s250, 0
      %s253 = sadd.s32 %s252, 1
      %s254 = scalar_select %p251, %s252, %s253
      %p257 = pneg %p251
      %p258 = scmp.eq.s32.totalorder %s27, 1
      %p259 = por %p257, %p258
      %p260 = scmp.ne.s32.totalorder %s252, %s255
      %p261 = scmp.eq.s32.totalorder %s27, 0
      %p262 = por %p260, %p261
      %p263 = scmp.ne.s32.totalorder %s252, %s255
      %p264 = scmp.eq.s32.totalorder %s32, 1
      %p265 = por %p263, %p264
      %p266 = scmp.ne.s32.totalorder %s255, %s256
      %p267 = scmp.eq.s32.totalorder %s32, 0
      %p268 = por %p266, %p267
      %p269 = scmp.ne.s32.totalorder %s255, %s256
      %p270 = scmp.eq.s32.totalorder %s33, 1
      %p271 = por %p269, %p270
      %p273 = scmp.ne.s32.totalorder %s256, %s272
      %p274 = scmp.eq.s32.totalorder %s33, 0
      %p275 = por %p273, %p274
      %p276 = scmp.le.s32.totalorder 1, %s27
      %p277 = scmp.lt.s32.totalorder %s27, 3
      %p278 = pnand %p276, %p277
      %p279 = pneg %p278
      // Predicated region
      $region9: #{tpu_custom_call.1} parent=5 // pred_check
        _
      $region10: #{tpu_custom_call.1} parent=5 // pred_check_branch
        %281 = sbr.rel (%p278) target = $region12
      $region11: #{tpu_custom_call.1} parent=5 // pred_region
        %s282 = ssub.s32 %s27, 1
        // Predicated region
        $region13: #{tpu_custom_call.1} parent=11 // pred_check
          %p283 = pneg %p74
        $region14: #{tpu_custom_call.1} parent=11 // pred_check_branch
          %285 = sbr.rel (%p283) target = $region16
        $region15: #{tpu_custom_call.1} parent=11 // pred_region
          %s287 = ssub.s32 256, 256
          %288 = vsyncadd [#allocation6], %s287
          %s289 = sshll.u32 [#allocation5], 4
          %s290 = int_to_ptr.vmem [resolvable:$true] %s289
          %295 = dma.hbm_to_vmem [thread:$0]  %s1, 256, %s290, [#allocation6], 64, 64, 4
        $region16: #{tpu_custom_call.1} parent=11 // pred_fallthru
          _
        // Predicated region
        $region17: #{tpu_custom_call.1} parent=11 // pred_check
          %p296 = pneg %p95
        $region18: #{tpu_custom_call.1} parent=11 // pred_check_branch
          %298 = sbr.rel (%p296) target = $region20
        $region19: #{tpu_custom_call.1} parent=11 // pred_region
          %s300 = ssub.s32 512, 512
          %301 = vsyncadd [#allocation6], %s300
          %s302 = sshll.u32 [#allocation7], 4
          %s303 = int_to_ptr.vmem [resolvable:$true] %s302
          %308 = dma.hbm_to_vmem [thread:$0]  %s2, 512, %s303, [#allocation6], 128, 128, 8
        $region20: #{tpu_custom_call.1} parent=11 // pred_fallthru
          _
        // Predicated region
        $region21: #{tpu_custom_call.1} parent=11 // pred_check
          %p309 = pneg %p116
        $region22: #{tpu_custom_call.1} parent=11 // pred_check_branch
          %311 = sbr.rel (%p309) target = $region24
        $region23: #{tpu_custom_call.1} parent=11 // pred_region
          %s313 = ssub.s32 256, 256
          %314 = vsyncadd [#allocation9], %s313
          %s315 = sshll.u32 [#allocation8], 4
          %s316 = int_to_ptr.vmem [resolvable:$true] %s315
          %321 = dma.hbm_to_vmem [thread:$0]  %s3, 256, %s316, [#allocation9], 64, 64, 4
        $region24: #{tpu_custom_call.1} parent=11 // pred_fallthru
          _
        // Predicated region
        $region25: #{tpu_custom_call.1} parent=11 // pred_check
          %p322 = pneg %p137
        $region26: #{tpu_custom_call.1} parent=11 // pred_check_branch
          %324 = sbr.rel (%p322) target = $region28
        $region27: #{tpu_custom_call.1} parent=11 // pred_region
          %s326 = ssub.s32 512, 512
          %327 = vsyncadd [#allocation9], %s326
          %s328 = sshll.u32 [#allocation10], 4
          %s329 = int_to_ptr.vmem [resolvable:$true] %s328
          %334 = dma.hbm_to_vmem [thread:$0]  %s4, 512, %s329, [#allocation9], 128, 128, 8
        $region28: #{tpu_custom_call.1} parent=11 // pred_fallthru
          _
        // Predicated region
        $region29: #{tpu_custom_call.1} parent=11 // pred_check
          %p335 = pneg %p158
        $region30: #{tpu_custom_call.1} parent=11 // pred_check_branch
          %337 = sbr.rel (%p335) target = $region32
        $region31: #{tpu_custom_call.1} parent=11 // pred_region
          %s339 = ssub.s32 256, 256
          %340 = vsyncadd [#allocation12], %s339
          %s341 = sshll.u32 [#allocation11], 4
          %s342 = int_to_ptr.vmem [resolvable:$true] %s341
          %347 = dma.hbm_to_vmem [thread:$0]  %s5, 256, %s342, [#allocation12], 64, 64, 4
        $region32: #{tpu_custom_call.1} parent=11 // pred_fallthru
          _
        // Predicated region
        $region33: #{tpu_custom_call.1} parent=11 // pred_check
          %p348 = pneg %p179
        $region34: #{tpu_custom_call.1} parent=11 // pred_check_branch
          %350 = sbr.rel (%p348) target = $region36
        $region35: #{tpu_custom_call.1} parent=11 // pred_region
          %s352 = ssub.s32 1024, 1024
          %353 = vsyncadd [#allocation12], %s352
          %s354 = sshll.u32 [#allocation13], 4
          %s355 = int_to_ptr.vmem [resolvable:$true] %s354
          %360 = dma.hbm_to_vmem [thread:$0]  %s6, 1024, %s355, [#allocation12], 64, 64, 4
        $region36: #{tpu_custom_call.1} parent=11 // pred_fallthru
          _
        // Predicated region
        $region37: #{tpu_custom_call.1} parent=11 // pred_check
          %p361 = pneg %p200
        $region38: #{tpu_custom_call.1} parent=11 // pred_check_branch
          %363 = sbr.rel (%p361) target = $region40
        $region39: #{tpu_custom_call.1} parent=11 // pred_region
          %s365 = ssub.s32 2048, 2048
          %366 = vsyncadd [#allocation15], %s365
          %s367 = sshll.u32 [#allocation14], 4
          %s368 = int_to_ptr.vmem [resolvable:$true] %s367
          %373 = dma.hbm_to_vmem [thread:$0]  %s7, 2048, %s368, [#allocation15], 128, 128, 8
        $region40: #{tpu_custom_call.1} parent=11 // pred_fallthru
          _
        // Predicated region
        $region41: #{tpu_custom_call.1} parent=11 // pred_check
          %p374 = pneg %p221
        $region42: #{tpu_custom_call.1} parent=11 // pred_check_branch
          %376 = sbr.rel (%p374) target = $region44
        $region43: #{tpu_custom_call.1} parent=11 // pred_region
          %s378 = ssub.s32 1024, 1024
          %379 = vsyncadd [#allocation15], %s378
          %s380 = sshll.u32 [#allocation16], 4
          %s381 = int_to_ptr.vmem [resolvable:$true] %s380
          %386 = dma.hbm_to_vmem [thread:$0]  %s8, 1024, %s381, [#allocation15], 64, 64, 4
        $region44: #{tpu_custom_call.1} parent=11 // pred_fallthru
          _
        // Predicated region
        $region45: #{tpu_custom_call.1} parent=11 // pred_check
          %p387 = pneg %p242
        $region46: #{tpu_custom_call.1} parent=11 // pred_check_branch
          %389 = sbr.rel (%p387) target = $region48
        $region47: #{tpu_custom_call.1} parent=11 // pred_region
          %s391 = ssub.s32 2048, 2048
          %392 = vsyncadd [#allocation18], %s391
          %s393 = sshll.u32 [#allocation17], 4
          %s394 = int_to_ptr.vmem [resolvable:$true] %s393
          %399 = dma.hbm_to_vmem [thread:$0]  %s9, 2048, %s394, [#allocation18], 128, 128, 8
        $region48: #{tpu_custom_call.1} parent=11 // pred_fallthru
          _
      $region12: #{tpu_custom_call.1} parent=5 // pred_fallthru
        _
      %p400 = scmp.lt.s32.totalorder %s27, 2
      // Predicated region
      $region49: #{tpu_custom_call.1} parent=5 // pred_check
        %p401 = pneg %p400
      $region50: #{tpu_custom_call.1} parent=5 // pred_check_branch
        %403 = sbr.rel (%p401) target = $region52
      $region51: #{tpu_custom_call.1} parent=5 // pred_region
        // Predicated region
        $region53: #{tpu_custom_call.1} parent=51 // pred_check
          %p404 = pneg %p47
        $region54: #{tpu_custom_call.1} parent=51 // pred_check_branch
          %406 = sbr.rel (%p404) target = $region56
        $region55: #{tpu_custom_call.1} parent=51 // pred_region
          %s407 = sand.u32 %s37, 1
          %s408 = scalar_lea.sflag [#allocation3], %s407
          %s409 = sand.u32 %s37, 1
          %s410 = smul.addr %s409, 32
          %s411 = scalar_lea.vmem [#allocation2], %s410
          %s413 = ssub.s32 512, 512
          %414 = vsyncadd %s408, %s413
          %s415 = smul.addr %s27, 4
          %s416 = smul.addr %s415, 128
          %s417 = scalar_lea.hbm %s0, %s416
          %s418 = sshll.u32 %s411, 4
          %s419 = int_to_ptr.vmem [resolvable:$true] %s418
          %424 = dma.hbm_to_vmem [thread:$0]  %s417, 512, %s419, %s408, 128, 128, 8
        $region56: #{tpu_custom_call.1} parent=51 // pred_fallthru
          _
      $region52: #{tpu_custom_call.1} parent=5 // pred_fallthru
        _
      %p425 = scmp.le.s32.totalorder 1, %s27
      %p426 = scmp.lt.s32.totalorder %s27, 3
      %p427 = pnand %p425, %p426
      %p428 = pneg %p427
      // Predicated region
      $region57: #{tpu_custom_call.1} parent=5 // pred_check
        _
      $region58: #{tpu_custom_call.1} parent=5 // pred_check_branch
        %430 = sbr.rel (%p427) target = $region60
      $region59: #{tpu_custom_call.1} parent=5 // pred_region
        %s431 = ssub.s32 %s27, 1
        %s432 = sand.u32 %s40, 1
        %s433 = scalar_lea.sflag [#allocation3], %s432
        %s434 = sand.u32 %s40, 1
        %s435 = smul.addr %s434, 32
        %s436 = scalar_lea.vmem [#allocation2], %s435
        // Predicated region
        $region61: #{tpu_custom_call.1} parent=59 // pred_check
          %p437 = pneg %p53
        $region62: #{tpu_custom_call.1} parent=59 // pred_check_branch
          %439 = sbr.rel (%p437) target = $region64
        $region63: #{tpu_custom_call.1} parent=59 // pred_region
          %440 = dma.done %s433, 512
        $region64: #{tpu_custom_call.1} parent=59 // pred_fallthru
          _
        // Predicated region
        $region65: #{tpu_custom_call.1} parent=59 // pred_check
          %p441 = pneg %p74
        $region66: #{tpu_custom_call.1} parent=59 // pred_check_branch
          %443 = sbr.rel (%p441) target = $region68
        $region67: #{tpu_custom_call.1} parent=59 // pred_region
          %444 = dma.done [#allocation6], 256
        $region68: #{tpu_custom_call.1} parent=59 // pred_fallthru
          _
        // Predicated region
        $region69: #{tpu_custom_call.1} parent=59 // pred_check
          %p445 = pneg %p95
        $region70: #{tpu_custom_call.1} parent=59 // pred_check_branch
          %447 = sbr.rel (%p445) target = $region72
        $region71: #{tpu_custom_call.1} parent=59 // pred_region
          %448 = dma.done [#allocation6], 512
        $region72: #{tpu_custom_call.1} parent=59 // pred_fallthru
          _
        // Predicated region
        $region73: #{tpu_custom_call.1} parent=59 // pred_check
          %p449 = pneg %p116
        $region74: #{tpu_custom_call.1} parent=59 // pred_check_branch
          %451 = sbr.rel (%p449) target = $region76
        $region75: #{tpu_custom_call.1} parent=59 // pred_region
          %452 = dma.done [#allocation9], 256
        $region76: #{tpu_custom_call.1} parent=59 // pred_fallthru
          _
        // Predicated region
        $region77: #{tpu_custom_call.1} parent=59 // pred_check
          %p453 = pneg %p137
        $region78: #{tpu_custom_call.1} parent=59 // pred_check_branch
          %455 = sbr.rel (%p453) target = $region80
        $region79: #{tpu_custom_call.1} parent=59 // pred_region
          %456 = dma.done [#allocation9], 512
        $region80: #{tpu_custom_call.1} parent=59 // pred_fallthru
          _
        // Predicated region
        $region81: #{tpu_custom_call.1} parent=59 // pred_check
          %p457 = pneg %p158
        $region82: #{tpu_custom_call.1} parent=59 // pred_check_branch
          %459 = sbr.rel (%p457) target = $region84
        $region83: #{tpu_custom_call.1} parent=59 // pred_region
          %460 = dma.done [#allocation12], 256
        $region84: #{tpu_custom_call.1} parent=59 // pred_fallthru
          _
        // Predicated region
        $region85: #{tpu_custom_call.1} parent=59 // pred_check
          %p461 = pneg %p179
        $region86: #{tpu_custom_call.1} parent=59 // pred_check_branch
          %463 = sbr.rel (%p461) target = $region88
        $region87: #{tpu_custom_call.1} parent=59 // pred_region
          %464 = dma.done [#allocation12], 1024
        $region88: #{tpu_custom_call.1} parent=59 // pred_fallthru
          _
        // Predicated region
        $region89: #{tpu_custom_call.1} parent=59 // pred_check
          %p465 = pneg %p200
        $region90: #{tpu_custom_call.1} parent=59 // pred_check_branch
          %467 = sbr.rel (%p465) target = $region92
        $region91: #{tpu_custom_call.1} parent=59 // pred_region
          %468 = dma.done [#allocation15], 2048
        $region92: #{tpu_custom_call.1} parent=59 // pred_fallthru
          _
        // Predicated region
        $region93: #{tpu_custom_call.1} parent=59 // pred_check
          %p469 = pneg %p221
        $region94: #{tpu_custom_call.1} parent=59 // pred_check_branch
          %471 = sbr.rel (%p469) target = $region96
        $region95: #{tpu_custom_call.1} parent=59 // pred_region
          %472 = dma.done [#allocation15], 1024
        $region96: #{tpu_custom_call.1} parent=59 // pred_fallthru
          _
        // Predicated region
        $region97: #{tpu_custom_call.1} parent=59 // pred_check
          %p473 = pneg %p242
        $region98: #{tpu_custom_call.1} parent=59 // pred_check_branch
          %475 = sbr.rel (%p473) target = $region100
        $region99: #{tpu_custom_call.1} parent=59 // pred_region
          %476 = dma.done [#allocation18], 2048
        $region100: #{tpu_custom_call.1} parent=59 // pred_fallthru
          _
        %s477 = sand.u32 %s40, 1
        %s478 = scalar_lea.sflag [#allocation3], %s477
        %s479 = sand.u32 %s40, 1
        %s480 = smul.addr %s479, 32
        %s481 = scalar_lea.vmem [#allocation2], %s480
        %p482 = pneg %p53
        %p483 = pneg %p50
        %p484 = pneg %p74
        %p485 = pneg %p71
        %p486 = pneg %p95
        %p487 = pneg %p92
        %p488 = pneg %p116
        %p489 = pneg %p113
        %p490 = pneg %p137
        %p491 = pneg %p134
        %p492 = pneg %p158
        %p493 = pneg %p155
        %p494 = pneg %p179
        %p495 = pneg %p176
        %p496 = pneg %p200
        %p497 = pneg %p197
        %p498 = pneg %p221
        %p499 = pneg %p218
        %p500 = pneg %p242
        %p501 = pneg %p239
        %p502 = pneg %p268
        %p503 = pneg %p265
        %s504 = sand.u32 %s255, 1
        %s505 = scalar_lea.sflag [#allocation4], %s504
        %s506 = sand.u32 %s255, 1
        %s507 = smul.addr %s506, 64
        %s508 = scalar_lea.vmem [#allocation19], %s507
        %v511 = vld [vmem:[%s436] sm:$0xff]
        %v512 = vld [vmem:[%s436 + $0x8] sm:$0xff]
        %v513 = vld [vmem:[%s436 + $0x10] sm:$0xff]
        %v514 = vld [vmem:[%s436 + $0x18] sm:$0xff]
        %v515 = vpack.c.bf16 %v512, %v511
        %v516 = vpack.c.bf16 %v514, %v513
        %v517 = vld [vmem:[#allocation5] sm:$0xf]
        %v518 = vld [vmem:[#allocation5 + $0x4] sm:$0xf]
        %v519 = vld [vmem:[#allocation5 + $0x8] sm:$0xf]
        %v520 = vld [vmem:[#allocation5 + $0xc] sm:$0xf]
        %v521 = vld [vmem:[#allocation7] sm:$0xff]
        %v522 = vld [vmem:[#allocation7 + $0x8] sm:$0xff]
        %v523 = vld [vmem:[#allocation7 + $0x10] sm:$0xff]
        %v524 = vld [vmem:[#allocation7 + $0x18] sm:$0xff]
        %526 = vset.pattern.permute.xlu0 0
        %527 = vperm.xlu0 %526, %v521
        %v528 = vpop.permute.xlu0 %527
        %531 = vset.pattern.permute.xlu0 0
        %532 = vperm.xlu0 %531, %v522
        %v533 = vpop.permute.xlu0 %532
        %536 = vset.pattern.permute.xlu0 0
        %537 = vperm.xlu0 %536, %v523
        %v538 = vpop.permute.xlu0 %537
        %541 = vset.pattern.permute.xlu0 0
        %542 = vperm.xlu0 %541, %v524
        %v543 = vpop.permute.xlu0 %542
        %v549 = vunpack.c.l.b16 %v517
        %v550 = vunpack.c.l.b16 %v518
        %v551 = vunpack.c.l.b16 %v519
        %v552 = vunpack.c.l.b16 %v520
        %v553 = vpack.c.b16 %v550, %v549
        %v554 = vpack.c.b16 %v552, %v551
        %vm555 = vcmask 261120
        %v557 = vsel %vm555, %v553, 0
        %v560 = vsel %vm555, %v554, 0
        %562 = vmatprep.subr.bf16.mxu0 0
        %563 = vmatpush1.bf16.msra.mxu0 %v515
        %564 = vmatprep.subr.bf16.mxu0 0
        %565 = vmatpush1.bf16.msra.mxu0 %v516
        %566 = vmatprep.subr.bf16.mxu0 0
        %567 = vmatpush1.bf16.msra.mxu0 0
        %568 = vmatprep.subr.bf16.mxu0 0
        %569 = vmatpush1.bf16.msra.mxu0 0
        %570 = vmatprep.subr.bf16.mxu0 0
        %571 = vmatpush1.bf16.msra.mxu0 0
        %572 = vmatprep.subr.bf16.mxu0 0
        %573 = vmatpush1.bf16.msra.mxu0 0
        %574 = vmatprep.subr.bf16.mxu0 0
        %575 = vmatpush1.bf16.msra.mxu0 0
        %576 = vmatprep.subr.bf16.mxu0 0
        %577 = vmatpush1.bf16.msra.mxu0 0
        %578 = vmatprep.subr.bf16.mxu0 0
        %579 = vmatpush1.bf16.msra.mxu0 0
        %580 = vmatprep.subr.bf16.mxu0 0
        %581 = vmatpush1.bf16.msra.mxu0 0
        %582 = vmatprep.subr.bf16.mxu0 0
        %583 = vmatpush1.bf16.msra.mxu0 0
        %584 = vmatprep.subr.bf16.mxu0 0
        %585 = vmatpush1.bf16.msra.mxu0 0
        %586 = vmatprep.subr.bf16.mxu0 0
        %587 = vmatpush1.bf16.msra.mxu0 0
        %588 = vmatprep.subr.bf16.mxu0 0
        %589 = vmatpush1.bf16.msra.mxu0 0
        %590 = vmatprep.subr.bf16.mxu0 0
        %591 = vmatpush1.bf16.msra.mxu0 0
        %592 = vmatprep.subr.bf16.mxu0 0
        %593 = vmatpush1.bf16.msra.mxu0 0
        %594 = vmatprep.mubr.bf16.mxu0 0
        %595 = vmatmul.mubr.bf16.gmra.mrb[0].mxu0 %v557
        %v596 = vpop.f32.mrb[0].mxu0
        %v597 = vadd.f32 %v528, %v596
        %v598 = vpop.f32.mrb[0].mxu0
        %v599 = vpop.f32.mrb[0].mxu0
        %v600 = vadd.f32 %v533, %v599
        %v601 = vpop.f32.mrb[0].mxu0
        %602 = vmatprep.mubr.bf16.mxu0 0
        %603 = vmatmul.mubr.bf16.gmra.mrb[0].mxu0 %v560
        %v604 = vpop.f32.mrb[0].mxu0
        %v605 = vadd.f32 %v538, %v604
        %v606 = vpop.f32.mrb[0].mxu0
        %v607 = vpop.f32.mrb[0].mxu0
        %v608 = vadd.f32 %v543, %v607
        %v609 = vpop.f32.mrb[0].mxu0
        %610 = vdwg.mxu0
        %v611 = vmax.f32 %v597, 0.0
        %v612 = vmax.f32 %v600, 0.0
        %v613 = vmax.f32 %v605, 0.0
        %v614 = vmax.f32 %v608, 0.0
        %v615 = vld [vmem:[#allocation8] sm:$0xf]
        %v616 = vld [vmem:[#allocation8 + $0x4] sm:$0xf]
        %v617 = vld [vmem:[#allocation8 + $0x8] sm:$0xf]
        %v618 = vld [vmem:[#allocation8 + $0xc] sm:$0xf]
        %v619 = vpack.c.bf16 %v612, %v611
        %v620 = vpack.c.bf16 %v614, %v613
        %v621 = vld [vmem:[#allocation10] sm:$0xff]
        %v622 = vld [vmem:[#allocation10 + $0x8] sm:$0xff]
        %v623 = vld [vmem:[#allocation10 + $0x10] sm:$0xff]
        %v624 = vld [vmem:[#allocation10 + $0x18] sm:$0xff]
        %626 = vset.pattern.permute.xlu0 0
        %627 = vperm.xlu0 %626, %v621
        %v628 = vpop.permute.xlu0 %627
        %631 = vset.pattern.permute.xlu0 0
        %632 = vperm.xlu0 %631, %v622
        %v633 = vpop.permute.xlu0 %632
        %636 = vset.pattern.permute.xlu0 0
        %637 = vperm.xlu0 %636, %v623
        %v638 = vpop.permute.xlu0 %637
        %641 = vset.pattern.permute.xlu0 0
        %642 = vperm.xlu0 %641, %v624
        %v643 = vpop.permute.xlu0 %642
        %v649 = vunpack.c.l.b16 %v615
        %v650 = vunpack.c.l.b16 %v616
        %v651 = vunpack.c.l.b16 %v617
        %v652 = vunpack.c.l.b16 %v618
        %v653 = vpack.c.b16 %v650, %v649
        %v654 = vpack.c.b16 %v652, %v651
        %v656 = vsel %vm555, %v653, 0
        %v659 = vsel %vm555, %v654, 0
        %661 = vmatprep.subr.bf16.mxu0 0
        %662 = vmatpush1.bf16.msra.mxu0 %v619
        %663 = vmatprep.subr.bf16.mxu0 0
        %664 = vmatpush1.bf16.msra.mxu0 %v620
        %665 = vmatprep.subr.bf16.mxu0 0
        %666 = vmatpush1.bf16.msra.mxu0 0
        %667 = vmatprep.subr.bf16.mxu0 0
        %668 = vmatpush1.bf16.msra.mxu0 0
        %669 = vmatprep.subr.bf16.mxu0 0
        %670 = vmatpush1.bf16.msra.mxu0 0
        %671 = vmatprep.subr.bf16.mxu0 0
        %672 = vmatpush1.bf16.msra.mxu0 0
        %673 = vmatprep.subr.bf16.mxu0 0
        %674 = vmatpush1.bf16.msra.mxu0 0
        %675 = vmatprep.subr.bf16.mxu0 0
        %676 = vmatpush1.bf16.msra.mxu0 0
        %677 = vmatprep.subr.bf16.mxu0 0
        %678 = vmatpush1.bf16.msra.mxu0 0
        %679 = vmatprep.subr.bf16.mxu0 0
        %680 = vmatpush1.bf16.msra.mxu0 0
        %681 = vmatprep.subr.bf16.mxu0 0
        %682 = vmatpush1.bf16.msra.mxu0 0
        %683 = vmatprep.subr.bf16.mxu0 0
        %684 = vmatpush1.bf16.msra.mxu0 0
        %685 = vmatprep.subr.bf16.mxu0 0
        %686 = vmatpush1.bf16.msra.mxu0 0
        %687 = vmatprep.subr.bf16.mxu0 0
        %688 = vmatpush1.bf16.msra.mxu0 0
        %689 = vmatprep.subr.bf16.mxu0 0
        %690 = vmatpush1.bf16.msra.mxu0 0
        %691 = vmatprep.subr.bf16.mxu0 0
        %692 = vmatpush1.bf16.msra.mxu0 0
        %693 = vmatprep.mubr.bf16.mxu0 0
        %694 = vmatmul.mubr.bf16.gmra.mrb[0].mxu0 %v656
        %v695 = vpop.f32.mrb[0].mxu0
        %v696 = vadd.f32 %v628, %v695
        %v697 = vpop.f32.mrb[0].mxu0
        %v698 = vpop.f32.mrb[0].mxu0
        %v699 = vadd.f32 %v633, %v698
        %v700 = vpop.f32.mrb[0].mxu0
        %701 = vmatprep.mubr.bf16.mxu0 0
        %702 = vmatmul.mubr.bf16.gmra.mrb[0].mxu0 %v659
        %v703 = vpop.f32.mrb[0].mxu0
        %v704 = vadd.f32 %v638, %v703
        %v705 = vpop.f32.mrb[0].mxu0
        %v706 = vpop.f32.mrb[0].mxu0
        %v707 = vadd.f32 %v643, %v706
        %v708 = vpop.f32.mrb[0].mxu0
        %709 = vdwg.mxu0
        %v710 = vmax.f32 %v696, 0.0
        %v711 = vmax.f32 %v699, 0.0
        %v712 = vmax.f32 %v704, 0.0
        %v713 = vmax.f32 %v707, 0.0
        %v714 = vpack.c.bf16 %v711, %v710
        %v715 = vpack.c.bf16 %v713, %v712
        %v716 = vld [vmem:[#allocation11] sm:$0xf]
        %v718 = vsel %vm555, %v716, 0
        %720 = vmatprep.subr.bf16.mxu0 0
        %721 = vmatpush1.bf16.msra.mxu0 %v714
        %722 = vmatprep.subr.bf16.mxu0 0
        %723 = vmatpush1.bf16.msra.mxu0 %v715
        %724 = vmatprep.subr.bf16.mxu0 0
        %725 = vmatpush1.bf16.msra.mxu0 0
        %726 = vmatprep.subr.bf16.mxu0 0
        %727 = vmatpush1.bf16.msra.mxu0 0
        %728 = vmatprep.subr.bf16.mxu0 0
        %729 = vmatpush1.bf16.msra.mxu0 0
        %730 = vmatprep.subr.bf16.mxu0 0
        %731 = vmatpush1.bf16.msra.mxu0 0
        %732 = vmatprep.subr.bf16.mxu0 0
        %733 = vmatpush1.bf16.msra.mxu0 0
        %734 = vmatprep.subr.bf16.mxu0 0
        %735 = vmatpush1.bf16.msra.mxu0 0
        %736 = vmatprep.subr.bf16.mxu0 0
        %737 = vmatpush1.bf16.msra.mxu0 0
        %738 = vmatprep.subr.bf16.mxu0 0
        %739 = vmatpush1.bf16.msra.mxu0 0
        %740 = vmatprep.subr.bf16.mxu0 0
        %741 = vmatpush1.bf16.msra.mxu0 0
        %742 = vmatprep.subr.bf16.mxu0 0
        %743 = vmatpush1.bf16.msra.mxu0 0
        %744 = vmatprep.subr.bf16.mxu0 0
        %745 = vmatpush1.bf16.msra.mxu0 0
        %746 = vmatprep.subr.bf16.mxu0 0
        %747 = vmatpush1.bf16.msra.mxu0 0
        %748 = vmatprep.subr.bf16.mxu0 0
        %749 = vmatpush1.bf16.msra.mxu0 0
        %750 = vmatprep.subr.bf16.mxu0 0
        %751 = vmatpush1.bf16.msra.mxu0 0
        %752 = vmatprep.mubr.bf16.mxu0 0
        %753 = vmatmul.mubr.bf16.gmra.mrb[0].mxu0 %v718
        %v754 = vpop.f32.mrb[0].mxu0
        %v755 = vadd.f32 0.0, %v754
        %v756 = vpop.f32.mrb[0].mxu0
        %v757 = vpop.f32.mrb[0].mxu0
        %v758 = vpop.f32.mrb[0].mxu0
        %759 = vdwg.mxu0
        %v760 = vpack.c.bf16 %v755, %v755
        %v761 = vld [vmem:[#allocation13] sm:$0xf]
        %v762 = vld [vmem:[#allocation13 + $0x4] sm:$0xf]
        %v763 = vld [vmem:[#allocation13 + $0x8] sm:$0xf]
        %v764 = vld [vmem:[#allocation13 + $0xc] sm:$0xf]
        %v765 = vld [vmem:[#allocation14] sm:$0xff]
        %v766 = vld [vmem:[#allocation14 + $0x8] sm:$0xff]
        %v767 = vld [vmem:[#allocation14 + $0x10] sm:$0xff]
        %v768 = vld [vmem:[#allocation14 + $0x18] sm:$0xff]
        %770 = vset.pattern.permute.xlu0 0
        %771 = vperm.xlu0 %770, %v765
        %v772 = vpop.permute.xlu0 %771
        %775 = vset.pattern.permute.xlu0 0
        %776 = vperm.xlu0 %775, %v766
        %v777 = vpop.permute.xlu0 %776
        %780 = vset.pattern.permute.xlu0 0
        %781 = vperm.xlu0 %780, %v767
        %v782 = vpop.permute.xlu0 %781
        %785 = vset.pattern.permute.xlu0 0
        %786 = vperm.xlu0 %785, %v768
        %v787 = vpop.permute.xlu0 %786
        %v793 = vunpack.c.l.b16 %v761
        %v794 = vunpack.c.l.b16 %v762
        %v795 = vunpack.c.l.b16 %v763
        %v796 = vunpack.c.l.b16 %v764
        %v797 = vpack.c.b16 %v794, %v793
        %v798 = vpack.c.b16 %v796, %v795
        %v800 = vsel %vm555, %v797, 0
        %v803 = vsel %vm555, %v798, 0
        %805 = vmatprep.subr.bf16.mxu0 0
        %806 = vmatpush1.bf16.msra.mxu0 %v714
        %807 = vmatprep.subr.bf16.mxu0 0
        %808 = vmatpush1.bf16.msra.mxu0 %v715
        %809 = vmatprep.subr.bf16.mxu0 0
        %810 = vmatpush1.bf16.msra.mxu0 0
        %811 = vmatprep.subr.bf16.mxu0 0
        %812 = vmatpush1.bf16.msra.mxu0 0
        %813 = vmatprep.subr.bf16.mxu0 0
        %814 = vmatpush1.bf16.msra.mxu0 0
        %815 = vmatprep.subr.bf16.mxu0 0
        %816 = vmatpush1.bf16.msra.mxu0 0
        %817 = vmatprep.subr.bf16.mxu0 0
        %818 = vmatpush1.bf16.msra.mxu0 0
        %819 = vmatprep.subr.bf16.mxu0 0
        %820 = vmatpush1.bf16.msra.mxu0 0
        %821 = vmatprep.subr.bf16.mxu0 0
        %822 = vmatpush1.bf16.msra.mxu0 0
        %823 = vmatprep.subr.bf16.mxu0 0
        %824 = vmatpush1.bf16.msra.mxu0 0
        %825 = vmatprep.subr.bf16.mxu0 0
        %826 = vmatpush1.bf16.msra.mxu0 0
        %827 = vmatprep.subr.bf16.mxu0 0
        %828 = vmatpush1.bf16.msra.mxu0 0
        %829 = vmatprep.subr.bf16.mxu0 0
        %830 = vmatpush1.bf16.msra.mxu0 0
        %831 = vmatprep.subr.bf16.mxu0 0
        %832 = vmatpush1.bf16.msra.mxu0 0
        %833 = vmatprep.subr.bf16.mxu0 0
        %834 = vmatpush1.bf16.msra.mxu0 0
        %835 = vmatprep.subr.bf16.mxu0 0
        %836 = vmatpush1.bf16.msra.mxu0 0
        %837 = vmatprep.mubr.bf16.mxu0 0
        %838 = vmatmul.mubr.bf16.gmra.mrb[0].mxu0 %v800
        %v839 = vpop.f32.mrb[0].mxu0
        %v840 = vadd.f32 %v772, %v839
        %v841 = vpop.f32.mrb[0].mxu0
        %v842 = vpop.f32.mrb[0].mxu0
        %v843 = vadd.f32 %v777, %v842
        %v844 = vpop.f32.mrb[0].mxu0
        %845 = vmatprep.mubr.bf16.mxu0 0
        %846 = vmatmul.mubr.bf16.gmra.mrb[0].mxu0 %v803
        %v847 = vpop.f32.mrb[0].mxu0
        %v848 = vadd.f32 %v782, %v847
        %v849 = vpop.f32.mrb[0].mxu0
        %v850 = vpop.f32.mrb[0].mxu0
        %v851 = vadd.f32 %v787, %v850
        %v852 = vpop.f32.mrb[0].mxu0
        %853 = vdwg.mxu0
        %854 = vxpose.xlu0.c.b16.start [1/8] %v760, 128
        %855 = vxpose.xlu0.c.b16.cont [2/8] 0, 128
        %856 = vxpose.xlu0.c.b16.cont [3/8] 0, 128
        %857 = vxpose.xlu0.c.b16.cont [4/8] 0, 128
        %858 = vxpose.xlu0.c.b16.cont [5/8] 0, 128
        %859 = vxpose.xlu0.c.b16.cont [6/8] 0, 128
        %860 = vxpose.xlu0.c.b16.cont [7/8] 0, 128
        %861 = vxpose.xlu0.c.b16.end [8/8] 0, 128
        %v862 = vpop.trf.xlu0
        %v863 = vpop.trf.xlu0
        %v864 = vpop.trf.xlu0
        %v865 = vpop.trf.xlu0
        %v866 = vpop.trf.xlu0
        %v867 = vpop.trf.xlu0
        %v868 = vpop.trf.xlu0
        %v869 = vpop.trf.xlu0
        %vm870 = vcmask 64512
        %v872 = vsel %vm870, %v862, 0
        %v875 = vsel %vm870, %v863, 0
        %v878 = vsel %vm870, %v864, 0
        %v881 = vsel %vm870, %v865, 0
        %v884 = vsel %vm870, %v866, 0
        %v887 = vsel %vm870, %v867, 0
        %v890 = vsel %vm870, %v868, 0
        %v893 = vsel %vm870, %v869, 0
        %vm895 = vcmask 1043456
        %v897 = vsel %vm895, %v760, 0
        %899 = vmatprep.subr.bf16.mxu0 0
        %900 = vmatpush1.bf16.msra.mxu0 %v897
        %901 = vmatprep.subr.bf16.mxu0 0
        %902 = vmatpush1.bf16.msra.mxu0 0
        %903 = vmatprep.subr.bf16.mxu0 0
        %904 = vmatpush1.bf16.msra.mxu0 0
        %905 = vmatprep.subr.bf16.mxu0 0
        %906 = vmatpush1.bf16.msra.mxu0 0
        %907 = vmatprep.subr.bf16.mxu0 0
        %908 = vmatpush1.bf16.msra.mxu0 0
        %909 = vmatprep.subr.bf16.mxu0 0
        %910 = vmatpush1.bf16.msra.mxu0 0
        %911 = vmatprep.subr.bf16.mxu0 0
        %912 = vmatpush1.bf16.msra.mxu0 0
        %913 = vmatprep.subr.bf16.mxu0 0
        %914 = vmatpush1.bf16.msra.mxu0 0
        %915 = vmatprep.subr.bf16.mxu0 0
        %916 = vmatpush1.bf16.msra.mxu0 0
        %917 = vmatprep.subr.bf16.mxu0 0
        %918 = vmatpush1.bf16.msra.mxu0 0
        %919 = vmatprep.subr.bf16.mxu0 0
        %920 = vmatpush1.bf16.msra.mxu0 0
        %921 = vmatprep.subr.bf16.mxu0 0
        %922 = vmatpush1.bf16.msra.mxu0 0
        %923 = vmatprep.subr.bf16.mxu0 0
        %924 = vmatpush1.bf16.msra.mxu0 0
        %925 = vmatprep.subr.bf16.mxu0 0
        %926 = vmatpush1.bf16.msra.mxu0 0
        %927 = vmatprep.subr.bf16.mxu0 0
        %928 = vmatpush1.bf16.msra.mxu0 0
        %929 = vmatprep.subr.bf16.mxu0 0
        %930 = vmatpush1.bf16.msra.mxu0 0
        %931 = vmatprep.mubr.bf16.mxu0 0
        %932 = vmatmul.mubr.bf16.gmra.mrb[0].mxu0 %v872
        %v933 = vpop.f32.mrb[0].mxu0
        %v934 = vadd.f32 0.0, %v933
        %v935 = vpop.f32.mrb[0].mxu0
        %v936 = vpop.f32.mrb[0].mxu0
        %v937 = vadd.f32 0.0, %v936
        %v938 = vpop.f32.mrb[0].mxu0
        %939 = vmatprep.mubr.bf16.mxu0 0
        %940 = vmatmul.mubr.bf16.gmra.mrb[0].mxu0 %v875
        %v941 = vpop.f32.mrb[0].mxu0
        %v942 = vadd.f32 0.0, %v941
        %v943 = vpop.f32.mrb[0].mxu0
        %v944 = vpop.f32.mrb[0].mxu0
        %v945 = vadd.f32 0.0, %v944
        %v946 = vpop.f32.mrb[0].mxu0
        %947 = vmatprep.mubr.bf16.mxu0 0
        %948 = vmatmul.mubr.bf16.gmra.mrb[0].mxu0 %v878
        %v949 = vpop.f32.mrb[0].mxu0
        %v950 = vadd.f32 0.0, %v949
        %v951 = vpop.f32.mrb[0].mxu0
        %v952 = vpop.f32.mrb[0].mxu0
        %v953 = vadd.f32 0.0, %v952
        %v954 = vpop.f32.mrb[0].mxu0
        %955 = vmatprep.mubr.bf16.mxu0 0
        %956 = vmatmul.mubr.bf16.gmra.mrb[0].mxu0 %v881
        %v957 = vpop.f32.mrb[0].mxu0
        %v958 = vadd.f32 0.0, %v957
        %v959 = vpop.f32.mrb[0].mxu0
        %v960 = vpop.f32.mrb[0].mxu0
        %v961 = vadd.f32 0.0, %v960
        %v962 = vpop.f32.mrb[0].mxu0
        %963 = vmatprep.mubr.bf16.mxu0 0
        %964 = vmatmul.mubr.bf16.gmra.mrb[0].mxu0 %v884
        %v965 = vpop.f32.mrb[0].mxu0
        %v966 = vadd.f32 0.0, %v965
        %v967 = vpop.f32.mrb[0].mxu0
        %v968 = vpop.f32.mrb[0].mxu0
        %v969 = vadd.f32 0.0, %v968
        %v970 = vpop.f32.mrb[0].mxu0
        %971 = vmatprep.mubr.bf16.mxu0 0
        %972 = vmatmul.mubr.bf16.gmra.mrb[0].mxu0 %v887
        %v973 = vpop.f32.mrb[0].mxu0
        %v974 = vadd.f32 0.0, %v973
        %v975 = vpop.f32.mrb[0].mxu0
        %v976 = vpop.f32.mrb[0].mxu0
        %v977 = vadd.f32 0.0, %v976
        %v978 = vpop.f32.mrb[0].mxu0
        %979 = vmatprep.mubr.bf16.mxu0 0
        %980 = vmatmul.mubr.bf16.gmra.mrb[0].mxu0 %v890
        %v981 = vpop.f32.mrb[0].mxu0
        %v982 = vadd.f32 0.0, %v981
        %v983 = vpop.f32.mrb[0].mxu0
        %v984 = vpop.f32.mrb[0].mxu0
        %v985 = vadd.f32 0.0, %v984
        %v986 = vpop.f32.mrb[0].mxu0
        %987 = vmatprep.mubr.bf16.mxu0 0
        %988 = vmatmul.mubr.bf16.gmra.mrb[0].mxu0 %v893
        %v989 = vpop.f32.mrb[0].mxu0
        %v990 = vadd.f32 0.0, %v989
        %v991 = vpop.f32.mrb[0].mxu0
        %v992 = vpop.f32.mrb[0].mxu0
        %v993 = vadd.f32 0.0, %v992
        %v994 = vpop.f32.mrb[0].mxu0
        %995 = vdwg.mxu0
        %996 = vmax.xlane.f32.xlu0 %v934
        %v997 = vpop.xlane.xlu0 %996
        %998 = vmax.xlane.f32.xlu0 %v937
        %v999 = vpop.xlane.xlu0 %998
        %1000 = vmax.xlane.f32.xlu0 %v942
        %v1001 = vpop.xlane.xlu0 %1000
        %1002 = vmax.xlane.f32.xlu0 %v945
        %v1003 = vpop.xlane.xlu0 %1002
        %1004 = vmax.xlane.f32.xlu0 %v950
        %v1005 = vpop.xlane.xlu0 %1004
        %1006 = vmax.xlane.f32.xlu0 %v953
        %v1007 = vpop.xlane.xlu0 %1006
        %1008 = vmax.xlane.f32.xlu0 %v958
        %v1009 = vpop.xlane.xlu0 %1008
        %1010 = vmax.xlane.f32.xlu0 %v961
        %v1011 = vpop.xlane.xlu0 %1010
        %1012 = vmax.xlane.f32.xlu0 %v966
        %v1013 = vpop.xlane.xlu0 %1012
        %1014 = vmax.xlane.f32.xlu0 %v969
        %v1015 = vpop.xlane.xlu0 %1014
        %1016 = vmax.xlane.f32.xlu0 %v974
        %v1017 = vpop.xlane.xlu0 %1016
        %1018 = vmax.xlane.f32.xlu0 %v977
        %v1019 = vpop.xlane.xlu0 %1018
        %1020 = vmax.xlane.f32.xlu0 %v982
        %v1021 = vpop.xlane.xlu0 %1020
        %1022 = vmax.xlane.f32.xlu0 %v985
        %v1023 = vpop.xlane.xlu0 %1022
        %1024 = vmax.xlane.f32.xlu0 %v990
        %v1025 = vpop.xlane.xlu0 %1024
        %1026 = vmax.xlane.f32.xlu0 %v993
        %v1027 = vpop.xlane.xlu0 %1026
        %v1028 = vsub.f32 %v934, %v997
        %v1029 = vsub.f32 %v937, %v999
        %v1030 = vsub.f32 %v942, %v1001
        %v1031 = vsub.f32 %v945, %v1003
        %v1032 = vsub.f32 %v950, %v1005
        %v1033 = vsub.f32 %v953, %v1007
        %v1034 = vsub.f32 %v958, %v1009
        %v1035 = vsub.f32 %v961, %v1011
        %v1036 = vsub.f32 %v966, %v1013
        %v1037 = vsub.f32 %v969, %v1015
        %v1038 = vsub.f32 %v974, %v1017
        %v1039 = vsub.f32 %v977, %v1019
        %v1040 = vsub.f32 %v982, %v1021
        %v1041 = vsub.f32 %v985, %v1023
        %v1042 = vsub.f32 %v990, %v1025
        %v1043 = vsub.f32 %v993, %v1027
        %v1044 = vmul.f32 %v1028, 1.442695
        %v1045 = vpow.pop %v1044
        %v1046 = vmul.f32 %v1029, 1.442695
        %v1047 = vpow.pop %v1046
        %v1048 = vmul.f32 %v1030, 1.442695
        %v1049 = vpow.pop %v1048
        %v1050 = vmul.f32 %v1031, 1.442695
        %v1051 = vpow.pop %v1050
        %v1052 = vmul.f32 %v1032, 1.442695
        %v1053 = vpow.pop %v1052
        %v1054 = vmul.f32 %v1033, 1.442695
        %v1055 = vpow.pop %v1054
        %v1056 = vmul.f32 %v1034, 1.442695
        %v1057 = vpow.pop %v1056
        %v1058 = vmul.f32 %v1035, 1.442695
        %v1059 = vpow.pop %v1058
        %v1060 = vmul.f32 %v1036, 1.442695
        %v1061 = vpow.pop %v1060
        %v1062 = vmul.f32 %v1037, 1.442695
        %v1063 = vpow.pop %v1062
        %v1064 = vmul.f32 %v1038, 1.442695
        %v1065 = vpow.pop %v1064
        %v1066 = vmul.f32 %v1039, 1.442695
        %v1067 = vpow.pop %v1066
        %v1068 = vmul.f32 %v1040, 1.442695
        %v1069 = vpow.pop %v1068
        %v1070 = vmul.f32 %v1041, 1.442695
        %v1071 = vpow.pop %v1070
        %v1072 = vmul.f32 %v1042, 1.442695
        %v1073 = vpow.pop %v1072
        %v1074 = vmul.f32 %v1043, 1.442695
        %v1075 = vpow.pop %v1074
        %1076 = vadd.xlane.f32.xlu0 %v1045
        %v1077 = vpop.xlane.xlu0 %1076
        %1078 = vadd.xlane.f32.xlu0 %v1047
        %v1079 = vpop.xlane.xlu0 %1078
        %1080 = vadd.xlane.f32.xlu0 %v1049
        %v1081 = vpop.xlane.xlu0 %1080
        %1082 = vadd.xlane.f32.xlu0 %v1051
        %v1083 = vpop.xlane.xlu0 %1082
        %1084 = vadd.xlane.f32.xlu0 %v1053
        %v1085 = vpop.xlane.xlu0 %1084
        %1086 = vadd.xlane.f32.xlu0 %v1055
        %v1087 = vpop.xlane.xlu0 %1086
        %1088 = vadd.xlane.f32.xlu0 %v1057
        %v1089 = vpop.xlane.xlu0 %1088
        %1090 = vadd.xlane.f32.xlu0 %v1059
        %v1091 = vpop.xlane.xlu0 %1090
        %1092 = vadd.xlane.f32.xlu0 %v1061
        %v1093 = vpop.xlane.xlu0 %1092
        %1094 = vadd.xlane.f32.xlu0 %v1063
        %v1095 = vpop.xlane.xlu0 %1094
        %1096 = vadd.xlane.f32.xlu0 %v1065
        %v1097 = vpop.xlane.xlu0 %1096
        %1098 = vadd.xlane.f32.xlu0 %v1067
        %v1099 = vpop.xlane.xlu0 %1098
        %1100 = vadd.xlane.f32.xlu0 %v1069
        %v1101 = vpop.xlane.xlu0 %1100
        %1102 = vadd.xlane.f32.xlu0 %v1071
        %v1103 = vpop.xlane.xlu0 %1102
        %1104 = vadd.xlane.f32.xlu0 %v1073
        %v1105 = vpop.xlane.xlu0 %1104
        %1106 = vadd.xlane.f32.xlu0 %v1075
        %v1107 = vpop.xlane.xlu0 %1106
        %v1108 = vrcp.pop %v1077
        %v1109 = vrcp.pop %v1079
        %v1110 = vrcp.pop %v1081
        %v1111 = vrcp.pop %v1083
        %v1112 = vrcp.pop %v1085
        %v1113 = vrcp.pop %v1087
        %v1114 = vrcp.pop %v1089
        %v1115 = vrcp.pop %v1091
        %v1116 = vrcp.pop %v1093
        %v1117 = vrcp.pop %v1095
        %v1118 = vrcp.pop %v1097
        %v1119 = vrcp.pop %v1099
        %v1120 = vrcp.pop %v1101
        %v1121 = vrcp.pop %v1103
        %v1122 = vrcp.pop %v1105
        %v1123 = vrcp.pop %v1107
        %v1124 = vmul.f32 %v1045, %v1108
        %v1125 = vmul.f32 %v1047, %v1109
        %v1126 = vmul.f32 %v1049, %v1110
        %v1127 = vmul.f32 %v1051, %v1111
        %v1128 = vmul.f32 %v1053, %v1112
        %v1129 = vmul.f32 %v1055, %v1113
        %v1130 = vmul.f32 %v1057, %v1114
        %v1131 = vmul.f32 %v1059, %v1115
        %v1132 = vmul.f32 %v1061, %v1116
        %v1133 = vmul.f32 %v1063, %v1117
        %v1134 = vmul.f32 %v1065, %v1118
        %v1135 = vmul.f32 %v1067, %v1119
        %v1136 = vmul.f32 %v1069, %v1120
        %v1137 = vmul.f32 %v1071, %v1121
        %v1138 = vmul.f32 %v1073, %v1122
        %v1139 = vmul.f32 %v1075, %v1123
        %v1140 = vpack.c.bf16 %v1125, %v1124
        %v1141 = vpack.c.bf16 %v1127, %v1126
        %v1142 = vpack.c.bf16 %v1129, %v1128
        %v1143 = vpack.c.bf16 %v1131, %v1130
        %v1144 = vpack.c.bf16 %v1133, %v1132
        %v1145 = vpack.c.bf16 %v1135, %v1134
        %v1146 = vpack.c.bf16 %v1137, %v1136
        %v1147 = vpack.c.bf16 %v1139, %v1138
        %v1148 = vpack.c.bf16 %v843, %v840
        %v1149 = vpack.c.bf16 %v851, %v848
        %1150 = vmatprep.subr.bf16.mxu0 0
        %1151 = vmatpush1.bf16.msra.mxu0 %v1140
        %1152 = vmatprep.subr.bf16.mxu0 0
        %1153 = vmatpush1.bf16.msra.mxu0 %v1141
        %1154 = vmatprep.subr.bf16.mxu0 0
        %1155 = vmatpush1.bf16.msra.mxu0 %v1142
        %1156 = vmatprep.subr.bf16.mxu0 0
        %1157 = vmatpush1.bf16.msra.mxu0 %v1143
        %1158 = vmatprep.subr.bf16.mxu0 0
        %1159 = vmatpush1.bf16.msra.mxu0 %v1144
        %1160 = vmatprep.subr.bf16.mxu0 0
        %1161 = vmatpush1.bf16.msra.mxu0 %v1145
        %1162 = vmatprep.subr.bf16.mxu0 0
        %1163 = vmatpush1.bf16.msra.mxu0 %v1146
        %1164 = vmatprep.subr.bf16.mxu0 0
        %1165 = vmatpush1.bf16.msra.mxu0 %v1147
        %1166 = vmatprep.subr.bf16.mxu0 0
        %1167 = vmatpush1.bf16.msra.mxu0 0
        %1168 = vmatprep.subr.bf16.mxu0 0
        %1169 = vmatpush1.bf16.msra.mxu0 0
        %1170 = vmatprep.subr.bf16.mxu0 0
        %1171 = vmatpush1.bf16.msra.mxu0 0
        %1172 = vmatprep.subr.bf16.mxu0 0
        %1173 = vmatpush1.bf16.msra.mxu0 0
        %1174 = vmatprep.subr.bf16.mxu0 0
        %1175 = vmatpush1.bf16.msra.mxu0 0
        %1176 = vmatprep.subr.bf16.mxu0 0
        %1177 = vmatpush1.bf16.msra.mxu0 0
        %1178 = vmatprep.subr.bf16.mxu0 0
        %1179 = vmatpush1.bf16.msra.mxu0 0
        %1180 = vmatprep.subr.bf16.mxu0 0
        %1181 = vmatpush1.bf16.msra.mxu0 0
        %1182 = vmatprep.mubr.bf16.mxu0 0
        %1183 = vmatmul.mubr.bf16.gmra.mrb[0].mxu0 %v1148
        %v1184 = vpop.f32.mrb[0].mxu0
        %v1185 = vadd.f32 0.0, %v1184
        %v1186 = vpop.f32.mrb[0].mxu0
        %v1187 = vpop.f32.mrb[0].mxu0
        %v1188 = vadd.f32 0.0, %v1187
        %v1189 = vpop.f32.mrb[0].mxu0
        %1190 = vmatprep.mubr.bf16.mxu0 0
        %1191 = vmatmul.mubr.bf16.gmra.mrb[0].mxu0 %v1149
        %v1192 = vpop.f32.mrb[0].mxu0
        %v1193 = vadd.f32 0.0, %v1192
        %v1194 = vpop.f32.mrb[0].mxu0
        %v1195 = vpop.f32.mrb[0].mxu0
        %v1196 = vadd.f32 0.0, %v1195
        %v1197 = vpop.f32.mrb[0].mxu0
        %1198 = vdwg.mxu0
        %1199 = vmatprep.subr.bf16.mxu0 0
        %1200 = vmatpush1.bf16.msra.mxu0 %v1140
        %1201 = vmatprep.subr.bf16.mxu0 0
        %1202 = vmatpush1.bf16.msra.mxu0 %v1141
        %1203 = vmatprep.subr.bf16.mxu0 0
        %1204 = vmatpush1.bf16.msra.mxu0 %v1142
        %1205 = vmatprep.subr.bf16.mxu0 0
        %1206 = vmatpush1.bf16.msra.mxu0 %v1143
        %1207 = vmatprep.subr.bf16.mxu0 0
        %1208 = vmatpush1.bf16.msra.mxu0 %v1144
        %1209 = vmatprep.subr.bf16.mxu0 0
        %1210 = vmatpush1.bf16.msra.mxu0 %v1145
        %1211 = vmatprep.subr.bf16.mxu0 0
        %1212 = vmatpush1.bf16.msra.mxu0 %v1146
        %1213 = vmatprep.subr.bf16.mxu0 0
        %1214 = vmatpush1.bf16.msra.mxu0 %v1147
        %1215 = vmatprep.subr.bf16.mxu0 0
        %1216 = vmatpush1.bf16.msra.mxu0 0
        %1217 = vmatprep.subr.bf16.mxu0 0
        %1218 = vmatpush1.bf16.msra.mxu0 0
        %1219 = vmatprep.subr.bf16.mxu0 0
        %1220 = vmatpush1.bf16.msra.mxu0 0
        %1221 = vmatprep.subr.bf16.mxu0 0
        %1222 = vmatpush1.bf16.msra.mxu0 0
        %1223 = vmatprep.subr.bf16.mxu0 0
        %1224 = vmatpush1.bf16.msra.mxu0 0
        %1225 = vmatprep.subr.bf16.mxu0 0
        %1226 = vmatpush1.bf16.msra.mxu0 0
        %1227 = vmatprep.subr.bf16.mxu0 0
        %1228 = vmatpush1.bf16.msra.mxu0 0
        %1229 = vmatprep.subr.bf16.mxu0 0
        %1230 = vmatpush1.bf16.msra.mxu0 0
        %1231 = vmatprep.mubr.bf16.mxu0 0
        %1232 = vmatmul.mubr.bf16.gmra.mrb[0].mxu0 1065369472
        %v1233 = vpop.f32.mrb[0].mxu0
        %v1234 = vadd.f32 1e-09, %v1233
        %v1235 = vpop.f32.mrb[0].mxu0
        %v1236 = vpop.f32.mrb[0].mxu0
        %v1237 = vpop.f32.mrb[0].mxu0
        %1238 = vdwg.mxu0
        %v1239 = vrcp.pop %v1234
        %v1240 = vlaneseq
        %v1241 = vshrl.u32 %v1240, 7
        %v1242 = vsub.s32 0, %v1241
        %v1243 = vrot.slane %v1239, %v1242
        %v1244 = vmul.f32 %v1185, %v1243
        %v1245 = vmul.f32 %v1188, %v1243
        %v1246 = vmul.f32 %v1193, %v1243
        %v1247 = vmul.f32 %v1196, %v1243
        %v1248 = vld [vmem:[#allocation16] sm:$0xf]
        %v1249 = vld [vmem:[#allocation16 + $0x4] sm:$0xf]
        %v1250 = vld [vmem:[#allocation16 + $0x8] sm:$0xf]
        %v1251 = vld [vmem:[#allocation16 + $0xc] sm:$0xf]
        %v1252 = vsub.f32 %v710, %v1244
        %v1253 = vsub.f32 %v711, %v1245
        %v1254 = vsub.f32 %v712, %v1246
        %v1255 = vsub.f32 %v713, %v1247
        %v1256 = vpack.c.bf16 %v1253, %v1252
        %v1257 = vpack.c.bf16 %v1255, %v1254
        %v1258 = vld [vmem:[#allocation17] sm:$0xff]
        %v1259 = vld [vmem:[#allocation17 + $0x8] sm:$0xff]
        %v1260 = vld [vmem:[#allocation17 + $0x10] sm:$0xff]
        %v1261 = vld [vmem:[#allocation17 + $0x18] sm:$0xff]
        %1263 = vset.pattern.permute.xlu0 0
        %1264 = vperm.xlu0 %1263, %v1258
        %v1265 = vpop.permute.xlu0 %1264
        %1268 = vset.pattern.permute.xlu0 0
        %1269 = vperm.xlu0 %1268, %v1259
        %v1270 = vpop.permute.xlu0 %1269
        %1273 = vset.pattern.permute.xlu0 0
        %1274 = vperm.xlu0 %1273, %v1260
        %v1275 = vpop.permute.xlu0 %1274
        %1278 = vset.pattern.permute.xlu0 0
        %1279 = vperm.xlu0 %1278, %v1261
        %v1280 = vpop.permute.xlu0 %1279
        %v1286 = vunpack.c.l.b16 %v1248
        %v1287 = vunpack.c.l.b16 %v1249
        %v1288 = vunpack.c.l.b16 %v1250
        %v1289 = vunpack.c.l.b16 %v1251
        %v1290 = vpack.c.b16 %v1287, %v1286
        %v1291 = vpack.c.b16 %v1289, %v1288
        %v1293 = vsel %vm555, %v1290, 0
        %v1296 = vsel %vm555, %v1291, 0
        %1298 = vmatprep.subr.bf16.mxu0 0
        %1299 = vmatpush1.bf16.msra.mxu0 %v1256
        %1300 = vmatprep.subr.bf16.mxu0 0
        %1301 = vmatpush1.bf16.msra.mxu0 %v1257
        %1302 = vmatprep.subr.bf16.mxu0 0
        %1303 = vmatpush1.bf16.msra.mxu0 0
        %1304 = vmatprep.subr.bf16.mxu0 0
        %1305 = vmatpush1.bf16.msra.mxu0 0
        %1306 = vmatprep.subr.bf16.mxu0 0
        %1307 = vmatpush1.bf16.msra.mxu0 0
        %1308 = vmatprep.subr.bf16.mxu0 0
        %1309 = vmatpush1.bf16.msra.mxu0 0
        %1310 = vmatprep.subr.bf16.mxu0 0
        %1311 = vmatpush1.bf16.msra.mxu0 0
        %1312 = vmatprep.subr.bf16.mxu0 0
        %1313 = vmatpush1.bf16.msra.mxu0 0
        %1314 = vmatprep.subr.bf16.mxu0 0
        %1315 = vmatpush1.bf16.msra.mxu0 0
        %1316 = vmatprep.subr.bf16.mxu0 0
        %1317 = vmatpush1.bf16.msra.mxu0 0
        %1318 = vmatprep.subr.bf16.mxu0 0
        %1319 = vmatpush1.bf16.msra.mxu0 0
        %1320 = vmatprep.subr.bf16.mxu0 0
        %1321 = vmatpush1.bf16.msra.mxu0 0
        %1322 = vmatprep.subr.bf16.mxu0 0
        %1323 = vmatpush1.bf16.msra.mxu0 0
        %1324 = vmatprep.subr.bf16.mxu0 0
        %1325 = vmatpush1.bf16.msra.mxu0 0
        %1326 = vmatprep.subr.bf16.mxu0 0
        %1327 = vmatpush1.bf16.msra.mxu0 0
        %1328 = vmatprep.subr.bf16.mxu0 0
        %1329 = vmatpush1.bf16.msra.mxu0 0
        %1330 = vmatprep.mubr.bf16.mxu0 0
        %1331 = vmatmul.mubr.bf16.gmra.mrb[0].mxu0 %v1293
        %v1332 = vpop.f32.mrb[0].mxu0
        %v1333 = vadd.f32 %v1265, %v1332
        %v1334 = vpop.f32.mrb[0].mxu0
        %v1335 = vpop.f32.mrb[0].mxu0
        %v1336 = vadd.f32 %v1270, %v1335
        %v1337 = vpop.f32.mrb[0].mxu0
        %1338 = vmatprep.mubr.bf16.mxu0 0
        %1339 = vmatmul.mubr.bf16.gmra.mrb[0].mxu0 %v1296
        %v1340 = vpop.f32.mrb[0].mxu0
        %v1341 = vadd.f32 %v1275, %v1340
        %v1342 = vpop.f32.mrb[0].mxu0
        %v1343 = vpop.f32.mrb[0].mxu0
        %v1344 = vadd.f32 %v1280, %v1343
        %v1345 = vpop.f32.mrb[0].mxu0
        %1346 = vdwg.mxu0
        %v1347 = vmax.f32 %v1333, 0.0
        %v1348 = vmax.f32 %v1336, 0.0
        %v1349 = vmax.f32 %v1341, 0.0
        %v1350 = vmax.f32 %v1344, 0.0
        %v1351 = vadd.f32 %v710, %v1347
        %v1352 = vadd.f32 %v711, %v1348
        %v1353 = vadd.f32 %v712, %v1349
        %v1354 = vadd.f32 %v713, %v1350
        %v1355 = vpack.c.bf16 %v1352, %v1351
        %v1356 = vpack.c.bf16 %v1354, %v1353
        %v1359 = vunpack.c.l.b16 %v1355
        %v1360 = vunpack.c.h.b16 %v1355
        %v1361 = vunpack.c.l.b16 %v1356
        %v1362 = vunpack.c.h.b16 %v1356
        %v1363 = vpack.c.b16 %v1359, %v1359
        %v1364 = vpack.c.b16 %v1360, %v1360
        %v1365 = vpack.c.b16 %v1361, %v1361
        %v1366 = vpack.c.b16 %v1362, %v1362
        %1371 = vst [vmem:[%s508] sm:$0xf] %v1363
        %1372 = vst [vmem:[%s508 + $0x4] sm:$0xf] %v1364
        %1373 = vst [vmem:[%s508 + $0x8] sm:$0xf] %v1365
        %1374 = vst [vmem:[%s508 + $0xc] sm:$0xf] %v1366
        %s1375 = scalar_lea.vmem [#allocation11], 4
        %v1376 = vld [vmem:[%s1375] sm:$0xf]
        %v1378 = vsel %vm555, %v1376, 0
        %1380 = vmatprep.subr.bf16.mxu0 0
        %1381 = vmatpush1.bf16.msra.mxu0 %v1355
        %1382 = vmatprep.subr.bf16.mxu0 0
        %1383 = vmatpush1.bf16.msra.mxu0 %v1356
        %1384 = vmatprep.subr.bf16.mxu0 0
        %1385 = vmatpush1.bf16.msra.mxu0 0
        %1386 = vmatprep.subr.bf16.mxu0 0
        %1387 = vmatpush1.bf16.msra.mxu0 0
        %1388 = vmatprep.subr.bf16.mxu0 0
        %1389 = vmatpush1.bf16.msra.mxu0 0
        %1390 = vmatprep.subr.bf16.mxu0 0
        %1391 = vmatpush1.bf16.msra.mxu0 0
        %1392 = vmatprep.subr.bf16.mxu0 0
        %1393 = vmatpush1.bf16.msra.mxu0 0
        %1394 = vmatprep.subr.bf16.mxu0 0
        %1395 = vmatpush1.bf16.msra.mxu0 0
        %1396 = vmatprep.subr.bf16.mxu0 0
        %1397 = vmatpush1.bf16.msra.mxu0 0
        %1398 = vmatprep.subr.bf16.mxu0 0
        %1399 = vmatpush1.bf16.msra.mxu0 0
        %1400 = vmatprep.subr.bf16.mxu0 0
        %1401 = vmatpush1.bf16.msra.mxu0 0
        %1402 = vmatprep.subr.bf16.mxu0 0
        %1403 = vmatpush1.bf16.msra.mxu0 0
        %1404 = vmatprep.subr.bf16.mxu0 0
        %1405 = vmatpush1.bf16.msra.mxu0 0
        %1406 = vmatprep.subr.bf16.mxu0 0
        %1407 = vmatpush1.bf16.msra.mxu0 0
        %1408 = vmatprep.subr.bf16.mxu0 0
        %1409 = vmatpush1.bf16.msra.mxu0 0
        %1410 = vmatprep.subr.bf16.mxu0 0
        %1411 = vmatpush1.bf16.msra.mxu0 0
        %1412 = vmatprep.mubr.bf16.mxu0 0
        %1413 = vmatmul.mubr.bf16.gmra.mrb[0].mxu0 %v1378
        %v1414 = vpop.f32.mrb[0].mxu0
        %v1415 = vadd.f32 0.0, %v1414
        %v1416 = vpop.f32.mrb[0].mxu0
        %v1417 = vpop.f32.mrb[0].mxu0
        %v1418 = vpop.f32.mrb[0].mxu0
        %1419 = vdwg.mxu0
        %v1420 = vpack.c.bf16 %v1415, %v1415
        %s1421 = scalar_lea.vmem [#allocation13], 16
        %v1422 = vld [vmem:[%s1421] sm:$0xf]
        %v1423 = vld [vmem:[%s1421 + $0x4] sm:$0xf]
        %v1424 = vld [vmem:[%s1421 + $0x8] sm:$0xf]
        %v1425 = vld [vmem:[%s1421 + $0xc] sm:$0xf]
        %s1426 = scalar_lea.vmem [#allocation14], 32
        %v1427 = vld [vmem:[%s1426] sm:$0xff]
        %v1428 = vld [vmem:[%s1426 + $0x8] sm:$0xff]
        %v1429 = vld [vmem:[%s1426 + $0x10] sm:$0xff]
        %v1430 = vld [vmem:[%s1426 + $0x18] sm:$0xff]
        %1432 = vset.pattern.permute.xlu0 0
        %1433 = vperm.xlu0 %1432, %v1427
        %v1434 = vpop.permute.xlu0 %1433
        %1437 = vset.pattern.permute.xlu0 0
        %1438 = vperm.xlu0 %1437, %v1428
        %v1439 = vpop.permute.xlu0 %1438
        %1442 = vset.pattern.permute.xlu0 0
        %1443 = vperm.xlu0 %1442, %v1429
        %v1444 = vpop.permute.xlu0 %1443
        %1447 = vset.pattern.permute.xlu0 0
        %1448 = vperm.xlu0 %1447, %v1430
        %v1449 = vpop.permute.xlu0 %1448
        %v1455 = vunpack.c.l.b16 %v1422
        %v1456 = vunpack.c.l.b16 %v1423
        %v1457 = vunpack.c.l.b16 %v1424
        %v1458 = vunpack.c.l.b16 %v1425
        %v1459 = vpack.c.b16 %v1456, %v1455
        %v1460 = vpack.c.b16 %v1458, %v1457
        %v1462 = vsel %vm555, %v1459, 0
        %v1465 = vsel %vm555, %v1460, 0
        %1467 = vmatprep.subr.bf16.mxu0 0
        %1468 = vmatpush1.bf16.msra.mxu0 %v1355
        %1469 = vmatprep.subr.bf16.mxu0 0
        %1470 = vmatpush1.bf16.msra.mxu0 %v1356
        %1471 = vmatprep.subr.bf16.mxu0 0
        %1472 = vmatpush1.bf16.msra.mxu0 0
        %1473 = vmatprep.subr.bf16.mxu0 0
        %1474 = vmatpush1.bf16.msra.mxu0 0
        %1475 = vmatprep.subr.bf16.mxu0 0
        %1476 = vmatpush1.bf16.msra.mxu0 0
        %1477 = vmatprep.subr.bf16.mxu0 0
        %1478 = vmatpush1.bf16.msra.mxu0 0
        %1479 = vmatprep.subr.bf16.mxu0 0
        %1480 = vmatpush1.bf16.msra.mxu0 0
        %1481 = vmatprep.subr.bf16.mxu0 0
        %1482 = vmatpush1.bf16.msra.mxu0 0
        %1483 = vmatprep.subr.bf16.mxu0 0
        %1484 = vmatpush1.bf16.msra.mxu0 0
        %1485 = vmatprep.subr.bf16.mxu0 0
        %1486 = vmatpush1.bf16.msra.mxu0 0
        %1487 = vmatprep.subr.bf16.mxu0 0
        %1488 = vmatpush1.bf16.msra.mxu0 0
        %1489 = vmatprep.subr.bf16.mxu0 0
        %1490 = vmatpush1.bf16.msra.mxu0 0
        %1491 = vmatprep.subr.bf16.mxu0 0
        %1492 = vmatpush1.bf16.msra.mxu0 0
        %1493 = vmatprep.subr.bf16.mxu0 0
        %1494 = vmatpush1.bf16.msra.mxu0 0
        %1495 = vmatprep.subr.bf16.mxu0 0
        %1496 = vmatpush1.bf16.msra.mxu0 0
        %1497 = vmatprep.subr.bf16.mxu0 0
        %1498 = vmatpush1.bf16.msra.mxu0 0
        %1499 = vmatprep.mubr.bf16.mxu0 0
        %1500 = vmatmul.mubr.bf16.gmra.mrb[0].mxu0 %v1462
        %v1501 = vpop.f32.mrb[0].mxu0
        %v1502 = vadd.f32 %v1434, %v1501
        %v1503 = vpop.f32.mrb[0].mxu0
        %v1504 = vpop.f32.mrb[0].mxu0
        %v1505 = vadd.f32 %v1439, %v1504
        %v1506 = vpop.f32.mrb[0].mxu0
        %1507 = vmatprep.mubr.bf16.mxu0 0
        %1508 = vmatmul.mubr.bf16.gmra.mrb[0].mxu0 %v1465
        %v1509 = vpop.f32.mrb[0].mxu0
        %v1510 = vadd.f32 %v1444, %v1509
        %v1511 = vpop.f32.mrb[0].mxu0
        %v1512 = vpop.f32.mrb[0].mxu0
        %v1513 = vadd.f32 %v1449, %v1512
        %v1514 = vpop.f32.mrb[0].mxu0
        %1515 = vdwg.mxu0
        %1516 = vxpose.xlu0.c.b16.start [1/8] %v1420, 128
        %1517 = vxpose.xlu0.c.b16.cont [2/8] 0, 128
        %1518 = vxpose.xlu0.c.b16.cont [3/8] 0, 128
        %1519 = vxpose.xlu0.c.b16.cont [4/8] 0, 128
        %1520 = vxpose.xlu0.c.b16.cont [5/8] 0, 128
        %1521 = vxpose.xlu0.c.b16.cont [6/8] 0, 128
        %1522 = vxpose.xlu0.c.b16.cont [7/8] 0, 128
        %1523 = vxpose.xlu0.c.b16.end [8/8] 0, 128
        %v1524 = vpop.trf.xlu0
        %v1525 = vpop.trf.xlu0
        %v1526 = vpop.trf.xlu0
        %v1527 = vpop.trf.xlu0
        %v1528 = vpop.trf.xlu0
        %v1529 = vpop.trf.xlu0
        %v1530 = vpop.trf.xlu0
        %v1531 = vpop.trf.xlu0
        %v1533 = vsel %vm870, %v1524, 0
        %v1536 = vsel %vm870, %v1525, 0
        %v1539 = vsel %vm870, %v1526, 0
        %v1542 = vsel %vm870, %v1527, 0
        %v1545 = vsel %vm870, %v1528, 0
        %v1548 = vsel %vm870, %v1529, 0
        %v1551 = vsel %vm870, %v1530, 0
        %v1554 = vsel %vm870, %v1531, 0
        %v1557 = vsel %vm895, %v1420, 0
        %1559 = vmatprep.subr.bf16.mxu0 0
        %1560 = vmatpush1.bf16.msra.mxu0 %v1557
        %1561 = vmatprep.subr.bf16.mxu0 0
        %1562 = vmatpush1.bf16.msra.mxu0 0
        %1563 = vmatprep.subr.bf16.mxu0 0
        %1564 = vmatpush1.bf16.msra.mxu0 0
        %1565 = vmatprep.subr.bf16.mxu0 0
        %1566 = vmatpush1.bf16.msra.mxu0 0
        %1567 = vmatprep.subr.bf16.mxu0 0
        %1568 = vmatpush1.bf16.msra.mxu0 0
        %1569 = vmatprep.subr.bf16.mxu0 0
        %1570 = vmatpush1.bf16.msra.mxu0 0
        %1571 = vmatprep.subr.bf16.mxu0 0
        %1572 = vmatpush1.bf16.msra.mxu0 0
        %1573 = vmatprep.subr.bf16.mxu0 0
        %1574 = vmatpush1.bf16.msra.mxu0 0
        %1575 = vmatprep.subr.bf16.mxu0 0
        %1576 = vmatpush1.bf16.msra.mxu0 0
        %1577 = vmatprep.subr.bf16.mxu0 0
        %1578 = vmatpush1.bf16.msra.mxu0 0
        %1579 = vmatprep.subr.bf16.mxu0 0
        %1580 = vmatpush1.bf16.msra.mxu0 0
        %1581 = vmatprep.subr.bf16.mxu0 0
        %1582 = vmatpush1.bf16.msra.mxu0 0
        %1583 = vmatprep.subr.bf16.mxu0 0
        %1584 = vmatpush1.bf16.msra.mxu0 0
        %1585 = vmatprep.subr.bf16.mxu0 0
        %1586 = vmatpush1.bf16.msra.mxu0 0
        %1587 = vmatprep.subr.bf16.mxu0 0
        %1588 = vmatpush1.bf16.msra.mxu0 0
        %1589 = vmatprep.subr.bf16.mxu0 0
        %1590 = vmatpush1.bf16.msra.mxu0 0
        %1591 = vmatprep.mubr.bf16.mxu0 0
        %1592 = vmatmul.mubr.bf16.gmra.mrb[0].mxu0 %v1533
        %v1593 = vpop.f32.mrb[0].mxu0
        %v1594 = vadd.f32 0.0, %v1593
        %v1595 = vpop.f32.mrb[0].mxu0
        %v1596 = vpop.f32.mrb[0].mxu0
        %v1597 = vadd.f32 0.0, %v1596
        %v1598 = vpop.f32.mrb[0].mxu0
        %1599 = vmatprep.mubr.bf16.mxu0 0
        %1600 = vmatmul.mubr.bf16.gmra.mrb[0].mxu0 %v1536
        %v1601 = vpop.f32.mrb[0].mxu0
        %v1602 = vadd.f32 0.0, %v1601
        %v1603 = vpop.f32.mrb[0].mxu0
        %v1604 = vpop.f32.mrb[0].mxu0
        %v1605 = vadd.f32 0.0, %v1604
        %v1606 = vpop.f32.mrb[0].mxu0
        %1607 = vmatprep.mubr.bf16.mxu0 0
        %1608 = vmatmul.mubr.bf16.gmra.mrb[0].mxu0 %v1539
        %v1609 = vpop.f32.mrb[0].mxu0
        %v1610 = vadd.f32 0.0, %v1609
        %v1611 = vpop.f32.mrb[0].mxu0
        %v1612 = vpop.f32.mrb[0].mxu0
        %v1613 = vadd.f32 0.0, %v1612
        %v1614 = vpop.f32.mrb[0].mxu0
        %1615 = vmatprep.mubr.bf16.mxu0 0
        %1616 = vmatmul.mubr.bf16.gmra.mrb[0].mxu0 %v1542
        %v1617 = vpop.f32.mrb[0].mxu0
        %v1618 = vadd.f32 0.0, %v1617
        %v1619 = vpop.f32.mrb[0].mxu0
        %v1620 = vpop.f32.mrb[0].mxu0
        %v1621 = vadd.f32 0.0, %v1620
        %v1622 = vpop.f32.mrb[0].mxu0
        %1623 = vmatprep.mubr.bf16.mxu0 0
        %1624 = vmatmul.mubr.bf16.gmra.mrb[0].mxu0 %v1545
        %v1625 = vpop.f32.mrb[0].mxu0
        %v1626 = vadd.f32 0.0, %v1625
        %v1627 = vpop.f32.mrb[0].mxu0
        %v1628 = vpop.f32.mrb[0].mxu0
        %v1629 = vadd.f32 0.0, %v1628
        %v1630 = vpop.f32.mrb[0].mxu0
        %1631 = vmatprep.mubr.bf16.mxu0 0
        %1632 = vmatmul.mubr.bf16.gmra.mrb[0].mxu0 %v1548
        %v1633 = vpop.f32.mrb[0].mxu0
        %v1634 = vadd.f32 0.0, %v1633
        %v1635 = vpop.f32.mrb[0].mxu0
        %v1636 = vpop.f32.mrb[0].mxu0
        %v1637 = vadd.f32 0.0, %v1636
        %v1638 = vpop.f32.mrb[0].mxu0
        %1639 = vmatprep.mubr.bf16.mxu0 0
        %1640 = vmatmul.mubr.bf16.gmra.mrb[0].mxu0 %v1551
        %v1641 = vpop.f32.mrb[0].mxu0
        %v1642 = vadd.f32 0.0, %v1641
        %v1643 = vpop.f32.mrb[0].mxu0
        %v1644 = vpop.f32.mrb[0].mxu0
        %v1645 = vadd.f32 0.0, %v1644
        %v1646 = vpop.f32.mrb[0].mxu0
        %1647 = vmatprep.mubr.bf16.mxu0 0
        %1648 = vmatmul.mubr.bf16.gmra.mrb[0].mxu0 %v1554
        %v1649 = vpop.f32.mrb[0].mxu0
        %v1650 = vadd.f32 0.0, %v1649
        %v1651 = vpop.f32.mrb[0].mxu0
        %v1652 = vpop.f32.mrb[0].mxu0
        %v1653 = vadd.f32 0.0, %v1652
        %v1654 = vpop.f32.mrb[0].mxu0
        %1655 = vdwg.mxu0
        %1656 = vmax.xlane.f32.xlu0 %v1594
        %v1657 = vpop.xlane.xlu0 %1656
        %1658 = vmax.xlane.f32.xlu0 %v1597
        %v1659 = vpop.xlane.xlu0 %1658
        %1660 = vmax.xlane.f32.xlu0 %v1602
        %v1661 = vpop.xlane.xlu0 %1660
        %1662 = vmax.xlane.f32.xlu0 %v1605
        %v1663 = vpop.xlane.xlu0 %1662
        %1664 = vmax.xlane.f32.xlu0 %v1610
        %v1665 = vpop.xlane.xlu0 %1664
        %1666 = vmax.xlane.f32.xlu0 %v1613
        %v1667 = vpop.xlane.xlu0 %1666
        %1668 = vmax.xlane.f32.xlu0 %v1618
        %v1669 = vpop.xlane.xlu0 %1668
        %1670 = vmax.xlane.f32.xlu0 %v1621
        %v1671 = vpop.xlane.xlu0 %1670
        %1672 = vmax.xlane.f32.xlu0 %v1626
        %v1673 = vpop.xlane.xlu0 %1672
        %1674 = vmax.xlane.f32.xlu0 %v1629
        %v1675 = vpop.xlane.xlu0 %1674
        %1676 = vmax.xlane.f32.xlu0 %v1634
        %v1677 = vpop.xlane.xlu0 %1676
        %1678 = vmax.xlane.f32.xlu0 %v1637
        %v1679 = vpop.xlane.xlu0 %1678
        %1680 = vmax.xlane.f32.xlu0 %v1642
        %v1681 = vpop.xlane.xlu0 %1680
        %1682 = vmax.xlane.f32.xlu0 %v1645
        %v1683 = vpop.xlane.xlu0 %1682
        %1684 = vmax.xlane.f32.xlu0 %v1650
        %v1685 = vpop.xlane.xlu0 %1684
        %1686 = vmax.xlane.f32.xlu0 %v1653
        %v1687 = vpop.xlane.xlu0 %1686
        %v1688 = vsub.f32 %v1594, %v1657
        %v1689 = vsub.f32 %v1597, %v1659
        %v1690 = vsub.f32 %v1602, %v1661
        %v1691 = vsub.f32 %v1605, %v1663
        %v1692 = vsub.f32 %v1610, %v1665
        %v1693 = vsub.f32 %v1613, %v1667
        %v1694 = vsub.f32 %v1618, %v1669
        %v1695 = vsub.f32 %v1621, %v1671
        %v1696 = vsub.f32 %v1626, %v1673
        %v1697 = vsub.f32 %v1629, %v1675
        %v1698 = vsub.f32 %v1634, %v1677
        %v1699 = vsub.f32 %v1637, %v1679
        %v1700 = vsub.f32 %v1642, %v1681
        %v1701 = vsub.f32 %v1645, %v1683
        %v1702 = vsub.f32 %v1650, %v1685
        %v1703 = vsub.f32 %v1653, %v1687
        %v1704 = vmul.f32 %v1688, 1.442695
        %v1705 = vpow.pop %v1704
        %v1706 = vmul.f32 %v1689, 1.442695
        %v1707 = vpow.pop %v1706
        %v1708 = vmul.f32 %v1690, 1.442695
        %v1709 = vpow.pop %v1708
        %v1710 = vmul.f32 %v1691, 1.442695
        %v1711 = vpow.pop %v1710
        %v1712 = vmul.f32 %v1692, 1.442695
        %v1713 = vpow.pop %v1712
        %v1714 = vmul.f32 %v1693, 1.442695
        %v1715 = vpow.pop %v1714
        %v1716 = vmul.f32 %v1694, 1.442695
        %v1717 = vpow.pop %v1716
        %v1718 = vmul.f32 %v1695, 1.442695
        %v1719 = vpow.pop %v1718
        %v1720 = vmul.f32 %v1696, 1.442695
        %v1721 = vpow.pop %v1720
        %v1722 = vmul.f32 %v1697, 1.442695
        %v1723 = vpow.pop %v1722
        %v1724 = vmul.f32 %v1698, 1.442695
        %v1725 = vpow.pop %v1724
        %v1726 = vmul.f32 %v1699, 1.442695
        %v1727 = vpow.pop %v1726
        %v1728 = vmul.f32 %v1700, 1.442695
        %v1729 = vpow.pop %v1728
        %v1730 = vmul.f32 %v1701, 1.442695
        %v1731 = vpow.pop %v1730
        %v1732 = vmul.f32 %v1702, 1.442695
        %v1733 = vpow.pop %v1732
        %v1734 = vmul.f32 %v1703, 1.442695
        %v1735 = vpow.pop %v1734
        %1736 = vadd.xlane.f32.xlu0 %v1705
        %v1737 = vpop.xlane.xlu0 %1736
        %1738 = vadd.xlane.f32.xlu0 %v1707
        %v1739 = vpop.xlane.xlu0 %1738
        %1740 = vadd.xlane.f32.xlu0 %v1709
        %v1741 = vpop.xlane.xlu0 %1740
        %1742 = vadd.xlane.f32.xlu0 %v1711
        %v1743 = vpop.xlane.xlu0 %1742
        %1744 = vadd.xlane.f32.xlu0 %v1713
        %v1745 = vpop.xlane.xlu0 %1744
        %1746 = vadd.xlane.f32.xlu0 %v1715
        %v1747 = vpop.xlane.xlu0 %1746
        %1748 = vadd.xlane.f32.xlu0 %v1717
        %v1749 = vpop.xlane.xlu0 %1748
        %1750 = vadd.xlane.f32.xlu0 %v1719
        %v1751 = vpop.xlane.xlu0 %1750
        %1752 = vadd.xlane.f32.xlu0 %v1721
        %v1753 = vpop.xlane.xlu0 %1752
        %1754 = vadd.xlane.f32.xlu0 %v1723
        %v1755 = vpop.xlane.xlu0 %1754
        %1756 = vadd.xlane.f32.xlu0 %v1725
        %v1757 = vpop.xlane.xlu0 %1756
        %1758 = vadd.xlane.f32.xlu0 %v1727
        %v1759 = vpop.xlane.xlu0 %1758
        %1760 = vadd.xlane.f32.xlu0 %v1729
        %v1761 = vpop.xlane.xlu0 %1760
        %1762 = vadd.xlane.f32.xlu0 %v1731
        %v1763 = vpop.xlane.xlu0 %1762
        %1764 = vadd.xlane.f32.xlu0 %v1733
        %v1765 = vpop.xlane.xlu0 %1764
        %1766 = vadd.xlane.f32.xlu0 %v1735
        %v1767 = vpop.xlane.xlu0 %1766
        %v1768 = vrcp.pop %v1737
        %v1769 = vrcp.pop %v1739
        %v1770 = vrcp.pop %v1741
        %v1771 = vrcp.pop %v1743
        %v1772 = vrcp.pop %v1745
        %v1773 = vrcp.pop %v1747
        %v1774 = vrcp.pop %v1749
        %v1775 = vrcp.pop %v1751
        %v1776 = vrcp.pop %v1753
        %v1777 = vrcp.pop %v1755
        %v1778 = vrcp.pop %v1757
        %v1779 = vrcp.pop %v1759
        %v1780 = vrcp.pop %v1761
        %v1781 = vrcp.pop %v1763
        %v1782 = vrcp.pop %v1765
        %v1783 = vrcp.pop %v1767
        %v1784 = vmul.f32 %v1705, %v1768
        %v1785 = vmul.f32 %v1707, %v1769
        %v1786 = vmul.f32 %v1709, %v1770
        %v1787 = vmul.f32 %v1711, %v1771
        %v1788 = vmul.f32 %v1713, %v1772
        %v1789 = vmul.f32 %v1715, %v1773
        %v1790 = vmul.f32 %v1717, %v1774
        %v1791 = vmul.f32 %v1719, %v1775
        %v1792 = vmul.f32 %v1721, %v1776
        %v1793 = vmul.f32 %v1723, %v1777
        %v1794 = vmul.f32 %v1725, %v1778
        %v1795 = vmul.f32 %v1727, %v1779
        %v1796 = vmul.f32 %v1729, %v1780
        %v1797 = vmul.f32 %v1731, %v1781
        %v1798 = vmul.f32 %v1733, %v1782
        %v1799 = vmul.f32 %v1735, %v1783
        %v1800 = vpack.c.bf16 %v1785, %v1784
        %v1801 = vpack.c.bf16 %v1787, %v1786
        %v1802 = vpack.c.bf16 %v1789, %v1788
        %v1803 = vpack.c.bf16 %v1791, %v1790
        %v1804 = vpack.c.bf16 %v1793, %v1792
        %v1805 = vpack.c.bf16 %v1795, %v1794
        %v1806 = vpack.c.bf16 %v1797, %v1796
        %v1807 = vpack.c.bf16 %v1799, %v1798
        %v1808 = vpack.c.bf16 %v1505, %v1502
        %v1809 = vpack.c.bf16 %v1513, %v1510
        %1810 = vmatprep.subr.bf16.mxu0 0
        %1811 = vmatpush1.bf16.msra.mxu0 %v1800
        %1812 = vmatprep.subr.bf16.mxu0 0
        %1813 = vmatpush1.bf16.msra.mxu0 %v1801
        %1814 = vmatprep.subr.bf16.mxu0 0
        %1815 = vmatpush1.bf16.msra.mxu0 %v1802
        %1816 = vmatprep.subr.bf16.mxu0 0
        %1817 = vmatpush1.bf16.msra.mxu0 %v1803
        %1818 = vmatprep.subr.bf16.mxu0 0
        %1819 = vmatpush1.bf16.msra.mxu0 %v1804
        %1820 = vmatprep.subr.bf16.mxu0 0
        %1821 = vmatpush1.bf16.msra.mxu0 %v1805
        %1822 = vmatprep.subr.bf16.mxu0 0
        %1823 = vmatpush1.bf16.msra.mxu0 %v1806
        %1824 = vmatprep.subr.bf16.mxu0 0
        %1825 = vmatpush1.bf16.msra.mxu0 %v1807
        %1826 = vmatprep.subr.bf16.mxu0 0
        %1827 = vmatpush1.bf16.msra.mxu0 0
        %1828 = vmatprep.subr.bf16.mxu0 0
        %1829 = vmatpush1.bf16.msra.mxu0 0
        %1830 = vmatprep.subr.bf16.mxu0 0
        %1831 = vmatpush1.bf16.msra.mxu0 0
        %1832 = vmatprep.subr.bf16.mxu0 0
        %1833 = vmatpush1.bf16.msra.mxu0 0
        %1834 = vmatprep.subr.bf16.mxu0 0
        %1835 = vmatpush1.bf16.msra.mxu0 0
        %1836 = vmatprep.subr.bf16.mxu0 0
        %1837 = vmatpush1.bf16.msra.mxu0 0
        %1838 = vmatprep.subr.bf16.mxu0 0
        %1839 = vmatpush1.bf16.msra.mxu0 0
        %1840 = vmatprep.subr.bf16.mxu0 0
        %1841 = vmatpush1.bf16.msra.mxu0 0
        %1842 = vmatprep.mubr.bf16.mxu0 0
        %1843 = vmatmul.mubr.bf16.gmra.mrb[0].mxu0 %v1808
        %v1844 = vpop.f32.mrb[0].mxu0
        %v1845 = vadd.f32 0.0, %v1844
        %v1846 = vpop.f32.mrb[0].mxu0
        %v1847 = vpop.f32.mrb[0].mxu0
        %v1848 = vadd.f32 0.0, %v1847
        %v1849 = vpop.f32.mrb[0].mxu0
        %1850 = vmatprep.mubr.bf16.mxu0 0
        %1851 = vmatmul.mubr.bf16.gmra.mrb[0].mxu0 %v1809
        %v1852 = vpop.f32.mrb[0].mxu0
        %v1853 = vadd.f32 0.0, %v1852
        %v1854 = vpop.f32.mrb[0].mxu0
        %v1855 = vpop.f32.mrb[0].mxu0
        %v1856 = vadd.f32 0.0, %v1855
        %v1857 = vpop.f32.mrb[0].mxu0
        %1858 = vdwg.mxu0
        %1859 = vmatprep.subr.bf16.mxu0 0
        %1860 = vmatpush1.bf16.msra.mxu0 %v1800
        %1861 = vmatprep.subr.bf16.mxu0 0
        %1862 = vmatpush1.bf16.msra.mxu0 %v1801
        %1863 = vmatprep.subr.bf16.mxu0 0
        %1864 = vmatpush1.bf16.msra.mxu0 %v1802
        %1865 = vmatprep.subr.bf16.mxu0 0
        %1866 = vmatpush1.bf16.msra.mxu0 %v1803
        %1867 = vmatprep.subr.bf16.mxu0 0
        %1868 = vmatpush1.bf16.msra.mxu0 %v1804
        %1869 = vmatprep.subr.bf16.mxu0 0
        %1870 = vmatpush1.bf16.msra.mxu0 %v1805
        %1871 = vmatprep.subr.bf16.mxu0 0
        %1872 = vmatpush1.bf16.msra.mxu0 %v1806
        %1873 = vmatprep.subr.bf16.mxu0 0
        %1874 = vmatpush1.bf16.msra.mxu0 %v1807
        %1875 = vmatprep.subr.bf16.mxu0 0
        %1876 = vmatpush1.bf16.msra.mxu0 0
        %1877 = vmatprep.subr.bf16.mxu0 0
        %1878 = vmatpush1.bf16.msra.mxu0 0
        %1879 = vmatprep.subr.bf16.mxu0 0
        %1880 = vmatpush1.bf16.msra.mxu0 0
        %1881 = vmatprep.subr.bf16.mxu0 0
        %1882 = vmatpush1.bf16.msra.mxu0 0
        %1883 = vmatprep.subr.bf16.mxu0 0
        %1884 = vmatpush1.bf16.msra.mxu0 0
        %1885 = vmatprep.subr.bf16.mxu0 0
        %1886 = vmatpush1.bf16.msra.mxu0 0
        %1887 = vmatprep.subr.bf16.mxu0 0
        %1888 = vmatpush1.bf16.msra.mxu0 0
        %1889 = vmatprep.subr.bf16.mxu0 0
        %1890 = vmatpush1.bf16.msra.mxu0 0
        %1891 = vmatprep.mubr.bf16.mxu0 0
        %1892 = vmatmul.mubr.bf16.gmra.mrb[0].mxu0 1065369472
        %v1893 = vpop.f32.mrb[0].mxu0
        %v1894 = vadd.f32 1e-09, %v1893
        %v1895 = vpop.f32.mrb[0].mxu0
        %v1896 = vpop.f32.mrb[0].mxu0
        %v1897 = vpop.f32.mrb[0].mxu0
        %1898 = vdwg.mxu0
        %v1899 = vrcp.pop %v1894
        %v1900 = vlaneseq
        %v1901 = vshrl.u32 %v1900, 7
        %v1902 = vsub.s32 0, %v1901
        %v1903 = vrot.slane %v1899, %v1902
        %v1904 = vmul.f32 %v1845, %v1903
        %v1905 = vmul.f32 %v1848, %v1903
        %v1906 = vmul.f32 %v1853, %v1903
        %v1907 = vmul.f32 %v1856, %v1903
        %s1908 = scalar_lea.vmem [#allocation16], 16
        %v1909 = vld [vmem:[%s1908] sm:$0xf]
        %v1910 = vld [vmem:[%s1908 + $0x4] sm:$0xf]
        %v1911 = vld [vmem:[%s1908 + $0x8] sm:$0xf]
        %v1912 = vld [vmem:[%s1908 + $0xc] sm:$0xf]
        %v1913 = vsub.f32 %v1351, %v1904
        %v1914 = vsub.f32 %v1352, %v1905
        %v1915 = vsub.f32 %v1353, %v1906
        %v1916 = vsub.f32 %v1354, %v1907
        %v1917 = vpack.c.bf16 %v1914, %v1913
        %v1918 = vpack.c.bf16 %v1916, %v1915
        %s1919 = scalar_lea.vmem [#allocation17], 32
        %v1920 = vld [vmem:[%s1919] sm:$0xff]
        %v1921 = vld [vmem:[%s1919 + $0x8] sm:$0xff]
        %v1922 = vld [vmem:[%s1919 + $0x10] sm:$0xff]
        %v1923 = vld [vmem:[%s1919 + $0x18] sm:$0xff]
        %1925 = vset.pattern.permute.xlu0 0
        %1926 = vperm.xlu0 %1925, %v1920
        %v1927 = vpop.permute.xlu0 %1926
        %1930 = vset.pattern.permute.xlu0 0
        %1931 = vperm.xlu0 %1930, %v1921
        %v1932 = vpop.permute.xlu0 %1931
        %1935 = vset.pattern.permute.xlu0 0
        %1936 = vperm.xlu0 %1935, %v1922
        %v1937 = vpop.permute.xlu0 %1936
        %1940 = vset.pattern.permute.xlu0 0
        %1941 = vperm.xlu0 %1940, %v1923
        %v1942 = vpop.permute.xlu0 %1941
        %v1948 = vunpack.c.l.b16 %v1909
        %v1949 = vunpack.c.l.b16 %v1910
        %v1950 = vunpack.c.l.b16 %v1911
        %v1951 = vunpack.c.l.b16 %v1912
        %v1952 = vpack.c.b16 %v1949, %v1948
        %v1953 = vpack.c.b16 %v1951, %v1950
        %v1955 = vsel %vm555, %v1952, 0
        %v1958 = vsel %vm555, %v1953, 0
        %1960 = vmatprep.subr.bf16.mxu0 0
        %1961 = vmatpush1.bf16.msra.mxu0 %v1917
        %1962 = vmatprep.subr.bf16.mxu0 0
        %1963 = vmatpush1.bf16.msra.mxu0 %v1918
        %1964 = vmatprep.subr.bf16.mxu0 0
        %1965 = vmatpush1.bf16.msra.mxu0 0
        %1966 = vmatprep.subr.bf16.mxu0 0
        %1967 = vmatpush1.bf16.msra.mxu0 0
        %1968 = vmatprep.subr.bf16.mxu0 0
        %1969 = vmatpush1.bf16.msra.mxu0 0
        %1970 = vmatprep.subr.bf16.mxu0 0
        %1971 = vmatpush1.bf16.msra.mxu0 0
        %1972 = vmatprep.subr.bf16.mxu0 0
        %1973 = vmatpush1.bf16.msra.mxu0 0
        %1974 = vmatprep.subr.bf16.mxu0 0
        %1975 = vmatpush1.bf16.msra.mxu0 0
        %1976 = vmatprep.subr.bf16.mxu0 0
        %1977 = vmatpush1.bf16.msra.mxu0 0
        %1978 = vmatprep.subr.bf16.mxu0 0
        %1979 = vmatpush1.bf16.msra.mxu0 0
        %1980 = vmatprep.subr.bf16.mxu0 0
        %1981 = vmatpush1.bf16.msra.mxu0 0
        %1982 = vmatprep.subr.bf16.mxu0 0
        %1983 = vmatpush1.bf16.msra.mxu0 0
        %1984 = vmatprep.subr.bf16.mxu0 0
        %1985 = vmatpush1.bf16.msra.mxu0 0
        %1986 = vmatprep.subr.bf16.mxu0 0
        %1987 = vmatpush1.bf16.msra.mxu0 0
        %1988 = vmatprep.subr.bf16.mxu0 0
        %1989 = vmatpush1.bf16.msra.mxu0 0
        %1990 = vmatprep.subr.bf16.mxu0 0
        %1991 = vmatpush1.bf16.msra.mxu0 0
        %1992 = vmatprep.mubr.bf16.mxu0 0
        %1993 = vmatmul.mubr.bf16.gmra.mrb[0].mxu0 %v1955
        %v1994 = vpop.f32.mrb[0].mxu0
        %v1995 = vadd.f32 %v1927, %v1994
        %v1996 = vpop.f32.mrb[0].mxu0
        %v1997 = vpop.f32.mrb[0].mxu0
        %v1998 = vadd.f32 %v1932, %v1997
        %v1999 = vpop.f32.mrb[0].mxu0
        %2000 = vmatprep.mubr.bf16.mxu0 0
        %2001 = vmatmul.mubr.bf16.gmra.mrb[0].mxu0 %v1958
        %v2002 = vpop.f32.mrb[0].mxu0
        %v2003 = vadd.f32 %v1937, %v2002
        %v2004 = vpop.f32.mrb[0].mxu0
        %v2005 = vpop.f32.mrb[0].mxu0
        %v2006 = vadd.f32 %v1942, %v2005
        %v2007 = vpop.f32.mrb[0].mxu0
        %2008 = vdwg.mxu0
        %v2009 = vmax.f32 %v1995, 0.0
        %v2010 = vmax.f32 %v1998, 0.0
        %v2011 = vmax.f32 %v2003, 0.0
        %v2012 = vmax.f32 %v2006, 0.0
        %v2013 = vadd.f32 %v1351, %v2009
        %v2014 = vadd.f32 %v1352, %v2010
        %v2015 = vadd.f32 %v1353, %v2011
        %v2016 = vadd.f32 %v1354, %v2012
        %v2017 = vpack.c.bf16 %v2014, %v2013
        %v2018 = vpack.c.bf16 %v2016, %v2015
        %v2021 = vunpack.c.l.b16 %v2017
        %v2022 = vunpack.c.h.b16 %v2017
        %v2023 = vunpack.c.l.b16 %v2018
        %v2024 = vunpack.c.h.b16 %v2018
        %v2025 = vpack.c.b16 %v2021, %v2021
        %v2026 = vpack.c.b16 %v2022, %v2022
        %v2027 = vpack.c.b16 %v2023, %v2023
        %v2028 = vpack.c.b16 %v2024, %v2024
        %2033 = vst [vmem:[%s508 + $0x10] sm:$0xf] %v2025
        %2034 = vst [vmem:[%s508 + $0x14] sm:$0xf] %v2026
        %2035 = vst [vmem:[%s508 + $0x18] sm:$0xf] %v2027
        %2036 = vst [vmem:[%s508 + $0x1c] sm:$0xf] %v2028
        %s2037 = scalar_lea.vmem [#allocation11], 8
        %v2038 = vld [vmem:[%s2037] sm:$0xf]
        %v2040 = vsel %vm555, %v2038, 0
        %2042 = vmatprep.subr.bf16.mxu0 0
        %2043 = vmatpush1.bf16.msra.mxu0 %v2017
        %2044 = vmatprep.subr.bf16.mxu0 0
        %2045 = vmatpush1.bf16.msra.mxu0 %v2018
        %2046 = vmatprep.subr.bf16.mxu0 0
        %2047 = vmatpush1.bf16.msra.mxu0 0
        %2048 = vmatprep.subr.bf16.mxu0 0
        %2049 = vmatpush1.bf16.msra.mxu0 0
        %2050 = vmatprep.subr.bf16.mxu0 0
        %2051 = vmatpush1.bf16.msra.mxu0 0
        %2052 = vmatprep.subr.bf16.mxu0 0
        %2053 = vmatpush1.bf16.msra.mxu0 0
        %2054 = vmatprep.subr.bf16.mxu0 0
        %2055 = vmatpush1.bf16.msra.mxu0 0
        %2056 = vmatprep.subr.bf16.mxu0 0
        %2057 = vmatpush1.bf16.msra.mxu0 0
        %2058 = vmatprep.subr.bf16.mxu0 0
        %2059 = vmatpush1.bf16.msra.mxu0 0
        %2060 = vmatprep.subr.bf16.mxu0 0
        %2061 = vmatpush1.bf16.msra.mxu0 0
        %2062 = vmatprep.subr.bf16.mxu0 0
        %2063 = vmatpush1.bf16.msra.mxu0 0
        %2064 = vmatprep.subr.bf16.mxu0 0
        %2065 = vmatpush1.bf16.msra.mxu0 0
        %2066 = vmatprep.subr.bf16.mxu0 0
        %2067 = vmatpush1.bf16.msra.mxu0 0
        %2068 = vmatprep.subr.bf16.mxu0 0
        %2069 = vmatpush1.bf16.msra.mxu0 0
        %2070 = vmatprep.subr.bf16.mxu0 0
        %2071 = vmatpush1.bf16.msra.mxu0 0
        %2072 = vmatprep.subr.bf16.mxu0 0
        %2073 = vmatpush1.bf16.msra.mxu0 0
        %2074 = vmatprep.mubr.bf16.mxu0 0
        %2075 = vmatmul.mubr.bf16.gmra.mrb[0].mxu0 %v2040
        %v2076 = vpop.f32.mrb[0].mxu0
        %v2077 = vadd.f32 0.0, %v2076
        %v2078 = vpop.f32.mrb[0].mxu0
        %v2079 = vpop.f32.mrb[0].mxu0
        %v2080 = vpop.f32.mrb[0].mxu0
        %2081 = vdwg.mxu0
        %v2082 = vpack.c.bf16 %v2077, %v2077
        %s2083 = scalar_lea.vmem [#allocation13], 32
        %v2084 = vld [vmem:[%s2083] sm:$0xf]
        %v2085 = vld [vmem:[%s2083 + $0x4] sm:$0xf]
        %v2086 = vld [vmem:[%s2083 + $0x8] sm:$0xf]
        %v2087 = vld [vmem:[%s2083 + $0xc] sm:$0xf]
        %s2088 = scalar_lea.vmem [#allocation14], 64
        %v2089 = vld [vmem:[%s2088] sm:$0xff]
        %v2090 = vld [vmem:[%s2088 + $0x8] sm:$0xff]
        %v2091 = vld [vmem:[%s2088 + $0x10] sm:$0xff]
        %v2092 = vld [vmem:[%s2088 + $0x18] sm:$0xff]
        %2094 = vset.pattern.permute.xlu0 0
        %2095 = vperm.xlu0 %2094, %v2089
        %v2096 = vpop.permute.xlu0 %2095
        %2099 = vset.pattern.permute.xlu0 0
        %2100 = vperm.xlu0 %2099, %v2090
        %v2101 = vpop.permute.xlu0 %2100
        %2104 = vset.pattern.permute.xlu0 0
        %2105 = vperm.xlu0 %2104, %v2091
        %v2106 = vpop.permute.xlu0 %2105
        %2109 = vset.pattern.permute.xlu0 0
        %2110 = vperm.xlu0 %2109, %v2092
        %v2111 = vpop.permute.xlu0 %2110
        %v2117 = vunpack.c.l.b16 %v2084
        %v2118 = vunpack.c.l.b16 %v2085
        %v2119 = vunpack.c.l.b16 %v2086
        %v2120 = vunpack.c.l.b16 %v2087
        %v2121 = vpack.c.b16 %v2118, %v2117
        %v2122 = vpack.c.b16 %v2120, %v2119
        %v2124 = vsel %vm555, %v2121, 0
        %v2127 = vsel %vm555, %v2122, 0
        %2129 = vmatprep.subr.bf16.mxu0 0
        %2130 = vmatpush1.bf16.msra.mxu0 %v2017
        %2131 = vmatprep.subr.bf16.mxu0 0
        %2132 = vmatpush1.bf16.msra.mxu0 %v2018
        %2133 = vmatprep.subr.bf16.mxu0 0
        %2134 = vmatpush1.bf16.msra.mxu0 0
        %2135 = vmatprep.subr.bf16.mxu0 0
        %2136 = vmatpush1.bf16.msra.mxu0 0
        %2137 = vmatprep.subr.bf16.mxu0 0
        %2138 = vmatpush1.bf16.msra.mxu0 0
        %2139 = vmatprep.subr.bf16.mxu0 0
        %2140 = vmatpush1.bf16.msra.mxu0 0
        %2141 = vmatprep.subr.bf16.mxu0 0
        %2142 = vmatpush1.bf16.msra.mxu0 0
        %2143 = vmatprep.subr.bf16.mxu0 0
        %2144 = vmatpush1.bf16.msra.mxu0 0
        %2145 = vmatprep.subr.bf16.mxu0 0
        %2146 = vmatpush1.bf16.msra.mxu0 0
        %2147 = vmatprep.subr.bf16.mxu0 0
        %2148 = vmatpush1.bf16.msra.mxu0 0
        %2149 = vmatprep.subr.bf16.mxu0 0
        %2150 = vmatpush1.bf16.msra.mxu0 0
        %2151 = vmatprep.subr.bf16.mxu0 0
        %2152 = vmatpush1.bf16.msra.mxu0 0
        %2153 = vmatprep.subr.bf16.mxu0 0
        %2154 = vmatpush1.bf16.msra.mxu0 0
        %2155 = vmatprep.subr.bf16.mxu0 0
        %2156 = vmatpush1.bf16.msra.mxu0 0
        %2157 = vmatprep.subr.bf16.mxu0 0
        %2158 = vmatpush1.bf16.msra.mxu0 0
        %2159 = vmatprep.subr.bf16.mxu0 0
        %2160 = vmatpush1.bf16.msra.mxu0 0
        %2161 = vmatprep.mubr.bf16.mxu0 0
        %2162 = vmatmul.mubr.bf16.gmra.mrb[0].mxu0 %v2124
        %v2163 = vpop.f32.mrb[0].mxu0
        %v2164 = vadd.f32 %v2096, %v2163
        %v2165 = vpop.f32.mrb[0].mxu0
        %v2166 = vpop.f32.mrb[0].mxu0
        %v2167 = vadd.f32 %v2101, %v2166
        %v2168 = vpop.f32.mrb[0].mxu0
        %2169 = vmatprep.mubr.bf16.mxu0 0
        %2170 = vmatmul.mubr.bf16.gmra.mrb[0].mxu0 %v2127
        %v2171 = vpop.f32.mrb[0].mxu0
        %v2172 = vadd.f32 %v2106, %v2171
        %v2173 = vpop.f32.mrb[0].mxu0
        %v2174 = vpop.f32.mrb[0].mxu0
        %v2175 = vadd.f32 %v2111, %v2174
        %v2176 = vpop.f32.mrb[0].mxu0
        %2177 = vdwg.mxu0
        %2178 = vxpose.xlu0.c.b16.start [1/8] %v2082, 128
        %2179 = vxpose.xlu0.c.b16.cont [2/8] 0, 128
        %2180 = vxpose.xlu0.c.b16.cont [3/8] 0, 128
        %2181 = vxpose.xlu0.c.b16.cont [4/8] 0, 128
        %2182 = vxpose.xlu0.c.b16.cont [5/8] 0, 128
        %2183 = vxpose.xlu0.c.b16.cont [6/8] 0, 128
        %2184 = vxpose.xlu0.c.b16.cont [7/8] 0, 128
        %2185 = vxpose.xlu0.c.b16.end [8/8] 0, 128
        %v2186 = vpop.trf.xlu0
        %v2187 = vpop.trf.xlu0
        %v2188 = vpop.trf.xlu0
        %v2189 = vpop.trf.xlu0
        %v2190 = vpop.trf.xlu0
        %v2191 = vpop.trf.xlu0
        %v2192 = vpop.trf.xlu0
        %v2193 = vpop.trf.xlu0
        %v2195 = vsel %vm870, %v2186, 0
        %v2198 = vsel %vm870, %v2187, 0
        %v2201 = vsel %vm870, %v2188, 0
        %v2204 = vsel %vm870, %v2189, 0
        %v2207 = vsel %vm870, %v2190, 0
        %v2210 = vsel %vm870, %v2191, 0
        %v2213 = vsel %vm870, %v2192, 0
        %v2216 = vsel %vm870, %v2193, 0
        %v2219 = vsel %vm895, %v2082, 0
        %2221 = vmatprep.subr.bf16.mxu0 0
        %2222 = vmatpush1.bf16.msra.mxu0 %v2219
        %2223 = vmatprep.subr.bf16.mxu0 0
        %2224 = vmatpush1.bf16.msra.mxu0 0
        %2225 = vmatprep.subr.bf16.mxu0 0
        %2226 = vmatpush1.bf16.msra.mxu0 0
        %2227 = vmatprep.subr.bf16.mxu0 0
        %2228 = vmatpush1.bf16.msra.mxu0 0
        %2229 = vmatprep.subr.bf16.mxu0 0
        %2230 = vmatpush1.bf16.msra.mxu0 0
        %2231 = vmatprep.subr.bf16.mxu0 0
        %2232 = vmatpush1.bf16.msra.mxu0 0
        %2233 = vmatprep.subr.bf16.mxu0 0
        %2234 = vmatpush1.bf16.msra.mxu0 0
        %2235 = vmatprep.subr.bf16.mxu0 0
        %2236 = vmatpush1.bf16.msra.mxu0 0
        %2237 = vmatprep.subr.bf16.mxu0 0
        %2238 = vmatpush1.bf16.msra.mxu0 0
        %2239 = vmatprep.subr.bf16.mxu0 0
        %2240 = vmatpush1.bf16.msra.mxu0 0
        %2241 = vmatprep.subr.bf16.mxu0 0
        %2242 = vmatpush1.bf16.msra.mxu0 0
        %2243 = vmatprep.subr.bf16.mxu0 0
        %2244 = vmatpush1.bf16.msra.mxu0 0
        %2245 = vmatprep.subr.bf16.mxu0 0
        %2246 = vmatpush1.bf16.msra.mxu0 0
        %2247 = vmatprep.subr.bf16.mxu0 0
        %2248 = vmatpush1.bf16.msra.mxu0 0
        %2249 = vmatprep.subr.bf16.mxu0 0
        %2250 = vmatpush1.bf16.msra.mxu0 0
        %2251 = vmatprep.subr.bf16.mxu0 0
        %2252 = vmatpush1.bf16.msra.mxu0 0
        %2253 = vmatprep.mubr.bf16.mxu0 0
        %2254 = vmatmul.mubr.bf16.gmra.mrb[0].mxu0 %v2195
        %v2255 = vpop.f32.mrb[0].mxu0
        %v2256 = vadd.f32 0.0, %v2255
        %v2257 = vpop.f32.mrb[0].mxu0
        %v2258 = vpop.f32.mrb[0].mxu0
        %v2259 = vadd.f32 0.0, %v2258
        %v2260 = vpop.f32.mrb[0].mxu0
        %2261 = vmatprep.mubr.bf16.mxu0 0
        %2262 = vmatmul.mubr.bf16.gmra.mrb[0].mxu0 %v2198
        %v2263 = vpop.f32.mrb[0].mxu0
        %v2264 = vadd.f32 0.0, %v2263
        %v2265 = vpop.f32.mrb[0].mxu0
        %v2266 = vpop.f32.mrb[0].mxu0
        %v2267 = vadd.f32 0.0, %v2266
        %v2268 = vpop.f32.mrb[0].mxu0
        %2269 = vmatprep.mubr.bf16.mxu0 0
        %2270 = vmatmul.mubr.bf16.gmra.mrb[0].mxu0 %v2201
        %v2271 = vpop.f32.mrb[0].mxu0
        %v2272 = vadd.f32 0.0, %v2271
        %v2273 = vpop.f32.mrb[0].mxu0
        %v2274 = vpop.f32.mrb[0].mxu0
        %v2275 = vadd.f32 0.0, %v2274
        %v2276 = vpop.f32.mrb[0].mxu0
        %2277 = vmatprep.mubr.bf16.mxu0 0
        %2278 = vmatmul.mubr.bf16.gmra.mrb[0].mxu0 %v2204
        %v2279 = vpop.f32.mrb[0].mxu0
        %v2280 = vadd.f32 0.0, %v2279
        %v2281 = vpop.f32.mrb[0].mxu0
        %v2282 = vpop.f32.mrb[0].mxu0
        %v2283 = vadd.f32 0.0, %v2282
        %v2284 = vpop.f32.mrb[0].mxu0
        %2285 = vmatprep.mubr.bf16.mxu0 0
        %2286 = vmatmul.mubr.bf16.gmra.mrb[0].mxu0 %v2207
        %v2287 = vpop.f32.mrb[0].mxu0
        %v2288 = vadd.f32 0.0, %v2287
        %v2289 = vpop.f32.mrb[0].mxu0
        %v2290 = vpop.f32.mrb[0].mxu0
        %v2291 = vadd.f32 0.0, %v2290
        %v2292 = vpop.f32.mrb[0].mxu0
        %2293 = vmatprep.mubr.bf16.mxu0 0
        %2294 = vmatmul.mubr.bf16.gmra.mrb[0].mxu0 %v2210
        %v2295 = vpop.f32.mrb[0].mxu0
        %v2296 = vadd.f32 0.0, %v2295
        %v2297 = vpop.f32.mrb[0].mxu0
        %v2298 = vpop.f32.mrb[0].mxu0
        %v2299 = vadd.f32 0.0, %v2298
        %v2300 = vpop.f32.mrb[0].mxu0
        %2301 = vmatprep.mubr.bf16.mxu0 0
        %2302 = vmatmul.mubr.bf16.gmra.mrb[0].mxu0 %v2213
        %v2303 = vpop.f32.mrb[0].mxu0
        %v2304 = vadd.f32 0.0, %v2303
        %v2305 = vpop.f32.mrb[0].mxu0
        %v2306 = vpop.f32.mrb[0].mxu0
        %v2307 = vadd.f32 0.0, %v2306
        %v2308 = vpop.f32.mrb[0].mxu0
        %2309 = vmatprep.mubr.bf16.mxu0 0
        %2310 = vmatmul.mubr.bf16.gmra.mrb[0].mxu0 %v2216
        %v2311 = vpop.f32.mrb[0].mxu0
        %v2312 = vadd.f32 0.0, %v2311
        %v2313 = vpop.f32.mrb[0].mxu0
        %v2314 = vpop.f32.mrb[0].mxu0
        %v2315 = vadd.f32 0.0, %v2314
        %v2316 = vpop.f32.mrb[0].mxu0
        %2317 = vdwg.mxu0
        %2318 = vmax.xlane.f32.xlu0 %v2256
        %v2319 = vpop.xlane.xlu0 %2318
        %2320 = vmax.xlane.f32.xlu0 %v2259
        %v2321 = vpop.xlane.xlu0 %2320
        %2322 = vmax.xlane.f32.xlu0 %v2264
        %v2323 = vpop.xlane.xlu0 %2322
        %2324 = vmax.xlane.f32.xlu0 %v2267
        %v2325 = vpop.xlane.xlu0 %2324
        %2326 = vmax.xlane.f32.xlu0 %v2272
        %v2327 = vpop.xlane.xlu0 %2326
        %2328 = vmax.xlane.f32.xlu0 %v2275
        %v2329 = vpop.xlane.xlu0 %2328
        %2330 = vmax.xlane.f32.xlu0 %v2280
        %v2331 = vpop.xlane.xlu0 %2330
        %2332 = vmax.xlane.f32.xlu0 %v2283
        %v2333 = vpop.xlane.xlu0 %2332
        %2334 = vmax.xlane.f32.xlu0 %v2288
        %v2335 = vpop.xlane.xlu0 %2334
        %2336 = vmax.xlane.f32.xlu0 %v2291
        %v2337 = vpop.xlane.xlu0 %2336
        %2338 = vmax.xlane.f32.xlu0 %v2296
        %v2339 = vpop.xlane.xlu0 %2338
        %2340 = vmax.xlane.f32.xlu0 %v2299
        %v2341 = vpop.xlane.xlu0 %2340
        %2342 = vmax.xlane.f32.xlu0 %v2304
        %v2343 = vpop.xlane.xlu0 %2342
        %2344 = vmax.xlane.f32.xlu0 %v2307
        %v2345 = vpop.xlane.xlu0 %2344
        %2346 = vmax.xlane.f32.xlu0 %v2312
        %v2347 = vpop.xlane.xlu0 %2346
        %2348 = vmax.xlane.f32.xlu0 %v2315
        %v2349 = vpop.xlane.xlu0 %2348
        %v2350 = vsub.f32 %v2256, %v2319
        %v2351 = vsub.f32 %v2259, %v2321
        %v2352 = vsub.f32 %v2264, %v2323
        %v2353 = vsub.f32 %v2267, %v2325
        %v2354 = vsub.f32 %v2272, %v2327
        %v2355 = vsub.f32 %v2275, %v2329
        %v2356 = vsub.f32 %v2280, %v2331
        %v2357 = vsub.f32 %v2283, %v2333
        %v2358 = vsub.f32 %v2288, %v2335
        %v2359 = vsub.f32 %v2291, %v2337
        %v2360 = vsub.f32 %v2296, %v2339
        %v2361 = vsub.f32 %v2299, %v2341
        %v2362 = vsub.f32 %v2304, %v2343
        %v2363 = vsub.f32 %v2307, %v2345
        %v2364 = vsub.f32 %v2312, %v2347
        %v2365 = vsub.f32 %v2315, %v2349
        %v2366 = vmul.f32 %v2350, 1.442695
        %v2367 = vpow.pop %v2366
        %v2368 = vmul.f32 %v2351, 1.442695
        %v2369 = vpow.pop %v2368
        %v2370 = vmul.f32 %v2352, 1.442695
        %v2371 = vpow.pop %v2370
        %v2372 = vmul.f32 %v2353, 1.442695
        %v2373 = vpow.pop %v2372
        %v2374 = vmul.f32 %v2354, 1.442695
        %v2375 = vpow.pop %v2374
        %v2376 = vmul.f32 %v2355, 1.442695
        %v2377 = vpow.pop %v2376
        %v2378 = vmul.f32 %v2356, 1.442695
        %v2379 = vpow.pop %v2378
        %v2380 = vmul.f32 %v2357, 1.442695
        %v2381 = vpow.pop %v2380
        %v2382 = vmul.f32 %v2358, 1.442695
        %v2383 = vpow.pop %v2382
        %v2384 = vmul.f32 %v2359, 1.442695
        %v2385 = vpow.pop %v2384
        %v2386 = vmul.f32 %v2360, 1.442695
        %v2387 = vpow.pop %v2386
        %v2388 = vmul.f32 %v2361, 1.442695
        %v2389 = vpow.pop %v2388
        %v2390 = vmul.f32 %v2362, 1.442695
        %v2391 = vpow.pop %v2390
        %v2392 = vmul.f32 %v2363, 1.442695
        %v2393 = vpow.pop %v2392
        %v2394 = vmul.f32 %v2364, 1.442695
        %v2395 = vpow.pop %v2394
        %v2396 = vmul.f32 %v2365, 1.442695
        %v2397 = vpow.pop %v2396
        %2398 = vadd.xlane.f32.xlu0 %v2367
        %v2399 = vpop.xlane.xlu0 %2398
        %2400 = vadd.xlane.f32.xlu0 %v2369
        %v2401 = vpop.xlane.xlu0 %2400
        %2402 = vadd.xlane.f32.xlu0 %v2371
        %v2403 = vpop.xlane.xlu0 %2402
        %2404 = vadd.xlane.f32.xlu0 %v2373
        %v2405 = vpop.xlane.xlu0 %2404
        %2406 = vadd.xlane.f32.xlu0 %v2375
        %v2407 = vpop.xlane.xlu0 %2406
        %2408 = vadd.xlane.f32.xlu0 %v2377
        %v2409 = vpop.xlane.xlu0 %2408
        %2410 = vadd.xlane.f32.xlu0 %v2379
        %v2411 = vpop.xlane.xlu0 %2410
        %2412 = vadd.xlane.f32.xlu0 %v2381
        %v2413 = vpop.xlane.xlu0 %2412
        %2414 = vadd.xlane.f32.xlu0 %v2383
        %v2415 = vpop.xlane.xlu0 %2414
        %2416 = vadd.xlane.f32.xlu0 %v2385
        %v2417 = vpop.xlane.xlu0 %2416
        %2418 = vadd.xlane.f32.xlu0 %v2387
        %v2419 = vpop.xlane.xlu0 %2418
        %2420 = vadd.xlane.f32.xlu0 %v2389
        %v2421 = vpop.xlane.xlu0 %2420
        %2422 = vadd.xlane.f32.xlu0 %v2391
        %v2423 = vpop.xlane.xlu0 %2422
        %2424 = vadd.xlane.f32.xlu0 %v2393
        %v2425 = vpop.xlane.xlu0 %2424
        %2426 = vadd.xlane.f32.xlu0 %v2395
        %v2427 = vpop.xlane.xlu0 %2426
        %2428 = vadd.xlane.f32.xlu0 %v2397
        %v2429 = vpop.xlane.xlu0 %2428
        %v2430 = vrcp.pop %v2399
        %v2431 = vrcp.pop %v2401
        %v2432 = vrcp.pop %v2403
        %v2433 = vrcp.pop %v2405
        %v2434 = vrcp.pop %v2407
        %v2435 = vrcp.pop %v2409
        %v2436 = vrcp.pop %v2411
        %v2437 = vrcp.pop %v2413
        %v2438 = vrcp.pop %v2415
        %v2439 = vrcp.pop %v2417
        %v2440 = vrcp.pop %v2419
        %v2441 = vrcp.pop %v2421
        %v2442 = vrcp.pop %v2423
        %v2443 = vrcp.pop %v2425
        %v2444 = vrcp.pop %v2427
        %v2445 = vrcp.pop %v2429
        %v2446 = vmul.f32 %v2367, %v2430
        %v2447 = vmul.f32 %v2369, %v2431
        %v2448 = vmul.f32 %v2371, %v2432
        %v2449 = vmul.f32 %v2373, %v2433
        %v2450 = vmul.f32 %v2375, %v2434
        %v2451 = vmul.f32 %v2377, %v2435
        %v2452 = vmul.f32 %v2379, %v2436
        %v2453 = vmul.f32 %v2381, %v2437
        %v2454 = vmul.f32 %v2383, %v2438
        %v2455 = vmul.f32 %v2385, %v2439
        %v2456 = vmul.f32 %v2387, %v2440
        %v2457 = vmul.f32 %v2389, %v2441
        %v2458 = vmul.f32 %v2391, %v2442
        %v2459 = vmul.f32 %v2393, %v2443
        %v2460 = vmul.f32 %v2395, %v2444
        %v2461 = vmul.f32 %v2397, %v2445
        %v2462 = vpack.c.bf16 %v2447, %v2446
        %v2463 = vpack.c.bf16 %v2449, %v2448
        %v2464 = vpack.c.bf16 %v2451, %v2450
        %v2465 = vpack.c.bf16 %v2453, %v2452
        %v2466 = vpack.c.bf16 %v2455, %v2454
        %v2467 = vpack.c.bf16 %v2457, %v2456
        %v2468 = vpack.c.bf16 %v2459, %v2458
        %v2469 = vpack.c.bf16 %v2461, %v2460
        %v2470 = vpack.c.bf16 %v2167, %v2164
        %v2471 = vpack.c.bf16 %v2175, %v2172
        %2472 = vmatprep.subr.bf16.mxu0 0
        %2473 = vmatpush1.bf16.msra.mxu0 %v2462
        %2474 = vmatprep.subr.bf16.mxu0 0
        %2475 = vmatpush1.bf16.msra.mxu0 %v2463
        %2476 = vmatprep.subr.bf16.mxu0 0
        %2477 = vmatpush1.bf16.msra.mxu0 %v2464
        %2478 = vmatprep.subr.bf16.mxu0 0
        %2479 = vmatpush1.bf16.msra.mxu0 %v2465
        %2480 = vmatprep.subr.bf16.mxu0 0
        %2481 = vmatpush1.bf16.msra.mxu0 %v2466
        %2482 = vmatprep.subr.bf16.mxu0 0
        %2483 = vmatpush1.bf16.msra.mxu0 %v2467
        %2484 = vmatprep.subr.bf16.mxu0 0
        %2485 = vmatpush1.bf16.msra.mxu0 %v2468
        %2486 = vmatprep.subr.bf16.mxu0 0
        %2487 = vmatpush1.bf16.msra.mxu0 %v2469
        %2488 = vmatprep.subr.bf16.mxu0 0
        %2489 = vmatpush1.bf16.msra.mxu0 0
        %2490 = vmatprep.subr.bf16.mxu0 0
        %2491 = vmatpush1.bf16.msra.mxu0 0
        %2492 = vmatprep.subr.bf16.mxu0 0
        %2493 = vmatpush1.bf16.msra.mxu0 0
        %2494 = vmatprep.subr.bf16.mxu0 0
        %2495 = vmatpush1.bf16.msra.mxu0 0
        %2496 = vmatprep.subr.bf16.mxu0 0
        %2497 = vmatpush1.bf16.msra.mxu0 0
        %2498 = vmatprep.subr.bf16.mxu0 0
        %2499 = vmatpush1.bf16.msra.mxu0 0
        %2500 = vmatprep.subr.bf16.mxu0 0
        %2501 = vmatpush1.bf16.msra.mxu0 0
        %2502 = vmatprep.subr.bf16.mxu0 0
        %2503 = vmatpush1.bf16.msra.mxu0 0
        %2504 = vmatprep.mubr.bf16.mxu0 0
        %2505 = vmatmul.mubr.bf16.gmra.mrb[0].mxu0 %v2470
        %v2506 = vpop.f32.mrb[0].mxu0
        %v2507 = vadd.f32 0.0, %v2506
        %v2508 = vpop.f32.mrb[0].mxu0
        %v2509 = vpop.f32.mrb[0].mxu0
        %v2510 = vadd.f32 0.0, %v2509
        %v2511 = vpop.f32.mrb[0].mxu0
        %2512 = vmatprep.mubr.bf16.mxu0 0
        %2513 = vmatmul.mubr.bf16.gmra.mrb[0].mxu0 %v2471
        %v2514 = vpop.f32.mrb[0].mxu0
        %v2515 = vadd.f32 0.0, %v2514
        %v2516 = vpop.f32.mrb[0].mxu0
        %v2517 = vpop.f32.mrb[0].mxu0
        %v2518 = vadd.f32 0.0, %v2517
        %v2519 = vpop.f32.mrb[0].mxu0
        %2520 = vdwg.mxu0
        %2521 = vmatprep.subr.bf16.mxu0 0
        %2522 = vmatpush1.bf16.msra.mxu0 %v2462
        %2523 = vmatprep.subr.bf16.mxu0 0
        %2524 = vmatpush1.bf16.msra.mxu0 %v2463
        %2525 = vmatprep.subr.bf16.mxu0 0
        %2526 = vmatpush1.bf16.msra.mxu0 %v2464
        %2527 = vmatprep.subr.bf16.mxu0 0
        %2528 = vmatpush1.bf16.msra.mxu0 %v2465
        %2529 = vmatprep.subr.bf16.mxu0 0
        %2530 = vmatpush1.bf16.msra.mxu0 %v2466
        %2531 = vmatprep.subr.bf16.mxu0 0
        %2532 = vmatpush1.bf16.msra.mxu0 %v2467
        %2533 = vmatprep.subr.bf16.mxu0 0
        %2534 = vmatpush1.bf16.msra.mxu0 %v2468
        %2535 = vmatprep.subr.bf16.mxu0 0
        %2536 = vmatpush1.bf16.msra.mxu0 %v2469
        %2537 = vmatprep.subr.bf16.mxu0 0
        %2538 = vmatpush1.bf16.msra.mxu0 0
        %2539 = vmatprep.subr.bf16.mxu0 0
        %2540 = vmatpush1.bf16.msra.mxu0 0
        %2541 = vmatprep.subr.bf16.mxu0 0
        %2542 = vmatpush1.bf16.msra.mxu0 0
        %2543 = vmatprep.subr.bf16.mxu0 0
        %2544 = vmatpush1.bf16.msra.mxu0 0
        %2545 = vmatprep.subr.bf16.mxu0 0
        %2546 = vmatpush1.bf16.msra.mxu0 0
        %2547 = vmatprep.subr.bf16.mxu0 0
        %2548 = vmatpush1.bf16.msra.mxu0 0
        %2549 = vmatprep.subr.bf16.mxu0 0
        %2550 = vmatpush1.bf16.msra.mxu0 0
        %2551 = vmatprep.subr.bf16.mxu0 0
        %2552 = vmatpush1.bf16.msra.mxu0 0
        %2553 = vmatprep.mubr.bf16.mxu0 0
        %2554 = vmatmul.mubr.bf16.gmra.mrb[0].mxu0 1065369472
        %v2555 = vpop.f32.mrb[0].mxu0
        %v2556 = vadd.f32 1e-09, %v2555
        %v2557 = vpop.f32.mrb[0].mxu0
        %v2558 = vpop.f32.mrb[0].mxu0
        %v2559 = vpop.f32.mrb[0].mxu0
        %2560 = vdwg.mxu0
        %v2561 = vrcp.pop %v2556
        %v2562 = vlaneseq
        %v2563 = vshrl.u32 %v2562, 7
        %v2564 = vsub.s32 0, %v2563
        %v2565 = vrot.slane %v2561, %v2564
        %v2566 = vmul.f32 %v2507, %v2565
        %v2567 = vmul.f32 %v2510, %v2565
        %v2568 = vmul.f32 %v2515, %v2565
        %v2569 = vmul.f32 %v2518, %v2565
        %s2570 = scalar_lea.vmem [#allocation16], 32
        %v2571 = vld [vmem:[%s2570] sm:$0xf]
        %v2572 = vld [vmem:[%s2570 + $0x4] sm:$0xf]
        %v2573 = vld [vmem:[%s2570 + $0x8] sm:$0xf]
        %v2574 = vld [vmem:[%s2570 + $0xc] sm:$0xf]
        %v2575 = vsub.f32 %v2013, %v2566
        %v2576 = vsub.f32 %v2014, %v2567
        %v2577 = vsub.f32 %v2015, %v2568
        %v2578 = vsub.f32 %v2016, %v2569
        %v2579 = vpack.c.bf16 %v2576, %v2575
        %v2580 = vpack.c.bf16 %v2578, %v2577
        %s2581 = scalar_lea.vmem [#allocation17], 64
        %v2582 = vld [vmem:[%s2581] sm:$0xff]
        %v2583 = vld [vmem:[%s2581 + $0x8] sm:$0xff]
        %v2584 = vld [vmem:[%s2581 + $0x10] sm:$0xff]
        %v2585 = vld [vmem:[%s2581 + $0x18] sm:$0xff]
        %2587 = vset.pattern.permute.xlu0 0
        %2588 = vperm.xlu0 %2587, %v2582
        %v2589 = vpop.permute.xlu0 %2588
        %2592 = vset.pattern.permute.xlu0 0
        %2593 = vperm.xlu0 %2592, %v2583
        %v2594 = vpop.permute.xlu0 %2593
        %2597 = vset.pattern.permute.xlu0 0
        %2598 = vperm.xlu0 %2597, %v2584
        %v2599 = vpop.permute.xlu0 %2598
        %2602 = vset.pattern.permute.xlu0 0
        %2603 = vperm.xlu0 %2602, %v2585
        %v2604 = vpop.permute.xlu0 %2603
        %v2610 = vunpack.c.l.b16 %v2571
        %v2611 = vunpack.c.l.b16 %v2572
        %v2612 = vunpack.c.l.b16 %v2573
        %v2613 = vunpack.c.l.b16 %v2574
        %v2614 = vpack.c.b16 %v2611, %v2610
        %v2615 = vpack.c.b16 %v2613, %v2612
        %v2617 = vsel %vm555, %v2614, 0
        %v2620 = vsel %vm555, %v2615, 0
        %2622 = vmatprep.subr.bf16.mxu0 0
        %2623 = vmatpush1.bf16.msra.mxu0 %v2579
        %2624 = vmatprep.subr.bf16.mxu0 0
        %2625 = vmatpush1.bf16.msra.mxu0 %v2580
        %2626 = vmatprep.subr.bf16.mxu0 0
        %2627 = vmatpush1.bf16.msra.mxu0 0
        %2628 = vmatprep.subr.bf16.mxu0 0
        %2629 = vmatpush1.bf16.msra.mxu0 0
        %2630 = vmatprep.subr.bf16.mxu0 0
        %2631 = vmatpush1.bf16.msra.mxu0 0
        %2632 = vmatprep.subr.bf16.mxu0 0
        %2633 = vmatpush1.bf16.msra.mxu0 0
        %2634 = vmatprep.subr.bf16.mxu0 0
        %2635 = vmatpush1.bf16.msra.mxu0 0
        %2636 = vmatprep.subr.bf16.mxu0 0
        %2637 = vmatpush1.bf16.msra.mxu0 0
        %2638 = vmatprep.subr.bf16.mxu0 0
        %2639 = vmatpush1.bf16.msra.mxu0 0
        %2640 = vmatprep.subr.bf16.mxu0 0
        %2641 = vmatpush1.bf16.msra.mxu0 0
        %2642 = vmatprep.subr.bf16.mxu0 0
        %2643 = vmatpush1.bf16.msra.mxu0 0
        %2644 = vmatprep.subr.bf16.mxu0 0
        %2645 = vmatpush1.bf16.msra.mxu0 0
        %2646 = vmatprep.subr.bf16.mxu0 0
        %2647 = vmatpush1.bf16.msra.mxu0 0
        %2648 = vmatprep.subr.bf16.mxu0 0
        %2649 = vmatpush1.bf16.msra.mxu0 0
        %2650 = vmatprep.subr.bf16.mxu0 0
        %2651 = vmatpush1.bf16.msra.mxu0 0
        %2652 = vmatprep.subr.bf16.mxu0 0
        %2653 = vmatpush1.bf16.msra.mxu0 0
        %2654 = vmatprep.mubr.bf16.mxu0 0
        %2655 = vmatmul.mubr.bf16.gmra.mrb[0].mxu0 %v2617
        %v2656 = vpop.f32.mrb[0].mxu0
        %v2657 = vadd.f32 %v2589, %v2656
        %v2658 = vpop.f32.mrb[0].mxu0
        %v2659 = vpop.f32.mrb[0].mxu0
        %v2660 = vadd.f32 %v2594, %v2659
        %v2661 = vpop.f32.mrb[0].mxu0
        %2662 = vmatprep.mubr.bf16.mxu0 0
        %2663 = vmatmul.mubr.bf16.gmra.mrb[0].mxu0 %v2620
        %v2664 = vpop.f32.mrb[0].mxu0
        %v2665 = vadd.f32 %v2599, %v2664
        %v2666 = vpop.f32.mrb[0].mxu0
        %v2667 = vpop.f32.mrb[0].mxu0
        %v2668 = vadd.f32 %v2604, %v2667
        %v2669 = vpop.f32.mrb[0].mxu0
        %2670 = vdwg.mxu0
        %v2671 = vmax.f32 %v2657, 0.0
        %v2672 = vmax.f32 %v2660, 0.0
        %v2673 = vmax.f32 %v2665, 0.0
        %v2674 = vmax.f32 %v2668, 0.0
        %v2675 = vadd.f32 %v2013, %v2671
        %v2676 = vadd.f32 %v2014, %v2672
        %v2677 = vadd.f32 %v2015, %v2673
        %v2678 = vadd.f32 %v2016, %v2674
        %v2679 = vpack.c.bf16 %v2676, %v2675
        %v2680 = vpack.c.bf16 %v2678, %v2677
        %v2683 = vunpack.c.l.b16 %v2679
        %v2684 = vunpack.c.h.b16 %v2679
        %v2685 = vunpack.c.l.b16 %v2680
        %v2686 = vunpack.c.h.b16 %v2680
        %v2687 = vpack.c.b16 %v2683, %v2683
        %v2688 = vpack.c.b16 %v2684, %v2684
        %v2689 = vpack.c.b16 %v2685, %v2685
        %v2690 = vpack.c.b16 %v2686, %v2686
        %2695 = vst [vmem:[%s508 + $0x20] sm:$0xf] %v2687
        %2696 = vst [vmem:[%s508 + $0x24] sm:$0xf] %v2688
        %2697 = vst [vmem:[%s508 + $0x28] sm:$0xf] %v2689
        %2698 = vst [vmem:[%s508 + $0x2c] sm:$0xf] %v2690
        %s2699 = scalar_lea.vmem [#allocation11], 12
        %v2700 = vld [vmem:[%s2699] sm:$0xf]
        %v2702 = vsel %vm555, %v2700, 0
        %2704 = vmatprep.subr.bf16.mxu0 0
        %2705 = vmatpush1.bf16.msra.mxu0 %v2679
        %2706 = vmatprep.subr.bf16.mxu0 0
        %2707 = vmatpush1.bf16.msra.mxu0 %v2680
        %2708 = vmatprep.subr.bf16.mxu0 0
        %2709 = vmatpush1.bf16.msra.mxu0 0
        %2710 = vmatprep.subr.bf16.mxu0 0
        %2711 = vmatpush1.bf16.msra.mxu0 0
        %2712 = vmatprep.subr.bf16.mxu0 0
        %2713 = vmatpush1.bf16.msra.mxu0 0
        %2714 = vmatprep.subr.bf16.mxu0 0
        %2715 = vmatpush1.bf16.msra.mxu0 0
        %2716 = vmatprep.subr.bf16.mxu0 0
        %2717 = vmatpush1.bf16.msra.mxu0 0
        %2718 = vmatprep.subr.bf16.mxu0 0
        %2719 = vmatpush1.bf16.msra.mxu0 0
        %2720 = vmatprep.subr.bf16.mxu0 0
        %2721 = vmatpush1.bf16.msra.mxu0 0
        %2722 = vmatprep.subr.bf16.mxu0 0
        %2723 = vmatpush1.bf16.msra.mxu0 0
        %2724 = vmatprep.subr.bf16.mxu0 0
        %2725 = vmatpush1.bf16.msra.mxu0 0
        %2726 = vmatprep.subr.bf16.mxu0 0
        %2727 = vmatpush1.bf16.msra.mxu0 0
        %2728 = vmatprep.subr.bf16.mxu0 0
        %2729 = vmatpush1.bf16.msra.mxu0 0
        %2730 = vmatprep.subr.bf16.mxu0 0
        %2731 = vmatpush1.bf16.msra.mxu0 0
        %2732 = vmatprep.subr.bf16.mxu0 0
        %2733 = vmatpush1.bf16.msra.mxu0 0
        %2734 = vmatprep.subr.bf16.mxu0 0
        %2735 = vmatpush1.bf16.msra.mxu0 0
        %2736 = vmatprep.mubr.bf16.mxu0 0
        %2737 = vmatmul.mubr.bf16.gmra.mrb[0].mxu0 %v2702
        %v2738 = vpop.f32.mrb[0].mxu0
        %v2739 = vadd.f32 0.0, %v2738
        %v2740 = vpop.f32.mrb[0].mxu0
        %v2741 = vpop.f32.mrb[0].mxu0
        %v2742 = vpop.f32.mrb[0].mxu0
        %2743 = vdwg.mxu0
        %v2744 = vpack.c.bf16 %v2739, %v2739
        %s2745 = scalar_lea.vmem [#allocation13], 48
        %v2746 = vld [vmem:[%s2745] sm:$0xf]
        %v2747 = vld [vmem:[%s2745 + $0x4] sm:$0xf]
        %v2748 = vld [vmem:[%s2745 + $0x8] sm:$0xf]
        %v2749 = vld [vmem:[%s2745 + $0xc] sm:$0xf]
        %s2750 = scalar_lea.vmem [#allocation14], 96
        %v2751 = vld [vmem:[%s2750] sm:$0xff]
        %v2752 = vld [vmem:[%s2750 + $0x8] sm:$0xff]
        %v2753 = vld [vmem:[%s2750 + $0x10] sm:$0xff]
        %v2754 = vld [vmem:[%s2750 + $0x18] sm:$0xff]
        %2756 = vset.pattern.permute.xlu0 0
        %2757 = vperm.xlu0 %2756, %v2751
        %v2758 = vpop.permute.xlu0 %2757
        %2761 = vset.pattern.permute.xlu0 0
        %2762 = vperm.xlu0 %2761, %v2752
        %v2763 = vpop.permute.xlu0 %2762
        %2766 = vset.pattern.permute.xlu0 0
        %2767 = vperm.xlu0 %2766, %v2753
        %v2768 = vpop.permute.xlu0 %2767
        %2771 = vset.pattern.permute.xlu0 0
        %2772 = vperm.xlu0 %2771, %v2754
        %v2773 = vpop.permute.xlu0 %2772
        %v2779 = vunpack.c.l.b16 %v2746
        %v2780 = vunpack.c.l.b16 %v2747
        %v2781 = vunpack.c.l.b16 %v2748
        %v2782 = vunpack.c.l.b16 %v2749
        %v2783 = vpack.c.b16 %v2780, %v2779
        %v2784 = vpack.c.b16 %v2782, %v2781
        %v2786 = vsel %vm555, %v2783, 0
        %v2789 = vsel %vm555, %v2784, 0
        %2791 = vmatprep.subr.bf16.mxu0 0
        %2792 = vmatpush1.bf16.msra.mxu0 %v2679
        %2793 = vmatprep.subr.bf16.mxu0 0
        %2794 = vmatpush1.bf16.msra.mxu0 %v2680
        %2795 = vmatprep.subr.bf16.mxu0 0
        %2796 = vmatpush1.bf16.msra.mxu0 0
        %2797 = vmatprep.subr.bf16.mxu0 0
        %2798 = vmatpush1.bf16.msra.mxu0 0
        %2799 = vmatprep.subr.bf16.mxu0 0
        %2800 = vmatpush1.bf16.msra.mxu0 0
        %2801 = vmatprep.subr.bf16.mxu0 0
        %2802 = vmatpush1.bf16.msra.mxu0 0
        %2803 = vmatprep.subr.bf16.mxu0 0
        %2804 = vmatpush1.bf16.msra.mxu0 0
        %2805 = vmatprep.subr.bf16.mxu0 0
        %2806 = vmatpush1.bf16.msra.mxu0 0
        %2807 = vmatprep.subr.bf16.mxu0 0
        %2808 = vmatpush1.bf16.msra.mxu0 0
        %2809 = vmatprep.subr.bf16.mxu0 0
        %2810 = vmatpush1.bf16.msra.mxu0 0
        %2811 = vmatprep.subr.bf16.mxu0 0
        %2812 = vmatpush1.bf16.msra.mxu0 0
        %2813 = vmatprep.subr.bf16.mxu0 0
        %2814 = vmatpush1.bf16.msra.mxu0 0
        %2815 = vmatprep.subr.bf16.mxu0 0
        %2816 = vmatpush1.bf16.msra.mxu0 0
        %2817 = vmatprep.subr.bf16.mxu0 0
        %2818 = vmatpush1.bf16.msra.mxu0 0
        %2819 = vmatprep.subr.bf16.mxu0 0
        %2820 = vmatpush1.bf16.msra.mxu0 0
        %2821 = vmatprep.subr.bf16.mxu0 0
        %2822 = vmatpush1.bf16.msra.mxu0 0
        %2823 = vmatprep.mubr.bf16.mxu0 0
        %2824 = vmatmul.mubr.bf16.gmra.mrb[0].mxu0 %v2786
        %v2825 = vpop.f32.mrb[0].mxu0
        %v2826 = vadd.f32 %v2758, %v2825
        %v2827 = vpop.f32.mrb[0].mxu0
        %v2828 = vpop.f32.mrb[0].mxu0
        %v2829 = vadd.f32 %v2763, %v2828
        %v2830 = vpop.f32.mrb[0].mxu0
        %2831 = vmatprep.mubr.bf16.mxu0 0
        %2832 = vmatmul.mubr.bf16.gmra.mrb[0].mxu0 %v2789
        %v2833 = vpop.f32.mrb[0].mxu0
        %v2834 = vadd.f32 %v2768, %v2833
        %v2835 = vpop.f32.mrb[0].mxu0
        %v2836 = vpop.f32.mrb[0].mxu0
        %v2837 = vadd.f32 %v2773, %v2836
        %v2838 = vpop.f32.mrb[0].mxu0
        %2839 = vdwg.mxu0
        %2840 = vxpose.xlu0.c.b16.start [1/8] %v2744, 128
        %2841 = vxpose.xlu0.c.b16.cont [2/8] 0, 128
        %2842 = vxpose.xlu0.c.b16.cont [3/8] 0, 128
        %2843 = vxpose.xlu0.c.b16.cont [4/8] 0, 128
        %2844 = vxpose.xlu0.c.b16.cont [5/8] 0, 128
        %2845 = vxpose.xlu0.c.b16.cont [6/8] 0, 128
        %2846 = vxpose.xlu0.c.b16.cont [7/8] 0, 128
        %2847 = vxpose.xlu0.c.b16.end [8/8] 0, 128
        %v2848 = vpop.trf.xlu0
        %v2849 = vpop.trf.xlu0
        %v2850 = vpop.trf.xlu0
        %v2851 = vpop.trf.xlu0
        %v2852 = vpop.trf.xlu0
        %v2853 = vpop.trf.xlu0
        %v2854 = vpop.trf.xlu0
        %v2855 = vpop.trf.xlu0
        %v2857 = vsel %vm870, %v2848, 0
        %v2860 = vsel %vm870, %v2849, 0
        %v2863 = vsel %vm870, %v2850, 0
        %v2866 = vsel %vm870, %v2851, 0
        %v2869 = vsel %vm870, %v2852, 0
        %v2872 = vsel %vm870, %v2853, 0
        %v2875 = vsel %vm870, %v2854, 0
        %v2878 = vsel %vm870, %v2855, 0
        %v2881 = vsel %vm895, %v2744, 0
        %2883 = vmatprep.subr.bf16.mxu0 0
        %2884 = vmatpush1.bf16.msra.mxu0 %v2881
        %2885 = vmatprep.subr.bf16.mxu0 0
        %2886 = vmatpush1.bf16.msra.mxu0 0
        %2887 = vmatprep.subr.bf16.mxu0 0
        %2888 = vmatpush1.bf16.msra.mxu0 0
        %2889 = vmatprep.subr.bf16.mxu0 0
        %2890 = vmatpush1.bf16.msra.mxu0 0
        %2891 = vmatprep.subr.bf16.mxu0 0
        %2892 = vmatpush1.bf16.msra.mxu0 0
        %2893 = vmatprep.subr.bf16.mxu0 0
        %2894 = vmatpush1.bf16.msra.mxu0 0
        %2895 = vmatprep.subr.bf16.mxu0 0
        %2896 = vmatpush1.bf16.msra.mxu0 0
        %2897 = vmatprep.subr.bf16.mxu0 0
        %2898 = vmatpush1.bf16.msra.mxu0 0
        %2899 = vmatprep.subr.bf16.mxu0 0
        %2900 = vmatpush1.bf16.msra.mxu0 0
        %2901 = vmatprep.subr.bf16.mxu0 0
        %2902 = vmatpush1.bf16.msra.mxu0 0
        %2903 = vmatprep.subr.bf16.mxu0 0
        %2904 = vmatpush1.bf16.msra.mxu0 0
        %2905 = vmatprep.subr.bf16.mxu0 0
        %2906 = vmatpush1.bf16.msra.mxu0 0
        %2907 = vmatprep.subr.bf16.mxu0 0
        %2908 = vmatpush1.bf16.msra.mxu0 0
        %2909 = vmatprep.subr.bf16.mxu0 0
        %2910 = vmatpush1.bf16.msra.mxu0 0
        %2911 = vmatprep.subr.bf16.mxu0 0
        %2912 = vmatpush1.bf16.msra.mxu0 0
        %2913 = vmatprep.subr.bf16.mxu0 0
        %2914 = vmatpush1.bf16.msra.mxu0 0
        %2915 = vmatprep.mubr.bf16.mxu0 0
        %2916 = vmatmul.mubr.bf16.gmra.mrb[0].mxu0 %v2857
        %v2917 = vpop.f32.mrb[0].mxu0
        %v2918 = vadd.f32 0.0, %v2917
        %v2919 = vpop.f32.mrb[0].mxu0
        %v2920 = vpop.f32.mrb[0].mxu0
        %v2921 = vadd.f32 0.0, %v2920
        %v2922 = vpop.f32.mrb[0].mxu0
        %2923 = vmatprep.mubr.bf16.mxu0 0
        %2924 = vmatmul.mubr.bf16.gmra.mrb[0].mxu0 %v2860
        %v2925 = vpop.f32.mrb[0].mxu0
        %v2926 = vadd.f32 0.0, %v2925
        %v2927 = vpop.f32.mrb[0].mxu0
        %v2928 = vpop.f32.mrb[0].mxu0
        %v2929 = vadd.f32 0.0, %v2928
        %v2930 = vpop.f32.mrb[0].mxu0
        %2931 = vmatprep.mubr.bf16.mxu0 0
        %2932 = vmatmul.mubr.bf16.gmra.mrb[0].mxu0 %v2863
        %v2933 = vpop.f32.mrb[0].mxu0
        %v2934 = vadd.f32 0.0, %v2933
        %v2935 = vpop.f32.mrb[0].mxu0
        %v2936 = vpop.f32.mrb[0].mxu0
        %v2937 = vadd.f32 0.0, %v2936
        %v2938 = vpop.f32.mrb[0].mxu0
        %2939 = vmatprep.mubr.bf16.mxu0 0
        %2940 = vmatmul.mubr.bf16.gmra.mrb[0].mxu0 %v2866
        %v2941 = vpop.f32.mrb[0].mxu0
        %v2942 = vadd.f32 0.0, %v2941
        %v2943 = vpop.f32.mrb[0].mxu0
        %v2944 = vpop.f32.mrb[0].mxu0
        %v2945 = vadd.f32 0.0, %v2944
        %v2946 = vpop.f32.mrb[0].mxu0
        %2947 = vmatprep.mubr.bf16.mxu0 0
        %2948 = vmatmul.mubr.bf16.gmra.mrb[0].mxu0 %v2869
        %v2949 = vpop.f32.mrb[0].mxu0
        %v2950 = vadd.f32 0.0, %v2949
        %v2951 = vpop.f32.mrb[0].mxu0
        %v2952 = vpop.f32.mrb[0].mxu0
        %v2953 = vadd.f32 0.0, %v2952
        %v2954 = vpop.f32.mrb[0].mxu0
        %2955 = vmatprep.mubr.bf16.mxu0 0
        %2956 = vmatmul.mubr.bf16.gmra.mrb[0].mxu0 %v2872
        %v2957 = vpop.f32.mrb[0].mxu0
        %v2958 = vadd.f32 0.0, %v2957
        %v2959 = vpop.f32.mrb[0].mxu0
        %v2960 = vpop.f32.mrb[0].mxu0
        %v2961 = vadd.f32 0.0, %v2960
        %v2962 = vpop.f32.mrb[0].mxu0
        %2963 = vmatprep.mubr.bf16.mxu0 0
        %2964 = vmatmul.mubr.bf16.gmra.mrb[0].mxu0 %v2875
        %v2965 = vpop.f32.mrb[0].mxu0
        %v2966 = vadd.f32 0.0, %v2965
        %v2967 = vpop.f32.mrb[0].mxu0
        %v2968 = vpop.f32.mrb[0].mxu0
        %v2969 = vadd.f32 0.0, %v2968
        %v2970 = vpop.f32.mrb[0].mxu0
        %2971 = vmatprep.mubr.bf16.mxu0 0
        %2972 = vmatmul.mubr.bf16.gmra.mrb[0].mxu0 %v2878
        %v2973 = vpop.f32.mrb[0].mxu0
        %v2974 = vadd.f32 0.0, %v2973
        %v2975 = vpop.f32.mrb[0].mxu0
        %v2976 = vpop.f32.mrb[0].mxu0
        %v2977 = vadd.f32 0.0, %v2976
        %v2978 = vpop.f32.mrb[0].mxu0
        %2979 = vdwg.mxu0
        %2980 = vmax.xlane.f32.xlu0 %v2918
        %v2981 = vpop.xlane.xlu0 %2980
        %2982 = vmax.xlane.f32.xlu0 %v2921
        %v2983 = vpop.xlane.xlu0 %2982
        %2984 = vmax.xlane.f32.xlu0 %v2926
        %v2985 = vpop.xlane.xlu0 %2984
        %2986 = vmax.xlane.f32.xlu0 %v2929
        %v2987 = vpop.xlane.xlu0 %2986
        %2988 = vmax.xlane.f32.xlu0 %v2934
        %v2989 = vpop.xlane.xlu0 %2988
        %2990 = vmax.xlane.f32.xlu0 %v2937
        %v2991 = vpop.xlane.xlu0 %2990
        %2992 = vmax.xlane.f32.xlu0 %v2942
        %v2993 = vpop.xlane.xlu0 %2992
        %2994 = vmax.xlane.f32.xlu0 %v2945
        %v2995 = vpop.xlane.xlu0 %2994
        %2996 = vmax.xlane.f32.xlu0 %v2950
        %v2997 = vpop.xlane.xlu0 %2996
        %2998 = vmax.xlane.f32.xlu0 %v2953
        %v2999 = vpop.xlane.xlu0 %2998
        %3000 = vmax.xlane.f32.xlu0 %v2958
        %v3001 = vpop.xlane.xlu0 %3000
        %3002 = vmax.xlane.f32.xlu0 %v2961
        %v3003 = vpop.xlane.xlu0 %3002
        %3004 = vmax.xlane.f32.xlu0 %v2966
        %v3005 = vpop.xlane.xlu0 %3004
        %3006 = vmax.xlane.f32.xlu0 %v2969
        %v3007 = vpop.xlane.xlu0 %3006
        %3008 = vmax.xlane.f32.xlu0 %v2974
        %v3009 = vpop.xlane.xlu0 %3008
        %3010 = vmax.xlane.f32.xlu0 %v2977
        %v3011 = vpop.xlane.xlu0 %3010
        %v3012 = vsub.f32 %v2918, %v2981
        %v3013 = vsub.f32 %v2921, %v2983
        %v3014 = vsub.f32 %v2926, %v2985
        %v3015 = vsub.f32 %v2929, %v2987
        %v3016 = vsub.f32 %v2934, %v2989
        %v3017 = vsub.f32 %v2937, %v2991
        %v3018 = vsub.f32 %v2942, %v2993
        %v3019 = vsub.f32 %v2945, %v2995
        %v3020 = vsub.f32 %v2950, %v2997
        %v3021 = vsub.f32 %v2953, %v2999
        %v3022 = vsub.f32 %v2958, %v3001
        %v3023 = vsub.f32 %v2961, %v3003
        %v3024 = vsub.f32 %v2966, %v3005
        %v3025 = vsub.f32 %v2969, %v3007
        %v3026 = vsub.f32 %v2974, %v3009
        %v3027 = vsub.f32 %v2977, %v3011
        %v3028 = vmul.f32 %v3012, 1.442695
        %v3029 = vpow.pop %v3028
        %v3030 = vmul.f32 %v3013, 1.442695
        %v3031 = vpow.pop %v3030
        %v3032 = vmul.f32 %v3014, 1.442695
        %v3033 = vpow.pop %v3032
        %v3034 = vmul.f32 %v3015, 1.442695
        %v3035 = vpow.pop %v3034
        %v3036 = vmul.f32 %v3016, 1.442695
        %v3037 = vpow.pop %v3036
        %v3038 = vmul.f32 %v3017, 1.442695
        %v3039 = vpow.pop %v3038
        %v3040 = vmul.f32 %v3018, 1.442695
        %v3041 = vpow.pop %v3040
        %v3042 = vmul.f32 %v3019, 1.442695
        %v3043 = vpow.pop %v3042
        %v3044 = vmul.f32 %v3020, 1.442695
        %v3045 = vpow.pop %v3044
        %v3046 = vmul.f32 %v3021, 1.442695
        %v3047 = vpow.pop %v3046
        %v3048 = vmul.f32 %v3022, 1.442695
        %v3049 = vpow.pop %v3048
        %v3050 = vmul.f32 %v3023, 1.442695
        %v3051 = vpow.pop %v3050
        %v3052 = vmul.f32 %v3024, 1.442695
        %v3053 = vpow.pop %v3052
        %v3054 = vmul.f32 %v3025, 1.442695
        %v3055 = vpow.pop %v3054
        %v3056 = vmul.f32 %v3026, 1.442695
        %v3057 = vpow.pop %v3056
        %v3058 = vmul.f32 %v3027, 1.442695
        %v3059 = vpow.pop %v3058
        %3060 = vadd.xlane.f32.xlu0 %v3029
        %v3061 = vpop.xlane.xlu0 %3060
        %3062 = vadd.xlane.f32.xlu0 %v3031
        %v3063 = vpop.xlane.xlu0 %3062
        %3064 = vadd.xlane.f32.xlu0 %v3033
        %v3065 = vpop.xlane.xlu0 %3064
        %3066 = vadd.xlane.f32.xlu0 %v3035
        %v3067 = vpop.xlane.xlu0 %3066
        %3068 = vadd.xlane.f32.xlu0 %v3037
        %v3069 = vpop.xlane.xlu0 %3068
        %3070 = vadd.xlane.f32.xlu0 %v3039
        %v3071 = vpop.xlane.xlu0 %3070
        %3072 = vadd.xlane.f32.xlu0 %v3041
        %v3073 = vpop.xlane.xlu0 %3072
        %3074 = vadd.xlane.f32.xlu0 %v3043
        %v3075 = vpop.xlane.xlu0 %3074
        %3076 = vadd.xlane.f32.xlu0 %v3045
        %v3077 = vpop.xlane.xlu0 %3076
        %3078 = vadd.xlane.f32.xlu0 %v3047
        %v3079 = vpop.xlane.xlu0 %3078
        %3080 = vadd.xlane.f32.xlu0 %v3049
        %v3081 = vpop.xlane.xlu0 %3080
        %3082 = vadd.xlane.f32.xlu0 %v3051
        %v3083 = vpop.xlane.xlu0 %3082
        %3084 = vadd.xlane.f32.xlu0 %v3053
        %v3085 = vpop.xlane.xlu0 %3084
        %3086 = vadd.xlane.f32.xlu0 %v3055
        %v3087 = vpop.xlane.xlu0 %3086
        %3088 = vadd.xlane.f32.xlu0 %v3057
        %v3089 = vpop.xlane.xlu0 %3088
        %3090 = vadd.xlane.f32.xlu0 %v3059
        %v3091 = vpop.xlane.xlu0 %3090
        %v3092 = vrcp.pop %v3061
        %v3093 = vrcp.pop %v3063
        %v3094 = vrcp.pop %v3065
        %v3095 = vrcp.pop %v3067
        %v3096 = vrcp.pop %v3069
        %v3097 = vrcp.pop %v3071
        %v3098 = vrcp.pop %v3073
        %v3099 = vrcp.pop %v3075
        %v3100 = vrcp.pop %v3077
        %v3101 = vrcp.pop %v3079
        %v3102 = vrcp.pop %v3081
        %v3103 = vrcp.pop %v3083
        %v3104 = vrcp.pop %v3085
        %v3105 = vrcp.pop %v3087
        %v3106 = vrcp.pop %v3089
        %v3107 = vrcp.pop %v3091
        %v3108 = vmul.f32 %v3029, %v3092
        %v3109 = vmul.f32 %v3031, %v3093
        %v3110 = vmul.f32 %v3033, %v3094
        %v3111 = vmul.f32 %v3035, %v3095
        %v3112 = vmul.f32 %v3037, %v3096
        %v3113 = vmul.f32 %v3039, %v3097
        %v3114 = vmul.f32 %v3041, %v3098
        %v3115 = vmul.f32 %v3043, %v3099
        %v3116 = vmul.f32 %v3045, %v3100
        %v3117 = vmul.f32 %v3047, %v3101
        %v3118 = vmul.f32 %v3049, %v3102
        %v3119 = vmul.f32 %v3051, %v3103
        %v3120 = vmul.f32 %v3053, %v3104
        %v3121 = vmul.f32 %v3055, %v3105
        %v3122 = vmul.f32 %v3057, %v3106
        %v3123 = vmul.f32 %v3059, %v3107
        %v3124 = vpack.c.bf16 %v3109, %v3108
        %v3125 = vpack.c.bf16 %v3111, %v3110
        %v3126 = vpack.c.bf16 %v3113, %v3112
        %v3127 = vpack.c.bf16 %v3115, %v3114
        %v3128 = vpack.c.bf16 %v3117, %v3116
        %v3129 = vpack.c.bf16 %v3119, %v3118
        %v3130 = vpack.c.bf16 %v3121, %v3120
        %v3131 = vpack.c.bf16 %v3123, %v3122
        %v3132 = vpack.c.bf16 %v2829, %v2826
        %v3133 = vpack.c.bf16 %v2837, %v2834
        %3134 = vmatprep.subr.bf16.mxu0 0
        %3135 = vmatpush1.bf16.msra.mxu0 %v3124
        %3136 = vmatprep.subr.bf16.mxu0 0
        %3137 = vmatpush1.bf16.msra.mxu0 %v3125
        %3138 = vmatprep.subr.bf16.mxu0 0
        %3139 = vmatpush1.bf16.msra.mxu0 %v3126
        %3140 = vmatprep.subr.bf16.mxu0 0
        %3141 = vmatpush1.bf16.msra.mxu0 %v3127
        %3142 = vmatprep.subr.bf16.mxu0 0
        %3143 = vmatpush1.bf16.msra.mxu0 %v3128
        %3144 = vmatprep.subr.bf16.mxu0 0
        %3145 = vmatpush1.bf16.msra.mxu0 %v3129
        %3146 = vmatprep.subr.bf16.mxu0 0
        %3147 = vmatpush1.bf16.msra.mxu0 %v3130
        %3148 = vmatprep.subr.bf16.mxu0 0
        %3149 = vmatpush1.bf16.msra.mxu0 %v3131
        %3150 = vmatprep.subr.bf16.mxu0 0
        %3151 = vmatpush1.bf16.msra.mxu0 0
        %3152 = vmatprep.subr.bf16.mxu0 0
        %3153 = vmatpush1.bf16.msra.mxu0 0
        %3154 = vmatprep.subr.bf16.mxu0 0
        %3155 = vmatpush1.bf16.msra.mxu0 0
        %3156 = vmatprep.subr.bf16.mxu0 0
        %3157 = vmatpush1.bf16.msra.mxu0 0
        %3158 = vmatprep.subr.bf16.mxu0 0
        %3159 = vmatpush1.bf16.msra.mxu0 0
        %3160 = vmatprep.subr.bf16.mxu0 0
        %3161 = vmatpush1.bf16.msra.mxu0 0
        %3162 = vmatprep.subr.bf16.mxu0 0
        %3163 = vmatpush1.bf16.msra.mxu0 0
        %3164 = vmatprep.subr.bf16.mxu0 0
        %3165 = vmatpush1.bf16.msra.mxu0 0
        %3166 = vmatprep.mubr.bf16.mxu0 0
        %3167 = vmatmul.mubr.bf16.gmra.mrb[0].mxu0 %v3132
        %v3168 = vpop.f32.mrb[0].mxu0
        %v3169 = vadd.f32 0.0, %v3168
        %v3170 = vpop.f32.mrb[0].mxu0
        %v3171 = vpop.f32.mrb[0].mxu0
        %v3172 = vadd.f32 0.0, %v3171
        %v3173 = vpop.f32.mrb[0].mxu0
        %3174 = vmatprep.mubr.bf16.mxu0 0
        %3175 = vmatmul.mubr.bf16.gmra.mrb[0].mxu0 %v3133
        %v3176 = vpop.f32.mrb[0].mxu0
        %v3177 = vadd.f32 0.0, %v3176
        %v3178 = vpop.f32.mrb[0].mxu0
        %v3179 = vpop.f32.mrb[0].mxu0
        %v3180 = vadd.f32 0.0, %v3179
        %v3181 = vpop.f32.mrb[0].mxu0
        %3182 = vdwg.mxu0
        %3183 = vmatprep.subr.bf16.mxu0 0
        %3184 = vmatpush1.bf16.msra.mxu0 %v3124
        %3185 = vmatprep.subr.bf16.mxu0 0
        %3186 = vmatpush1.bf16.msra.mxu0 %v3125
        %3187 = vmatprep.subr.bf16.mxu0 0
        %3188 = vmatpush1.bf16.msra.mxu0 %v3126
        %3189 = vmatprep.subr.bf16.mxu0 0
        %3190 = vmatpush1.bf16.msra.mxu0 %v3127
        %3191 = vmatprep.subr.bf16.mxu0 0
        %3192 = vmatpush1.bf16.msra.mxu0 %v3128
        %3193 = vmatprep.subr.bf16.mxu0 0
        %3194 = vmatpush1.bf16.msra.mxu0 %v3129
        %3195 = vmatprep.subr.bf16.mxu0 0
        %3196 = vmatpush1.bf16.msra.mxu0 %v3130
        %3197 = vmatprep.subr.bf16.mxu0 0
        %3198 = vmatpush1.bf16.msra.mxu0 %v3131
        %3199 = vmatprep.subr.bf16.mxu0 0
        %3200 = vmatpush1.bf16.msra.mxu0 0
        %3201 = vmatprep.subr.bf16.mxu0 0
        %3202 = vmatpush1.bf16.msra.mxu0 0
        %3203 = vmatprep.subr.bf16.mxu0 0
        %3204 = vmatpush1.bf16.msra.mxu0 0
        %3205 = vmatprep.subr.bf16.mxu0 0
        %3206 = vmatpush1.bf16.msra.mxu0 0
        %3207 = vmatprep.subr.bf16.mxu0 0
        %3208 = vmatpush1.bf16.msra.mxu0 0
        %3209 = vmatprep.subr.bf16.mxu0 0
        %3210 = vmatpush1.bf16.msra.mxu0 0
        %3211 = vmatprep.subr.bf16.mxu0 0
        %3212 = vmatpush1.bf16.msra.mxu0 0
        %3213 = vmatprep.subr.bf16.mxu0 0
        %3214 = vmatpush1.bf16.msra.mxu0 0
        %3215 = vmatprep.mubr.bf16.mxu0 0
        %3216 = vmatmul.mubr.bf16.gmra.mrb[0].mxu0 1065369472
        %v3217 = vpop.f32.mrb[0].mxu0
        %v3218 = vadd.f32 1e-09, %v3217
        %v3219 = vpop.f32.mrb[0].mxu0
        %v3220 = vpop.f32.mrb[0].mxu0
        %v3221 = vpop.f32.mrb[0].mxu0
        %3222 = vdwg.mxu0
        %v3223 = vrcp.pop %v3218
        %v3224 = vlaneseq
        %v3225 = vshrl.u32 %v3224, 7
        %v3226 = vsub.s32 0, %v3225
        %v3227 = vrot.slane %v3223, %v3226
        %v3228 = vmul.f32 %v3169, %v3227
        %v3229 = vmul.f32 %v3172, %v3227
        %v3230 = vmul.f32 %v3177, %v3227
        %v3231 = vmul.f32 %v3180, %v3227
        %s3232 = scalar_lea.vmem [#allocation16], 48
        %v3233 = vld [vmem:[%s3232] sm:$0xf]
        %v3234 = vld [vmem:[%s3232 + $0x4] sm:$0xf]
        %v3235 = vld [vmem:[%s3232 + $0x8] sm:$0xf]
        %v3236 = vld [vmem:[%s3232 + $0xc] sm:$0xf]
        %v3237 = vsub.f32 %v2675, %v3228
        %v3238 = vsub.f32 %v2676, %v3229
        %v3239 = vsub.f32 %v2677, %v3230
        %v3240 = vsub.f32 %v2678, %v3231
        %v3241 = vpack.c.bf16 %v3238, %v3237
        %v3242 = vpack.c.bf16 %v3240, %v3239
        %s3243 = scalar_lea.vmem [#allocation17], 96
        %v3244 = vld [vmem:[%s3243] sm:$0xff]
        %v3245 = vld [vmem:[%s3243 + $0x8] sm:$0xff]
        %v3246 = vld [vmem:[%s3243 + $0x10] sm:$0xff]
        %v3247 = vld [vmem:[%s3243 + $0x18] sm:$0xff]
        %3249 = vset.pattern.permute.xlu0 0
        %3250 = vperm.xlu0 %3249, %v3244
        %v3251 = vpop.permute.xlu0 %3250
        %3254 = vset.pattern.permute.xlu0 0
        %3255 = vperm.xlu0 %3254, %v3245
        %v3256 = vpop.permute.xlu0 %3255
        %3259 = vset.pattern.permute.xlu0 0
        %3260 = vperm.xlu0 %3259, %v3246
        %v3261 = vpop.permute.xlu0 %3260
        %3264 = vset.pattern.permute.xlu0 0
        %3265 = vperm.xlu0 %3264, %v3247
        %v3266 = vpop.permute.xlu0 %3265
        %v3272 = vunpack.c.l.b16 %v3233
        %v3273 = vunpack.c.l.b16 %v3234
        %v3274 = vunpack.c.l.b16 %v3235
        %v3275 = vunpack.c.l.b16 %v3236
        %v3276 = vpack.c.b16 %v3273, %v3272
        %v3277 = vpack.c.b16 %v3275, %v3274
        %v3279 = vsel %vm555, %v3276, 0
        %v3282 = vsel %vm555, %v3277, 0
        %3284 = vmatprep.subr.bf16.mxu0 0
        %3285 = vmatpush1.bf16.msra.mxu0 %v3241
        %3286 = vmatprep.subr.bf16.mxu0 0
        %3287 = vmatpush1.bf16.msra.mxu0 %v3242
        %3288 = vmatprep.subr.bf16.mxu0 0
        %3289 = vmatpush1.bf16.msra.mxu0 0
        %3290 = vmatprep.subr.bf16.mxu0 0
        %3291 = vmatpush1.bf16.msra.mxu0 0
        %3292 = vmatprep.subr.bf16.mxu0 0
        %3293 = vmatpush1.bf16.msra.mxu0 0
        %3294 = vmatprep.subr.bf16.mxu0 0
        %3295 = vmatpush1.bf16.msra.mxu0 0
        %3296 = vmatprep.subr.bf16.mxu0 0
        %3297 = vmatpush1.bf16.msra.mxu0 0
        %3298 = vmatprep.subr.bf16.mxu0 0
        %3299 = vmatpush1.bf16.msra.mxu0 0
        %3300 = vmatprep.subr.bf16.mxu0 0
        %3301 = vmatpush1.bf16.msra.mxu0 0
        %3302 = vmatprep.subr.bf16.mxu0 0
        %3303 = vmatpush1.bf16.msra.mxu0 0
        %3304 = vmatprep.subr.bf16.mxu0 0
        %3305 = vmatpush1.bf16.msra.mxu0 0
        %3306 = vmatprep.subr.bf16.mxu0 0
        %3307 = vmatpush1.bf16.msra.mxu0 0
        %3308 = vmatprep.subr.bf16.mxu0 0
        %3309 = vmatpush1.bf16.msra.mxu0 0
        %3310 = vmatprep.subr.bf16.mxu0 0
        %3311 = vmatpush1.bf16.msra.mxu0 0
        %3312 = vmatprep.subr.bf16.mxu0 0
        %3313 = vmatpush1.bf16.msra.mxu0 0
        %3314 = vmatprep.subr.bf16.mxu0 0
        %3315 = vmatpush1.bf16.msra.mxu0 0
        %3316 = vmatprep.mubr.bf16.mxu0 0
        %3317 = vmatmul.mubr.bf16.gmra.mrb[0].mxu0 %v3279
        %v3318 = vpop.f32.mrb[0].mxu0
        %v3319 = vadd.f32 %v3251, %v3318
        %v3320 = vpop.f32.mrb[0].mxu0
        %v3321 = vpop.f32.mrb[0].mxu0
        %v3322 = vadd.f32 %v3256, %v3321
        %v3323 = vpop.f32.mrb[0].mxu0
        %3324 = vmatprep.mubr.bf16.mxu0 0
        %3325 = vmatmul.mubr.bf16.gmra.mrb[0].mxu0 %v3282
        %v3326 = vpop.f32.mrb[0].mxu0
        %v3327 = vadd.f32 %v3261, %v3326
        %v3328 = vpop.f32.mrb[0].mxu0
        %v3329 = vpop.f32.mrb[0].mxu0
        %v3330 = vadd.f32 %v3266, %v3329
        %v3331 = vpop.f32.mrb[0].mxu0
        %3332 = vdwg.mxu0
        %v3333 = vmax.f32 %v3319, 0.0
        %v3334 = vmax.f32 %v3322, 0.0
        %v3335 = vmax.f32 %v3327, 0.0
        %v3336 = vmax.f32 %v3330, 0.0
        %v3337 = vadd.f32 %v2675, %v3333
        %v3338 = vadd.f32 %v2676, %v3334
        %v3339 = vadd.f32 %v2677, %v3335
        %v3340 = vadd.f32 %v2678, %v3336
        %v3341 = vpack.c.bf16 %v3338, %v3337
        %v3342 = vpack.c.bf16 %v3340, %v3339
        %v3345 = vunpack.c.l.b16 %v3341
        %v3346 = vunpack.c.h.b16 %v3341
        %v3347 = vunpack.c.l.b16 %v3342
        %v3348 = vunpack.c.h.b16 %v3342
        %v3349 = vpack.c.b16 %v3345, %v3345
        %v3350 = vpack.c.b16 %v3346, %v3346
        %v3351 = vpack.c.b16 %v3347, %v3347
        %v3352 = vpack.c.b16 %v3348, %v3348
        %3357 = vst [vmem:[%s508 + $0x30] sm:$0xf] %v3349
        %3358 = vst [vmem:[%s508 + $0x34] sm:$0xf] %v3350
        %3359 = vst [vmem:[%s508 + $0x38] sm:$0xf] %v3351
        %3360 = vst [vmem:[%s508 + $0x3c] sm:$0xf] %v3352
        %s3361 = sand.u32 %s255, 1
        %s3362 = scalar_lea.sflag [#allocation4], %s3361
        %s3363 = sand.u32 %s255, 1
        %s3364 = smul.addr %s3363, 64
        %s3365 = scalar_lea.vmem [#allocation19], %s3364
        // Predicated region
        $region101: #{tpu_custom_call.1} parent=59 // pred_check
          %p3366 = pneg %p265
        $region102: #{tpu_custom_call.1} parent=59 // pred_check_branch
          %3368 = sbr.rel (%p3366) target = $region104
        $region103: #{tpu_custom_call.1} parent=59 // pred_region
          %s3370 = ssub.s32 1024, 1024
          %3371 = vsyncadd %s3362, %s3370
          %s3372 = smul.addr %s32, 16
          %s3373 = smul.addr %s3372, 64
          %s3374 = scalar_lea.hbm %s10, %s3373
          %s3375 = sshll.u32 %s3365, 4
          %s3376 = int_to_ptr.vmem [resolvable:$true] %s3375
          %3381 = dma.vmem_to_hbm [thread:$0]  %s3376, 1024, %s3374, %s3362, 64, 64, 4
        $region104: #{tpu_custom_call.1} parent=59 // pred_fallthru
          _
      $region60: #{tpu_custom_call.1} parent=5 // pred_fallthru
        _
      %p3382 = scmp.le.s32.totalorder 2, %s27
      // Predicated region
      $region105: #{tpu_custom_call.1} parent=5 // pred_check
        %p3383 = pneg %p3382
      $region106: #{tpu_custom_call.1} parent=5 // pred_check_branch
        %3385 = sbr.rel (%p3383) target = $region108
      $region107: #{tpu_custom_call.1} parent=5 // pred_region
        %s3386 = ssub.s32 %s27, 2
        // Predicated region
        $region109: #{tpu_custom_call.1} parent=107 // pred_check
          %p3387 = pneg %p271
        $region110: #{tpu_custom_call.1} parent=107 // pred_check_branch
          %3389 = sbr.rel (%p3387) target = $region112
        $region111: #{tpu_custom_call.1} parent=107 // pred_region
          %s3390 = sand.u32 %s256, 1
          %s3391 = scalar_lea.sflag [#allocation4], %s3390
          %s3392 = sand.u32 %s256, 1
          %s3393 = smul.addr %s3392, 64
          %s3394 = scalar_lea.vmem [#allocation19], %s3393
          %3395 = dma.done %s3391, 1024
        $region112: #{tpu_custom_call.1} parent=107 // pred_fallthru
          _
      $region108: #{tpu_custom_call.1} parent=5 // pred_fallthru
        _
    $region6: #{tpu_custom_call.1} parent=1 // loop_footer
      %s31 = sadd.s32 1, %s27
    $region7: #{tpu_custom_call.1} parent=1 // loop_footer_branch
      %26 = sbr.rel target = $region3
    $region8: #{tpu_custom_call.1} parent=1 // loop_exit
      _
    %3396 = vsyncpa [#allocation3], 1
    %s3397 = scalar_lea.sflag [#allocation3], 1
    %3398 = vsyncpa %s3397, 1
    %3399 = vsyncpa [#allocation6], 1
    %3400 = vsyncpa [#allocation9], 1
    %3401 = vsyncpa [#allocation12], 1
    %3402 = vsyncpa [#allocation15], 1
    %3403 = vsyncpa [#allocation18], 1
    %3404 = vsyncpa [#allocation4], 1
    %s3405 = scalar_lea.sflag [#allocation4], 1
    %3406 = vsyncpa %s3405, 1

</llo_original>
